<compile_context>
chip_gen: v7x
topology: tpu7x:2x2x1
jax: 0.10.0
libtpu: 0.0.40
codegen_flags: <defaults>
</compile_context>

<pallas_src>
import jax
import jax.numpy as jnp
from jax import lax
from jax.experimental import pallas as pl
from jax.experimental.pallas import tpu as pltpu


_VMEM_LIMIT = 48 * 1024 * 1024   # fits v7x (64 MiB physical) with compiler headroom


def _round_up(x, m):
    return ((x + m - 1) // m) * m


# --------------------- fused vidhid + input-gate projection GEMM ---------------------

def _gates_gemm_kernel(x_ref, w_ref, b_ref, *o_refs):
    g = (jnp.dot(x_ref[...], w_ref[...], preferred_element_type=jnp.float32)
         + b_ref[...])
    off = 0
    for o_ref in o_refs:
        gd = o_ref.shape[-1]
        o_ref[...] = g[:, off:off + gd]
        off += gd


def _pick_gemm_rows(nc, tc, B, target_rows=512):
    """Rows per GEMM block: a multiple of tc*B that divides Sp*B (= nc*tc*B)."""
    k = max(1, min(nc, target_rows // max(1, tc * B)))
    while nc % k:
        k -= 1
    return k * tc * B


def gates_gemm_pallas(x_tm, wx, bias, ndir, *, rows_per_block):
    """Time-major flat GEMM: (Sp*B, Dv) @ (Dv, ndir*4H) + bias -> ndir x (Sp*B, 4H) f32.

    Outputs are written directly in the flat time-major layout the recurrence reads,
    so no XLA transpose of the gates intermediate is needed.
    """
    N, Dv = x_tm.shape
    G = wx.shape[1]
    Gd = G // ndir
    assert N % rows_per_block == 0
    nb = N // rows_per_block
    bias2 = bias.astype(jnp.float32).reshape(1, G)

    out_shape = tuple(jax.ShapeDtypeStruct((N, Gd), jnp.float32) for _ in range(ndir))
    outs = pl.pallas_call(
        _gates_gemm_kernel,
        out_shape=out_shape,
        grid_spec=pltpu.PrefetchScalarGridSpec(
            num_scalar_prefetch=0,
            grid=(nb,),
            in_specs=[
                pl.BlockSpec((rows_per_block, Dv), lambda i: (i, 0)),
                pl.BlockSpec((Dv, G), lambda i: (0, 0)),   # resident weights
                pl.BlockSpec((1, G), lambda i: (0, 0)),    # resident bias
            ],
            out_specs=tuple(pl.BlockSpec((rows_per_block, Gd), lambda i: (i, 0))
                            for _ in range(ndir)),
        ),
        compiler_params=pltpu.CompilerParams(
            dimension_semantics=("parallel",),
            vmem_limit_bytes=_VMEM_LIMIT,
        ),
    )(x_tm, wx, bias2)
    return outs if isinstance(outs, tuple) else (outs,)


# ----------------------------- recurrent (LSTM) kernels -----------------------------

def _fused_cell(xg_t, h, c, whh_ref, H, compute_dtype):
    """One gate-fused LSTM cell update.

    xg_t:    (B, 4H) f32 precomputed input-gate pre-activations (biases folded in),
             lane-concatenated in PyTorch gate order [i | f | g | o].
    h, c:    (B, H) f32 carried state.
    whh_ref: (H, 4H) recurrent weights == W_hh.T (same lane-concatenated gate order).
    """
    g = xg_t + jnp.dot(h.astype(compute_dtype), whh_ref[...],
                       preferred_element_type=jnp.float32)            # (B, 4H)
    i_g = jax.nn.sigmoid(g[:, 0 * H:1 * H])
    f_g = jax.nn.sigmoid(g[:, 1 * H:2 * H])
    g_g = jnp.tanh(g[:, 2 * H:3 * H])
    o_g = jax.nn.sigmoid(g[:, 3 * H:4 * H])
    c_new = f_g * c + i_g * g_g
    h_new = o_g * jnp.tanh(c_new)
    return h_new, c_new


def _make_bilstm_kernel(*, tc, B, H, s_real, sp, compute_dtype, unroll):
    nc = sp // tc
    mask_tail = (sp != s_real)   # static: masking code only generated when needed

    def kernel(xg_f_ref, xg_b_ref, whh_f_ref, whh_b_ref,
               y_f_ref, y_b_ref, hn_ref, cn_ref,
               hf_sc, cf_sc, hb_sc, cb_sc):
        ci = pl.program_id(0)

        @pl.when(ci == 0)
        def _init():
            hf_sc[...] = jnp.zeros_like(hf_sc)
            cf_sc[...] = jnp.zeros_like(cf_sc)
            hb_sc[...] = jnp.zeros_like(hb_sc)
            cb_sc[...] = jnp.zeros_like(cb_sc)

        def body(i, carry):
            h_f, c_f, h_b, c_b = carry

            # ---- forward direction: local step i of chunk ci ----
            rf = pl.multiple_of(i * B, B)
            hf_new, cf_new = _fused_cell(xg_f_ref[pl.ds(rf, B), :], h_f, c_f,
                                         whh_f_ref, H, compute_dtype)
            if mask_tail:
                valid_f = (ci * tc + i) < s_real
                h_f = jnp.where(valid_f, hf_new, h_f)
                c_f = jnp.where(valid_f, cf_new, c_f)
            else:
                h_f, c_f = hf_new, cf_new
            y_f_ref[pl.ds(rf, B), :] = h_f

            # ---- backward direction: this chunk is time-reversed; walk it backwards ----
            j = tc - 1 - i
            rb = pl.multiple_of(j * B, B)
            hb_new, cb_new = _fused_cell(xg_b_ref[pl.ds(rb, B), :], h_b, c_b,
                                         whh_b_ref, H, compute_dtype)
            if mask_tail:
                valid_b = ((nc - 1 - ci) * tc + j) < s_real
                h_b = jnp.where(valid_b, hb_new, h_b)
                c_b = jnp.where(valid_b, cb_new, c_b)
            else:
                h_b, c_b = hb_new, cb_new
            y_b_ref[pl.ds(rb, B), :] = h_b

            return (h_f, c_f, h_b, c_b)

        carry0 = (hf_sc[...], cf_sc[...], hb_sc[...], cb_sc[...])
        h_f, c_f, h_b, c_b = lax.fori_loop(0, tc, body, carry0, unroll=unroll)
        hf_sc[...] = h_f
        cf_sc[...] = c_f
        hb_sc[...] = h_b
        cb_sc[...] = c_b

        # NOTE: hn/cn use the resident-accumulator pattern (constant index_map output
        # blocks are copied back to HBM only once, after the final grid step), so it is
        # safe to write them only on the last step.  Keep their index_maps constant.
        @pl.when(ci == pl.num_programs(0) - 1)
        def _final():
            hn_ref[0] = h_f
            hn_ref[1] = h_b
            cn_ref[0] = c_f
            cn_ref[1] = c_b

    return kernel


def _make_lstm_kernel(*, tc, B, H, s_real, sp, compute_dtype, unroll):
    mask_tail = (sp != s_real)

    def kernel(xg_ref, whh_ref, y_ref, hn_ref, cn_ref, h_sc, c_sc):
        ci = pl.program_id(0)

        @pl.when(ci == 0)
        def _init():
            h_sc[...] = jnp.zeros_like(h_sc)
            c_sc[...] = jnp.zeros_like(c_sc)

        def body(i, carry):
            h, c = carry
            r = pl.multiple_of(i * B, B)
            h_new, c_new = _fused_cell(xg_ref[pl.ds(r, B), :], h, c,
                                       whh_ref, H, compute_dtype)
            if mask_tail:
                valid = (ci * tc + i) < s_real
                h = jnp.where(valid, h_new, h)
                c = jnp.where(valid, c_new, c)
            else:
                h, c = h_new, c_new
            y_ref[pl.ds(r, B), :] = h
            return (h, c)

        h, c = lax.fori_loop(0, tc, body, (h_sc[...], c_sc[...]), unroll=unroll)
        h_sc[...] = h
        c_sc[...] = c

        @pl.when(ci == pl.num_programs(0) - 1)
        def _final():
            hn_ref[0] = h
            cn_ref[0] = c

    return kernel


def bilstm_pallas(xg_f, xg_b, whh_f, whh_b, *, B, H, tc, s_real, unroll):
    """Fused bidirectional LSTM over precomputed, flat time-major input gates.

    xg_f/xg_b: (Sp*B, 4H) f32, row = t*B + b.  whh_*: (H, 4H) (== W_hh.T).
    Returns y_f, y_b (Sp*B, H) f32 and h_n, c_n (2, B, H) f32 ([fwd, bwd] order).
    """
    NB = xg_f.shape[0]
    Sp = NB // B
    nc = Sp // tc
    kernel = _make_bilstm_kernel(tc=tc, B=B, H=H, s_real=s_real, sp=Sp,
                                 compute_dtype=whh_f.dtype, unroll=unroll)
    return pl.pallas_call(
        kernel,
        out_shape=(
            jax.ShapeDtypeStruct((NB, H), jnp.float32),
            jax.ShapeDtypeStruct((NB, H), jnp.float32),
            jax.ShapeDtypeStruct((2, B, H), jnp.float32),
            jax.ShapeDtypeStruct((2, B, H), jnp.float32),
        ),
        grid_spec=pltpu.PrefetchScalarGridSpec(
            num_scalar_prefetch=0,
            grid=(nc,),
            in_specs=[
                pl.BlockSpec((tc * B, 4 * H), lambda c: (c, 0)),
                # backward direction reads chunks in reverse time order (no [::-1] copies)
                pl.BlockSpec((tc * B, 4 * H), lambda c, nc=nc: (nc - 1 - c, 0)),
                pl.BlockSpec((H, 4 * H), lambda c: (0, 0)),    # resident
                pl.BlockSpec((H, 4 * H), lambda c: (0, 0)),    # resident
            ],
            out_specs=(
                pl.BlockSpec((tc * B, H), lambda c: (c, 0)),
                pl.BlockSpec((tc * B, H), lambda c, nc=nc: (nc - 1 - c, 0)),
                pl.BlockSpec((2, B, H), lambda c: (0, 0, 0)),
                pl.BlockSpec((2, B, H), lambda c: (0, 0, 0)),
            ),
            scratch_shapes=[pltpu.VMEM((B, H), jnp.float32)] * 4,   # h_f, c_f, h_b, c_b
        ),
        compiler_params=pltpu.CompilerParams(
            dimension_semantics=("arbitrary",),    # loop-carried over time chunks
            vmem_limit_bytes=_VMEM_LIMIT,
        ),
    )(xg_f, xg_b, whh_f, whh_b)


def lstm_pallas(xg, whh, *, B, H, tc, s_real, unroll):
    """Unidirectional LSTM over precomputed, flat time-major input gates."""
    NB = xg.shape[0]
    Sp = NB // B
    nc = Sp // tc
    kernel = _make_lstm_kernel(tc=tc, B=B, H=H, s_real=s_real, sp=Sp,
                               compute_dtype=whh.dtype, unroll=unroll)
    return pl.pallas_call(
        kernel,
        out_shape=(
            jax.ShapeDtypeStruct((NB, H), jnp.float32),
            jax.ShapeDtypeStruct((1, B, H), jnp.float32),
            jax.ShapeDtypeStruct((1, B, H), jnp.float32),
        ),
        grid_spec=pltpu.PrefetchScalarGridSpec(
            num_scalar_prefetch=0,
            grid=(nc,),
            in_specs=[
                pl.BlockSpec((tc * B, 4 * H), lambda c: (c, 0)),
                pl.BlockSpec((H, 4 * H), lambda c: (0, 0)),
            ],
            out_specs=(
                pl.BlockSpec((tc * B, H), lambda c: (c, 0)),
                pl.BlockSpec((1, B, H), lambda c: (0, 0, 0)),
                pl.BlockSpec((1, B, H), lambda c: (0, 0, 0)),
            ),
            scratch_shapes=[pltpu.VMEM((B, H), jnp.float32)] * 2,
        ),
        compiler_params=pltpu.CompilerParams(
            dimension_semantics=("arbitrary",),
            vmem_limit_bytes=_VMEM_LIMIT,
        ),
    )(xg, whh)


# ----------------------------- EncoderRNN forward -----------------------------

def init_params(key, dim_video, dim_hidden, bidirectional):
    ks = jax.random.split(key, 12)
    std = (2.0 / (dim_video + dim_hidden)) ** 0.5     # xavier_normal_ on vidhid.weight
    params = {
        "vidhid_w": std * jax.random.normal(ks[0], (dim_hidden, dim_video), jnp.float32),
        "vidhid_b": 0.01 * jax.random.normal(ks[1], (dim_hidden,), jnp.float32),
    }
    k = 1.0 / (dim_hidden ** 0.5)

    def u(kk, shape):
        return jax.random.uniform(kk, shape, jnp.float32, -k, k)

    dirs = ["f", "b"] if bidirectional else ["f"]
    for d_i, d in enumerate(dirs):
        base = 2 + 4 * d_i
        params[f"w_ih_{d}"] = u(ks[base + 0], (4 * dim_hidden, dim_hidden))
        params[f"w_hh_{d}"] = u(ks[base + 1], (4 * dim_hidden, dim_hidden))
        params[f"b_ih_{d}"] = u(ks[base + 2], (4 * dim_hidden,))
        params[f"b_hh_{d}"] = u(ks[base + 3], (4 * dim_hidden,))
    return params


def encoder_rnn_forward(params, vid_features, dim_hidden, bidirectional,
                        *, use_bf16=True, time_chunk=32):
    """vid_features: (B, S, dim_video) -> (output (B, S, ndir*H), (h_n, c_n))."""
    B0, S0, Dv = vid_features.shape
    H = dim_hidden
    ndir = 2 if bidirectional else 1
    compute_dtype = jnp.bfloat16 if use_bf16 else jnp.float32

    B = _round_up(max(B0, 1), 8)                 # sublane alignment
    tc = max(1, min(time_chunk, S0))             # per-grid-step time chunk
    Sp = _round_up(S0, tc)                       # padded seq len (tail masked in-kernel)
    nc = Sp // tc

    # TODO(synk): input_dropout / rnn_dropout are training-mode stochastic ops; eval-mode
    # identity is assumed (this also makes the vidhid <-> W_ih algebraic fusion valid;
    # note PyTorch's inter-layer rnn_dropout is a no-op for num_layers=1 anyway).
    w_vid = params["vidhid_w"].astype(jnp.float32)        # (H, Dv)
    b_vid = params["vidhid_b"].astype(jnp.float32)        # (H,)
    dirs = ["f", "b"][:ndir]
    wx_cols, bias_cols = [], []
    for d in dirs:
        w_ih = params[f"w_ih_{d}"].astype(jnp.float32)    # (4H, H), rows = [i,f,g,o] x H
        wx_cols.append((w_ih @ w_vid).T)                  # (Dv, 4H)
        bias_cols.append(w_ih @ b_vid + params[f"b_ih_{d}"] + params[f"b_hh_{d}"])
    wx = jnp.concatenate(wx_cols, axis=1).astype(compute_dtype)   # (Dv, ndir*4H)
    bias = jnp.concatenate(bias_cols, axis=0)                     # f32 (ndir*4H,)

    # Time-major flattened input (row = t*B + b).  This single, small transpose of the
    # raw input (fused with the bf16 cast) replaces the much larger XLA transpose of the
    # (B*S, ndir*4H) gates intermediate: the GEMM below now writes gates directly in the
    # layout the recurrence consumes.
    x = vid_features
    if B != B0 or Sp != S0:
        x = jnp.pad(x, ((0, B - B0), (0, Sp - S0), (0, 0)))
    x_tm = jnp.swapaxes(x, 0, 1).reshape(Sp * B, Dv).astype(compute_dtype)

    rows_per_block = _pick_gemm_rows(nc, tc, B)
    gates = gates_gemm_pallas(x_tm, wx, bias, ndir, rows_per_block=rows_per_block)

    def whh_t(d):
        # (H, 4H) with columns lane-concatenated in PyTorch gate order [i | f | g | o].
        return jnp.transpose(params[f"w_hh_{d}"]).astype(compute_dtype)

    unroll = max(1, min(8, tc))   # partial unroll: LLO visibility without huge live ranges
    if bidirectional:
        y_f, y_b, h_n, c_n = bilstm_pallas(gates[0], gates[1], whh_t("f"), whh_t("b"),
                                           B=B, H=H, tc=tc, s_real=S0, unroll=unroll)
        y = jnp.concatenate([y_f.reshape(Sp, B, H), y_b.reshape(Sp, B, H)], axis=-1)
    else:
        y, h_n, c_n = lstm_pallas(gates[0], whh_t("f"),
                                  B=B, H=H, tc=tc, s_real=S0, unroll=unroll)
        y = y.reshape(Sp, B, H)

    out = jnp.transpose(y, (1, 0, 2))[:B0, :S0]           # (B0, S0, ndir*H)
    h_n = h_n[:, :B0]
    c_n = c_n[:, :B0]
    return out, (h_n, c_n)


# ------------------------ pure-JAX reference (unfused math) ------------------------

def _ref_lstm_dir(x_tm, w_ih, w_hh, b_ih, b_hh):
    S, B, H = x_tm.shape

    def step(carry, x_t):
        h, c = carry
        gates = x_t @ w_ih.T + h @ w_hh.T + b_ih + b_hh
        i = jax.nn.sigmoid(gates[:, 0:H])
        f = jax.nn.sigmoid(gates[:, H:2 * H])
        g = jnp.tanh(gates[:, 2 * H:3 * H])
        o = jax.nn.sigmoid(gates[:, 3 * H:4 * H])
        c = f * c + i * g
        h = o * jnp.tanh(c)
        return (h, c), h

    init = (jnp.zeros((B, H), jnp.float32), jnp.zeros((B, H), jnp.float32))
    (h, c), ys = jax.lax.scan(step, init, x_tm)
    return ys, h, c


def _ref_forward(params, vid_features, dim_hidden, bidirectional):
    B, S, Dv = vid_features.shape
    H = dim_hidden
    x = vid_features.reshape(-1, Dv) @ params["vidhid_w"].T + params["vidhid_b"]
    x_tm = jnp.transpose(x.reshape(B, S, H), (1, 0, 2))
    y_f, hf, cf = _ref_lstm_dir(x_tm, params["w_ih_f"], params["w_hh_f"],
                                params["b_ih_f"], params["b_hh_f"])
    if bidirectional:
        y_b, hb, cb = _ref_lstm_dir(x_tm[::-1], params["w_ih_b"], params["w_hh_b"],
                                    params["b_ih_b"], params["b_hh_b"])
        y = jnp.concatenate([y_f, y_b[::-1]], axis=-1)
        h_n, c_n = jnp.stack([hf, hb]), jnp.stack([cf, cb])
    else:
        y, h_n, c_n = y_f, hf[None], cf[None]
    return jnp.transpose(y, (1, 0, 2)), (h_n, c_n)


# ----------------------------------- main -----------------------------------

if __name__ == "__main__":
    B, S = 2, 8
    dim_video, dim_hidden = 16, 32

    key = jax.random.PRNGKey(0)
    k_params, k_x, k_x2 = jax.random.split(key, 3)
    vid_features = jax.random.normal(k_x, (B, S, dim_video), jnp.float32)

    fwd = jax.jit(encoder_rnn_forward, static_argnums=(2, 3),
                  static_argnames=("use_bf16", "time_chunk"))

    # --- bidirectional, f32 operands (tight check against unfused reference) ---
    params = init_params(k_params, dim_video, dim_hidden, bidirectional=True)
    out, (h_n, c_n) = fwd(params, vid_features, dim_hidden, True, use_bf16=False)
    out = jax.block_until_ready(out)
    h_n = jax.block_until_ready(h_n)
    c_n = jax.block_until_ready(c_n)
    assert out.shape == (B, S, 2 * dim_hidden)
    assert h_n.shape == (2, B, dim_hidden)
    assert c_n.shape == (2, B, dim_hidden)
    ref_out, (ref_h, ref_c) = _ref_forward(params, vid_features, dim_hidden, True)
    assert jnp.allclose(out, ref_out, atol=1e-3, rtol=1e-3)
    assert jnp.allclose(h_n, ref_h, atol=1e-3, rtol=1e-3)
    assert jnp.allclose(c_n, ref_c, atol=1e-3, rtol=1e-3)

    # --- unidirectional, f32 operands ---
    params_u = init_params(k_params, dim_video, dim_hidden, bidirectional=False)
    out_u, (h_u, c_u) = fwd(params_u, vid_features, dim_hidden, False, use_bf16=False)
    out_u = jax.block_until_ready(out_u)
    ref_out_u, (ref_h_u, ref_c_u) = _ref_forward(params_u, vid_features, dim_hidden, False)
    assert out_u.shape == (B, S, dim_hidden)
    assert jnp.allclose(out_u, ref_out_u, atol=1e-3, rtol=1e-3)
    assert jnp.allclose(h_u, ref_h_u, atol=1e-3, rtol=1e-3)
    assert jnp.allclose(c_u, ref_c_u, atol=1e-3, rtol=1e-3)

    # --- ragged sequence length (exercises S padding + in-kernel tail masking and the
    #     multi-chunk carried state), bidirectional, f32 operands ---
    vid5 = jax.random.normal(k_x2, (B, 5, dim_video), jnp.float32)
    out5, (h5, c5) = fwd(params, vid5, dim_hidden, True, use_bf16=False, time_chunk=4)
    out5 = jax.block_until_ready(out5)
    ref_out5, (ref_h5, ref_c5) = _ref_forward(params, vid5, dim_hidden, True)
    assert out5.shape == (B, 5, 2 * dim_hidden)
    assert jnp.allclose(out5, ref_out5, atol=1e-3, rtol=1e-3)
    assert jnp.allclose(h5, ref_h5, atol=1e-3, rtol=1e-3)
    assert jnp.allclose(c5, ref_c5, atol=1e-3, rtol=1e-3)

    # --- bidirectional, default bf16 matmul operands (smoke check) ---
    out_bf, (h_bf, c_bf) = fwd(params, vid_features, dim_hidden, True)
    out_bf = jax.block_until_ready(out_bf)
    assert jnp.allclose(out_bf, ref_out, atol=1e-1, rtol=1e-1)

    print("KERNEL_OK")
</pallas_src>

<mosaic_0001>
module attributes {stable_mosaic.version = 11 : i64} {
  func.func @_gates_gemm_kernel(%arg0: i32, %arg1: memref<64x16xf32, #tpu.memory_space<vmem>>, %arg2: memref<16x256xf32, #tpu.memory_space<vmem>>, %arg3: memref<1x256xf32, #tpu.memory_space<vmem>>, %arg4: memref<64x128xf32, #tpu.memory_space<vmem>>, %arg5: memref<64x128xf32, #tpu.memory_space<vmem>>) attributes {dimension_semantics = [#tpu.dimension_semantics<parallel>], iteration_bounds = array<i64: 1>, scalar_prefetch = 0 : i64, scratch_operands = 0 : i64, tpu.core_type = #tpu.core_type<tc>, window_params = [{transform_indices = @transform_0, window_bounds = array<i64: 64, 16>}, {pipeline_mode = #tpu.pipeline_mode<synchronous>, transform_indices = @transform_1, window_bounds = array<i64: 16, 256>}, {pipeline_mode = #tpu.pipeline_mode<synchronous>, transform_indices = @transform_2, window_bounds = array<i64: 1, 256>}, {transform_indices = @transform_3, window_bounds = array<i64: 64, 128>}, {transform_indices = @transform_4, window_bounds = array<i64: 64, 128>}]} {
    %c0 = arith.constant 0 : index
    %c0_0 = arith.constant 0 : index
    %0 = vector.load %arg1[%c0, %c0_0] : memref<64x16xf32, #tpu.memory_space<vmem>>, vector<64x16xf32>
    %c0_1 = arith.constant 0 : index
    %c0_2 = arith.constant 0 : index
    %1 = vector.load %arg2[%c0_1, %c0_2] : memref<16x256xf32, #tpu.memory_space<vmem>>, vector<16x256xf32>
    %cst = arith.constant dense<0.000000e+00> : vector<64x256xf32>
    %2 = tpu.matmul %0, %1, %cst {dimension_numbers = #tpu.dot_dimension_numbers<[1], [0], [0], [1], [0, 0, 1, 1], [], []>} : vector<64x16xf32>, vector<16x256xf32>, vector<64x256xf32> -> vector<64x256xf32>
    %c0_3 = arith.constant 0 : index
    %c0_4 = arith.constant 0 : index
    %3 = vector.load %arg3[%c0_3, %c0_4] : memref<1x256xf32, #tpu.memory_space<vmem>>, vector<1x256xf32>
    %4 = vector.broadcast %3 : vector<1x256xf32> to vector<64x256xf32>
    %5 = arith.addf %2, %4 : vector<64x256xf32>
    %6 = vector.extract_strided_slice %5 {offsets = [0, 0], sizes = [64, 128], strides = [1, 1]} : vector<64x256xf32> to vector<64x128xf32>
    %c0_5 = arith.constant 0 : index
    %c0_6 = arith.constant 0 : index
    %7 = vector.load %arg4[%c0_5, %c0_6] : memref<64x128xf32, #tpu.memory_space<vmem>>, vector<64x128xf32>
    tpu.vector_store %arg4[%c0_5, %c0_6], %6 {strides = array<i32>} : memref<64x128xf32, #tpu.memory_space<vmem>>, vector<64x128xf32>,
    %8 = vector.extract_strided_slice %5 {offsets = [0, 128], sizes = [64, 128], strides = [1, 1]} : vector<64x256xf32> to vector<64x128xf32>
    %c0_7 = arith.constant 0 : index
    %c0_8 = arith.constant 0 : index
    %9 = vector.load %arg5[%c0_7, %c0_8] : memref<64x128xf32, #tpu.memory_space<vmem>>, vector<64x128xf32>
    tpu.vector_store %arg5[%c0_7, %c0_8], %8 {strides = array<i32>} : memref<64x128xf32, #tpu.memory_space<vmem>>, vector<64x128xf32>,
    return
  }
  func.func @transform_0(%arg0: i32) -> (i32, i32) {
    %c0_i32 = arith.constant 0 : i32
    %c0_i32_0 = arith.constant 0 : i32
    return %arg0, %c0_i32 : i32, i32
  }
  func.func @transform_1(%arg0: i32) -> (i32, i32) {
    %c0_i32 = arith.constant 0 : i32
    %c0_i32_0 = arith.constant 0 : i32
    %c0_i32_1 = arith.constant 0 : i32
    return %c0_i32, %c0_i32_0 : i32, i32
  }
  func.func @transform_2(%arg0: i32) -> (i32, i32) {
    %c0_i32 = arith.constant 0 : i32
    %c0_i32_0 = arith.constant 0 : i32
    %c0_i32_1 = arith.constant 0 : i32
    return %c0_i32, %c0_i32_0 : i32, i32
  }
  func.func @transform_3(%arg0: i32) -> (i32, i32) {
    %c0_i32 = arith.constant 0 : i32
    %c0_i32_0 = arith.constant 0 : i32
    return %arg0, %c0_i32 : i32, i32
  }
  func.func @transform_4(%arg0: i32) -> (i32, i32) {
    %c0_i32 = arith.constant 0 : i32
    %c0_i32_0 = arith.constant 0 : i32
    return %arg0, %c0_i32 : i32, i32
  }
}

module attributes {stable_mosaic.version = 11 : i64} {
  func.func @kernel(%arg0: i32, %arg1: memref<64x128xf32, #tpu.memory_space<vmem>>, %arg2: memref<64x128xf32, #tpu.memory_space<vmem>>, %arg3: memref<32x128xf32, #tpu.memory_space<vmem>>, %arg4: memref<32x128xf32, #tpu.memory_space<vmem>>, %arg5: memref<64x32xf32, #tpu.memory_space<vmem>>, %arg6: memref<64x32xf32, #tpu.memory_space<vmem>>, %arg7: memref<2x8x32xf32, #tpu.memory_space<vmem>>, %arg8: memref<2x8x32xf32, #tpu.memory_space<vmem>>, %arg9: memref<8x32xf32, #tpu.memory_space<vmem>>, %arg10: memref<8x32xf32, #tpu.memory_space<vmem>>, %arg11: memref<8x32xf32, #tpu.memory_space<vmem>>, %arg12: memref<8x32xf32, #tpu.memory_space<vmem>>) attributes {dimension_semantics = [#tpu.dimension_semantics<arbitrary>], iteration_bounds = array<i64: 1>, scalar_prefetch = 0 : i64, scratch_operands = 4 : i64, tpu.core_type = #tpu.core_type<tc>, window_params = [{transform_indices = @transform_0, window_bounds = array<i64: 64, 128>}, {transform_indices = @transform_1, window_bounds = array<i64: 64, 128>}, {pipeline_mode = #tpu.pipeline_mode<synchronous>, transform_indices = @transform_2, window_bounds = array<i64: 32, 128>}, {pipeline_mode = #tpu.pipeline_mode<synchronous>, transform_indices = @transform_3, window_bounds = array<i64: 32, 128>}, {transform_indices = @transform_4, window_bounds = array<i64: 64, 32>}, {transform_indices = @transform_5, window_bounds = array<i64: 64, 32>}, {pipeline_mode = #tpu.pipeline_mode<synchronous>, transform_indices = @transform_6, window_bounds = array<i64: 2, 8, 32>}, {pipeline_mode = #tpu.pipeline_mode<synchronous>, transform_indices = @transform_7, window_bounds = array<i64: 2, 8, 32>}]} {
    %c0_i32 = arith.constant 0 : i32
    %0 = arith.cmpi eq, %arg0, %c0_i32 : i32
    %1 = arith.extui %0 : i1 to i32
    %c0_i32_0 = arith.constant 0 : i32
    %2 = arith.cmpi ne, %1, %c0_i32_0 : i32
    scf.if %2 {
      %cst_170 = arith.constant 0.000000e+00 : f32
      %566 = vector.broadcast %cst_170 : f32 to vector<8x32xf32>
      %c0_171 = arith.constant 0 : index
      %c0_172 = arith.constant 0 : index
      %567 = vector.load %arg9[%c0_171, %c0_172] : memref<8x32xf32, #tpu.memory_space<vmem>>, vector<8x32xf32>
      tpu.vector_store %arg9[%c0_171, %c0_172], %566 {strides = array<i32>} : memref<8x32xf32, #tpu.memory_space<vmem>>, vector<8x32xf32>,
      %cst_173 = arith.constant 0.000000e+00 : f32
      %568 = vector.broadcast %cst_173 : f32 to vector<8x32xf32>
      %c0_174 = arith.constant 0 : index
      %c0_175 = arith.constant 0 : index
      %569 = vector.load %arg10[%c0_174, %c0_175] : memref<8x32xf32, #tpu.memory_space<vmem>>, vector<8x32xf32>
      tpu.vector_store %arg10[%c0_174, %c0_175], %568 {strides = array<i32>} : memref<8x32xf32, #tpu.memory_space<vmem>>, vector<8x32xf32>,
      %cst_176 = arith.constant 0.000000e+00 : f32
      %570 = vector.broadcast %cst_176 : f32 to vector<8x32xf32>
      %c0_177 = arith.constant 0 : index
      %c0_178 = arith.constant 0 : index
      %571 = vector.load %arg11[%c0_177, %c0_178] : memref<8x32xf32, #tpu.memory_space<vmem>>, vector<8x32xf32>
      tpu.vector_store %arg11[%c0_177, %c0_178], %570 {strides = array<i32>} : memref<8x32xf32, #tpu.memory_space<vmem>>, vector<8x32xf32>,
      %cst_179 = arith.constant 0.000000e+00 : f32
      %572 = vector.broadcast %cst_179 : f32 to vector<8x32xf32>
      %c0_180 = arith.constant 0 : index
      %c0_181 = arith.constant 0 : index
      %573 = vector.load %arg12[%c0_180, %c0_181] : memref<8x32xf32, #tpu.memory_space<vmem>>, vector<8x32xf32>
      tpu.vector_store %arg12[%c0_180, %c0_181], %572 {strides = array<i32>} : memref<8x32xf32, #tpu.memory_space<vmem>>, vector<8x32xf32>,
    } else {
    }
    %c0 = arith.constant 0 : index
    %c0_1 = arith.constant 0 : index
    %3 = vector.load %arg9[%c0, %c0_1] : memref<8x32xf32, #tpu.memory_space<vmem>>, vector<8x32xf32>
    %c0_2 = arith.constant 0 : index
    %c0_3 = arith.constant 0 : index
    %4 = vector.load %arg10[%c0_2, %c0_3] : memref<8x32xf32, #tpu.memory_space<vmem>>, vector<8x32xf32>
    %c0_4 = arith.constant 0 : index
    %c0_5 = arith.constant 0 : index
    %5 = vector.load %arg11[%c0_4, %c0_5] : memref<8x32xf32, #tpu.memory_space<vmem>>, vector<8x32xf32>
    %c0_6 = arith.constant 0 : index
    %c0_7 = arith.constant 0 : index
    %6 = vector.load %arg12[%c0_6, %c0_7] : memref<8x32xf32, #tpu.memory_space<vmem>>, vector<8x32xf32>
    %c0_i32_8 = arith.constant 0 : i32
    %c8_i32 = arith.constant 8 : i32
    %7 = arith.muli %c0_i32_8, %c8_i32 : i32
    %8 = tpu.assume_multiple %7, 8 : i32
    %9 = arith.index_cast %8 : i32 to index
    %c0_9 = arith.constant 0 : index
    %10 = vector.load %arg1[%9, %c0_9] : memref<64x128xf32, #tpu.memory_space<vmem>>, vector<8x128xf32>
    %c0_10 = arith.constant 0 : index
    %c0_11 = arith.constant 0 : index
    %11 = vector.load %arg3[%c0_10, %c0_11] : memref<32x128xf32, #tpu.memory_space<vmem>>, vector<32x128xf32>
    %cst = arith.constant dense<0.000000e+00> : vector<8x128xf32>
    %12 = tpu.matmul %3, %11, %cst {dimension_numbers = #tpu.dot_dimension_numbers<[1], [0], [0], [1], [0, 0, 1, 1], [], []>} : vector<8x32xf32>, vector<32x128xf32>, vector<8x128xf32> -> vector<8x128xf32>
    %13 = arith.addf %10, %12 : vector<8x128xf32>
    %14 = vector.extract_strided_slice %13 {offsets = [0, 0], sizes = [8, 32], strides = [1, 1]} : vector<8x128xf32> to vector<8x32xf32>
    %15 = arith.negf %14 : vector<8x32xf32>
    %16 = math.exp %15 : vector<8x32xf32>
    %cst_12 = arith.constant 1.000000e+00 : f32
    %17 = vector.broadcast %cst_12 : f32 to vector<8x32xf32>
    %18 = arith.addf %17, %16 : vector<8x32xf32>
    %19 = arith.divf %17, %18 : vector<8x32xf32>
    %20 = vector.extract_strided_slice %13 {offsets = [0, 32], sizes = [8, 32], strides = [1, 1]} : vector<8x128xf32> to vector<8x32xf32>
    %21 = arith.negf %20 : vector<8x32xf32>
    %22 = math.exp %21 : vector<8x32xf32>
    %cst_13 = arith.constant 1.000000e+00 : f32
    %23 = vector.broadcast %cst_13 : f32 to vector<8x32xf32>
    %24 = arith.addf %23, %22 : vector<8x32xf32>
    %25 = arith.divf %23, %24 : vector<8x32xf32>
    %26 = vector.extract_strided_slice %13 {offsets = [0, 64], sizes = [8, 32], strides = [1, 1]} : vector<8x128xf32> to vector<8x32xf32>
    %27 = math.tanh %26 : vector<8x32xf32>
    %28 = vector.extract_strided_slice %13 {offsets = [0, 96], sizes = [8, 32], strides = [1, 1]} : vector<8x128xf32> to vector<8x32xf32>
    %29 = arith.negf %28 : vector<8x32xf32>
    %30 = math.exp %29 : vector<8x32xf32>
    %cst_14 = arith.constant 1.000000e+00 : f32
    %31 = vector.broadcast %cst_14 : f32 to vector<8x32xf32>
    %32 = arith.addf %31, %30 : vector<8x32xf32>
    %33 = arith.divf %31, %32 : vector<8x32xf32>
    %34 = arith.mulf %25, %4 : vector<8x32xf32>
    %35 = arith.mulf %19, %27 : vector<8x32xf32>
    %36 = arith.addf %34, %35 : vector<8x32xf32>
    %37 = math.tanh %36 : vector<8x32xf32>
    %38 = arith.mulf %33, %37 : vector<8x32xf32>
    %39 = arith.index_cast %8 : i32 to index
    %c0_15 = arith.constant 0 : index
    %40 = vector.load %arg5[%39, %c0_15] : memref<64x32xf32, #tpu.memory_space<vmem>>, vector<8x32xf32>
    tpu.vector_store %arg5[%39, %c0_15], %38 {strides = array<i32>} : memref<64x32xf32, #tpu.memory_space<vmem>>, vector<8x32xf32>,
    %c7_i32 = arith.constant 7 : i32
    %41 = arith.subi %c7_i32, %c0_i32_8 : i32
    %c8_i32_16 = arith.constant 8 : i32
    %42 = arith.muli %41, %c8_i32_16 : i32
    %43 = tpu.assume_multiple %42, 8 : i32
    %44 = arith.index_cast %43 : i32 to index
    %c0_17 = arith.constant 0 : index
    %45 = vector.load %arg2[%44, %c0_17] : memref<64x128xf32, #tpu.memory_space<vmem>>, vector<8x128xf32>
    %c0_18 = arith.constant 0 : index
    %c0_19 = arith.constant 0 : index
    %46 = vector.load %arg4[%c0_18, %c0_19] : memref<32x128xf32, #tpu.memory_space<vmem>>, vector<32x128xf32>
    %cst_20 = arith.constant dense<0.000000e+00> : vector<8x128xf32>
    %47 = tpu.matmul %5, %46, %cst_20 {dimension_numbers = #tpu.dot_dimension_numbers<[1], [0], [0], [1], [0, 0, 1, 1], [], []>} : vector<8x32xf32>, vector<32x128xf32>, vector<8x128xf32> -> vector<8x128xf32>
    %48 = arith.addf %45, %47 : vector<8x128xf32>
    %49 = vector.extract_strided_slice %48 {offsets = [0, 0], sizes = [8, 32], strides = [1, 1]} : vector<8x128xf32> to vector<8x32xf32>
    %50 = arith.negf %49 : vector<8x32xf32>
    %51 = math.exp %50 : vector<8x32xf32>
    %cst_21 = arith.constant 1.000000e+00 : f32
    %52 = vector.broadcast %cst_21 : f32 to vector<8x32xf32>
    %53 = arith.addf %52, %51 : vector<8x32xf32>
    %54 = arith.divf %52, %53 : vector<8x32xf32>
    %55 = vector.extract_strided_slice %48 {offsets = [0, 32], sizes = [8, 32], strides = [1, 1]} : vector<8x128xf32> to vector<8x32xf32>
    %56 = arith.negf %55 : vector<8x32xf32>
    %57 = math.exp %56 : vector<8x32xf32>
    %cst_22 = arith.constant 1.000000e+00 : f32
    %58 = vector.broadcast %cst_22 : f32 to vector<8x32xf32>
    %59 = arith.addf %58, %57 : vector<8x32xf32>
    %60 = arith.divf %58, %59 : vector<8x32xf32>
    %61 = vector.extract_strided_slice %48 {offsets = [0, 64], sizes = [8, 32], strides = [1, 1]} : vector<8x128xf32> to vector<8x32xf32>
    %62 = math.tanh %61 : vector<8x32xf32>
    %63 = vector.extract_strided_slice %48 {offsets = [0, 96], sizes = [8, 32], strides = [1, 1]} : vector<8x128xf32> to vector<8x32xf32>
    %64 = arith.negf %63 : vector<8x32xf32>
    %65 = math.exp %64 : vector<8x32xf32>
    %cst_23 = arith.constant 1.000000e+00 : f32
    %66 = vector.broadcast %cst_23 : f32 to vector<8x32xf32>
    %67 = arith.addf %66, %65 : vector<8x32xf32>
    %68 = arith.divf %66, %67 : vector<8x32xf32>
    %69 = arith.mulf %60, %6 : vector<8x32xf32>
    %70 = arith.mulf %54, %62 : vector<8x32xf32>
    %71 = arith.addf %69, %70 : vector<8x32xf32>
    %72 = math.tanh %71 : vector<8x32xf32>
    %73 = arith.mulf %68, %72 : vector<8x32xf32>
    %74 = arith.index_cast %43 : i32 to index
    %c0_24 = arith.constant 0 : index
    %75 = vector.load %arg6[%74, %c0_24] : memref<64x32xf32, #tpu.memory_space<vmem>>, vector<8x32xf32>
    tpu.vector_store %arg6[%74, %c0_24], %73 {strides = array<i32>} : memref<64x32xf32, #tpu.memory_space<vmem>>, vector<8x32xf32>,
    %c1_i32 = arith.constant 1 : i32
    %c8_i32_25 = arith.constant 8 : i32
    %76 = arith.muli %c1_i32, %c8_i32_25 : i32
    %77 = tpu.assume_multiple %76, 8 : i32
    %78 = arith.index_cast %77 : i32 to index
    %c0_26 = arith.constant 0 : index
    %79 = vector.load %arg1[%78, %c0_26] : memref<64x128xf32, #tpu.memory_space<vmem>>, vector<8x128xf32>
    %c0_27 = arith.constant 0 : index
    %c0_28 = arith.constant 0 : index
    %80 = vector.load %arg3[%c0_27, %c0_28] : memref<32x128xf32, #tpu.memory_space<vmem>>, vector<32x128xf32>
    %cst_29 = arith.constant dense<0.000000e+00> : vector<8x128xf32>
    %81 = tpu.matmul %38, %80, %cst_29 {dimension_numbers = #tpu.dot_dimension_numbers<[1], [0], [0], [1], [0, 0, 1, 1], [], []>} : vector<8x32xf32>, vector<32x128xf32>, vector<8x128xf32> -> vector<8x128xf32>
    %82 = arith.addf %79, %81 : vector<8x128xf32>
    %83 = vector.extract_strided_slice %82 {offsets = [0, 0], sizes = [8, 32], strides = [1, 1]} : vector<8x128xf32> to vector<8x32xf32>
    %84 = arith.negf %83 : vector<8x32xf32>
    %85 = math.exp %84 : vector<8x32xf32>
    %cst_30 = arith.constant 1.000000e+00 : f32
    %86 = vector.broadcast %cst_30 : f32 to vector<8x32xf32>
    %87 = arith.addf %86, %85 : vector<8x32xf32>
    %88 = arith.divf %86, %87 : vector<8x32xf32>
    %89 = vector.extract_strided_slice %82 {offsets = [0, 32], sizes = [8, 32], strides = [1, 1]} : vector<8x128xf32> to vector<8x32xf32>
    %90 = arith.negf %89 : vector<8x32xf32>
    %91 = math.exp %90 : vector<8x32xf32>
    %cst_31 = arith.constant 1.000000e+00 : f32
    %92 = vector.broadcast %cst_31 : f32 to vector<8x32xf32>
    %93 = arith.addf %92, %91 : vector<8x32xf32>
    %94 = arith.divf %92, %93 : vector<8x32xf32>
    %95 = vector.extract_strided_slice %82 {offsets = [0, 64], sizes = [8, 32], strides = [1, 1]} : vector<8x128xf32> to vector<8x32xf32>
    %96 = math.tanh %95 : vector<8x32xf32>
    %97 = vector.extract_strided_slice %82 {offsets = [0, 96], sizes = [8, 32], strides = [1, 1]} : vector<8x128xf32> to vector<8x32xf32>
    %98 = arith.negf %97 : vector<8x32xf32>
    %99 = math.exp %98 : vector<8x32xf32>
    %cst_32 = arith.constant 1.000000e+00 : f32
    %100 = vector.broadcast %cst_32 : f32 to vector<8x32xf32>
    %101 = arith.addf %100, %99 : vector<8x32xf32>
    %102 = arith.divf %100, %101 : vector<8x32xf32>
    %103 = arith.mulf %94, %36 : vector<8x32xf32>
    %104 = arith.mulf %88, %96 : vector<8x32xf32>
    %105 = arith.addf %103, %104 : vector<8x32xf32>
    %106 = math.tanh %105 : vector<8x32xf32>
    %107 = arith.mulf %102, %106 : vector<8x32xf32>
    %108 = arith.index_cast %77 : i32 to index
    %c0_33 = arith.constant 0 : index
    %109 = vector.load %arg5[%108, %c0_33] : memref<64x32xf32, #tpu.memory_space<vmem>>, vector<8x32xf32>
    tpu.vector_store %arg5[%108, %c0_33], %107 {strides = array<i32>} : memref<64x32xf32, #tpu.memory_space<vmem>>, vector<8x32xf32>,
    %c7_i32_34 = arith.constant 7 : i32
    %110 = arith.subi %c7_i32_34, %c1_i32 : i32
    %c8_i32_35 = arith.constant 8 : i32
    %111 = arith.muli %110, %c8_i32_35 : i32
    %112 = tpu.assume_multiple %111, 8 : i32
    %113 = arith.index_cast %112 : i32 to index
    %c0_36 = arith.constant 0 : index
    %114 = vector.load %arg2[%113, %c0_36] : memref<64x128xf32, #tpu.memory_space<vmem>>, vector<8x128xf32>
    %c0_37 = arith.constant 0 : index
    %c0_38 = arith.constant 0 : index
    %115 = vector.load %arg4[%c0_37, %c0_38] : memref<32x128xf32, #tpu.memory_space<vmem>>, vector<32x128xf32>
    %cst_39 = arith.constant dense<0.000000e+00> : vector<8x128xf32>
    %116 = tpu.matmul %73, %115, %cst_39 {dimension_numbers = #tpu.dot_dimension_numbers<[1], [0], [0], [1], [0, 0, 1, 1], [], []>} : vector<8x32xf32>, vector<32x128xf32>, vector<8x128xf32> -> vector<8x128xf32>
    %117 = arith.addf %114, %116 : vector<8x128xf32>
    %118 = vector.extract_strided_slice %117 {offsets = [0, 0], sizes = [8, 32], strides = [1, 1]} : vector<8x128xf32> to vector<8x32xf32>
    %119 = arith.negf %118 : vector<8x32xf32>
    %120 = math.exp %119 : vector<8x32xf32>
    %cst_40 = arith.constant 1.000000e+00 : f32
    %121 = vector.broadcast %cst_40 : f32 to vector<8x32xf32>
    %122 = arith.addf %121, %120 : vector<8x32xf32>
    %123 = arith.divf %121, %122 : vector<8x32xf32>
    %124 = vector.extract_strided_slice %117 {offsets = [0, 32], sizes = [8, 32], strides = [1, 1]} : vector<8x128xf32> to vector<8x32xf32>
    %125 = arith.negf %124 : vector<8x32xf32>
    %126 = math.exp %125 : vector<8x32xf32>
    %cst_41 = arith.constant 1.000000e+00 : f32
    %127 = vector.broadcast %cst_41 : f32 to vector<8x32xf32>
    %128 = arith.addf %127, %126 : vector<8x32xf32>
    %129 = arith.divf %127, %128 : vector<8x32xf32>
    %130 = vector.extract_strided_slice %117 {offsets = [0, 64], sizes = [8, 32], strides = [1, 1]} : vector<8x128xf32> to vector<8x32xf32>
    %131 = math.tanh %130 : vector<8x32xf32>
    %132 = vector.extract_strided_slice %117 {offsets = [0, 96], sizes = [8, 32], strides = [1, 1]} : vector<8x128xf32> to vector<8x32xf32>
    %133 = arith.negf %132 : vector<8x32xf32>
    %134 = math.exp %133 : vector<8x32xf32>
    %cst_42 = arith.constant 1.000000e+00 : f32
    %135 = vector.broadcast %cst_42 : f32 to vector<8x32xf32>
    %136 = arith.addf %135, %134 : vector<8x32xf32>
    %137 = arith.divf %135, %136 : vector<8x32xf32>
    %138 = arith.mulf %129, %71 : vector<8x32xf32>
    %139 = arith.mulf %123, %131 : vector<8x32xf32>
    %140 = arith.addf %138, %139 : vector<8x32xf32>
    %141 = math.tanh %140 : vector<8x32xf32>
    %142 = arith.mulf %137, %141 : vector<8x32xf32>
    %143 = arith.index_cast %112 : i32 to index
    %c0_43 = arith.constant 0 : index
    %144 = vector.load %arg6[%143, %c0_43] : memref<64x32xf32, #tpu.memory_space<vmem>>, vector<8x32xf32>
    tpu.vector_store %arg6[%143, %c0_43], %142 {strides = array<i32>} : memref<64x32xf32, #tpu.memory_space<vmem>>, vector<8x32xf32>,
    %c2_i32 = arith.constant 2 : i32
    %c8_i32_44 = arith.constant 8 : i32
    %145 = arith.muli %c2_i32, %c8_i32_44 : i32
    %146 = tpu.assume_multiple %145, 8 : i32
    %147 = arith.index_cast %146 : i32 to index
    %c0_45 = arith.constant 0 : index
    %148 = vector.load %arg1[%147, %c0_45] : memref<64x128xf32, #tpu.memory_space<vmem>>, vector<8x128xf32>
    %c0_46 = arith.constant 0 : index
    %c0_47 = arith.constant 0 : index
    %149 = vector.load %arg3[%c0_46, %c0_47] : memref<32x128xf32, #tpu.memory_space<vmem>>, vector<32x128xf32>
    %cst_48 = arith.constant dense<0.000000e+00> : vector<8x128xf32>
    %150 = tpu.matmul %107, %149, %cst_48 {dimension_numbers = #tpu.dot_dimension_numbers<[1], [0], [0], [1], [0, 0, 1, 1], [], []>} : vector<8x32xf32>, vector<32x128xf32>, vector<8x128xf32> -> vector<8x128xf32>
    %151 = arith.addf %148, %150 : vector<8x128xf32>
    %152 = vector.extract_strided_slice %151 {offsets = [0, 0], sizes = [8, 32], strides = [1, 1]} : vector<8x128xf32> to vector<8x32xf32>
    %153 = arith.negf %152 : vector<8x32xf32>
    %154 = math.exp %153 : vector<8x32xf32>
    %cst_49 = arith.constant 1.000000e+00 : f32
    %155 = vector.broadcast %cst_49 : f32 to vector<8x32xf32>
    %156 = arith.addf %155, %154 : vector<8x32xf32>
    %157 = arith.divf %155, %156 : vector<8x32xf32>
    %158 = vector.extract_strided_slice %151 {offsets = [0, 32], sizes = [8, 32], strides = [1, 1]} : vector<8x128xf32> to vector<8x32xf32>
    %159 = arith.negf %158 : vector<8x32xf32>
    %160 = math.exp %159 : vector<8x32xf32>
    %cst_50 = arith.constant 1.000000e+00 : f32
    %161 = vector.broadcast %cst_50 : f32 to vector<8x32xf32>
    %162 = arith.addf %161, %160 : vector<8x32xf32>
    %163 = arith.divf %161, %162 : vector<8x32xf32>
    %164 = vector.extract_strided_slice %151 {offsets = [0, 64], sizes = [8, 32], strides = [1, 1]} : vector<8x128xf32> to vector<8x32xf32>
    %165 = math.tanh %164 : vector<8x32xf32>
    %166 = vector.extract_strided_slice %151 {offsets = [0, 96], sizes = [8, 32], strides = [1, 1]} : vector<8x128xf32> to vector<8x32xf32>
    %167 = arith.negf %166 : vector<8x32xf32>
    %168 = math.exp %167 : vector<8x32xf32>
    %cst_51 = arith.constant 1.000000e+00 : f32
    %169 = vector.broadcast %cst_51 : f32 to vector<8x32xf32>
    %170 = arith.addf %169, %168 : vector<8x32xf32>
    %171 = arith.divf %169, %170 : vector<8x32xf32>
    %172 = arith.mulf %163, %105 : vector<8x32xf32>
    %173 = arith.mulf %157, %165 : vector<8x32xf32>
    %174 = arith.addf %172, %173 : vector<8x32xf32>
    %175 = math.tanh %174 : vector<8x32xf32>
    %176 = arith.mulf %171, %175 : vector<8x32xf32>
    %177 = arith.index_cast %146 : i32 to index
    %c0_52 = arith.constant 0 : index
    %178 = vector.load %arg5[%177, %c0_52] : memref<64x32xf32, #tpu.memory_space<vmem>>, vector<8x32xf32>
    tpu.vector_store %arg5[%177, %c0_52], %176 {strides = array<i32>} : memref<64x32xf32, #tpu.memory_space<vmem>>, vector<8x32xf32>,
    %c7_i32_53 = arith.constant 7 : i32
    %179 = arith.subi %c7_i32_53, %c2_i32 : i32
    %c8_i32_54 = arith.constant 8 : i32
    %180 = arith.muli %179, %c8_i32_54 : i32
    %181 = tpu.assume_multiple %180, 8 : i32
    %182 = arith.index_cast %181 : i32 to index
    %c0_55 = arith.constant 0 : index
    %183 = vector.load %arg2[%182, %c0_55] : memref<64x128xf32, #tpu.memory_space<vmem>>, vector<8x128xf32>
    %c0_56 = arith.constant 0 : index
    %c0_57 = arith.constant 0 : index
    %184 = vector.load %arg4[%c0_56, %c0_57] : memref<32x128xf32, #tpu.memory_space<vmem>>, vector<32x128xf32>
    %cst_58 = arith.constant dense<0.000000e+00> : vector<8x128xf32>
    %185 = tpu.matmul %142, %184, %cst_58 {dimension_numbers = #tpu.dot_dimension_numbers<[1], [0], [0], [1], [0, 0, 1, 1], [], []>} : vector<8x32xf32>, vector<32x128xf32>, vector<8x128xf32> -> vector<8x128xf32>
    %186 = arith.addf %183, %185 : vector<8x128xf32>
    %187 = vector.extract_strided_slice %186 {offsets = [0, 0], sizes = [8, 32], strides = [1, 1]} : vector<8x128xf32> to vector<8x32xf32>
    %188 = arith.negf %187 : vector<8x32xf32>
    %189 = math.exp %188 : vector<8x32xf32>
    %cst_59 = arith.constant 1.000000e+00 : f32
    %190 = vector.broadcast %cst_59 : f32 to vector<8x32xf32>
    %191 = arith.addf %190, %189 : vector<8x32xf32>
    %192 = arith.divf %190, %191 : vector<8x32xf32>
    %193 = vector.extract_strided_slice %186 {offsets = [0, 32], sizes = [8, 32], strides = [1, 1]} : vector<8x128xf32> to vector<8x32xf32>
    %194 = arith.negf %193 : vector<8x32xf32>
    %195 = math.exp %194 : vector<8x32xf32>
    %cst_60 = arith.constant 1.000000e+00 : f32
    %196 = vector.broadcast %cst_60 : f32 to vector<8x32xf32>
    %197 = arith.addf %196, %195 : vector<8x32xf32>
    %198 = arith.divf %196, %197 : vector<8x32xf32>
    %199 = vector.extract_strided_slice %186 {offsets = [0, 64], sizes = [8, 32], strides = [1, 1]} : vector<8x128xf32> to vector<8x32xf32>
    %200 = math.tanh %199 : vector<8x32xf32>
    %201 = vector.extract_strided_slice %186 {offsets = [0, 96], sizes = [8, 32], strides = [1, 1]} : vector<8x128xf32> to vector<8x32xf32>
    %202 = arith.negf %201 : vector<8x32xf32>
    %203 = math.exp %202 : vector<8x32xf32>
    %cst_61 = arith.constant 1.000000e+00 : f32
    %204 = vector.broadcast %cst_61 : f32 to vector<8x32xf32>
    %205 = arith.addf %204, %203 : vector<8x32xf32>
    %206 = arith.divf %204, %205 : vector<8x32xf32>
    %207 = arith.mulf %198, %140 : vector<8x32xf32>
    %208 = arith.mulf %192, %200 : vector<8x32xf32>
    %209 = arith.addf %207, %208 : vector<8x32xf32>
    %210 = math.tanh %209 : vector<8x32xf32>
    %211 = arith.mulf %206, %210 : vector<8x32xf32>
    %212 = arith.index_cast %181 : i32 to index
    %c0_62 = arith.constant 0 : index
    %213 = vector.load %arg6[%212, %c0_62] : memref<64x32xf32, #tpu.memory_space<vmem>>, vector<8x32xf32>
    tpu.vector_store %arg6[%212, %c0_62], %211 {strides = array<i32>} : memref<64x32xf32, #tpu.memory_space<vmem>>, vector<8x32xf32>,
    %c3_i32 = arith.constant 3 : i32
    %c8_i32_63 = arith.constant 8 : i32
    %214 = arith.muli %c3_i32, %c8_i32_63 : i32
    %215 = tpu.assume_multiple %214, 8 : i32
    %216 = arith.index_cast %215 : i32 to index
    %c0_64 = arith.constant 0 : index
    %217 = vector.load %arg1[%216, %c0_64] : memref<64x128xf32, #tpu.memory_space<vmem>>, vector<8x128xf32>
    %c0_65 = arith.constant 0 : index
    %c0_66 = arith.constant 0 : index
    %218 = vector.load %arg3[%c0_65, %c0_66] : memref<32x128xf32, #tpu.memory_space<vmem>>, vector<32x128xf32>
    %cst_67 = arith.constant dense<0.000000e+00> : vector<8x128xf32>
    %219 = tpu.matmul %176, %218, %cst_67 {dimension_numbers = #tpu.dot_dimension_numbers<[1], [0], [0], [1], [0, 0, 1, 1], [], []>} : vector<8x32xf32>, vector<32x128xf32>, vector<8x128xf32> -> vector<8x128xf32>
    %220 = arith.addf %217, %219 : vector<8x128xf32>
    %221 = vector.extract_strided_slice %220 {offsets = [0, 0], sizes = [8, 32], strides = [1, 1]} : vector<8x128xf32> to vector<8x32xf32>
    %222 = arith.negf %221 : vector<8x32xf32>
    %223 = math.exp %222 : vector<8x32xf32>
    %cst_68 = arith.constant 1.000000e+00 : f32
    %224 = vector.broadcast %cst_68 : f32 to vector<8x32xf32>
    %225 = arith.addf %224, %223 : vector<8x32xf32>
    %226 = arith.divf %224, %225 : vector<8x32xf32>
    %227 = vector.extract_strided_slice %220 {offsets = [0, 32], sizes = [8, 32], strides = [1, 1]} : vector<8x128xf32> to vector<8x32xf32>
    %228 = arith.negf %227 : vector<8x32xf32>
    %229 = math.exp %228 : vector<8x32xf32>
    %cst_69 = arith.constant 1.000000e+00 : f32
    %230 = vector.broadcast %cst_69 : f32 to vector<8x32xf32>
    %231 = arith.addf %230, %229 : vector<8x32xf32>
    %232 = arith.divf %230, %231 : vector<8x32xf32>
    %233 = vector.extract_strided_slice %220 {offsets = [0, 64], sizes = [8, 32], strides = [1, 1]} : vector<8x128xf32> to vector<8x32xf32>
    %234 = math.tanh %233 : vector<8x32xf32>
    %235 = vector.extract_strided_slice %220 {offsets = [0, 96], sizes = [8, 32], strides = [1, 1]} : vector<8x128xf32> to vector<8x32xf32>
    %236 = arith.negf %235 : vector<8x32xf32>
    %237 = math.exp %236 : vector<8x32xf32>
    %cst_70 = arith.constant 1.000000e+00 : f32
    %238 = vector.broadcast %cst_70 : f32 to vector<8x32xf32>
    %239 = arith.addf %238, %237 : vector<8x32xf32>
    %240 = arith.divf %238, %239 : vector<8x32xf32>
    %241 = arith.mulf %232, %174 : vector<8x32xf32>
    %242 = arith.mulf %226, %234 : vector<8x32xf32>
    %243 = arith.addf %241, %242 : vector<8x32xf32>
    %244 = math.tanh %243 : vector<8x32xf32>
    %245 = arith.mulf %240, %244 : vector<8x32xf32>
    %246 = arith.index_cast %215 : i32 to index
    %c0_71 = arith.constant 0 : index
    %247 = vector.load %arg5[%246, %c0_71] : memref<64x32xf32, #tpu.memory_space<vmem>>, vector<8x32xf32>
    tpu.vector_store %arg5[%246, %c0_71], %245 {strides = array<i32>} : memref<64x32xf32, #tpu.memory_space<vmem>>, vector<8x32xf32>,
    %c7_i32_72 = arith.constant 7 : i32
    %248 = arith.subi %c7_i32_72, %c3_i32 : i32
    %c8_i32_73 = arith.constant 8 : i32
    %249 = arith.muli %248, %c8_i32_73 : i32
    %250 = tpu.assume_multiple %249, 8 : i32
    %251 = arith.index_cast %250 : i32 to index
    %c0_74 = arith.constant 0 : index
    %252 = vector.load %arg2[%251, %c0_74] : memref<64x128xf32, #tpu.memory_space<vmem>>, vector<8x128xf32>
    %c0_75 = arith.constant 0 : index
    %c0_76 = arith.constant 0 : index
    %253 = vector.load %arg4[%c0_75, %c0_76] : memref<32x128xf32, #tpu.memory_space<vmem>>, vector<32x128xf32>
    %cst_77 = arith.constant dense<0.000000e+00> : vector<8x128xf32>
    %254 = tpu.matmul %211, %253, %cst_77 {dimension_numbers = #tpu.dot_dimension_numbers<[1], [0], [0], [1], [0, 0, 1, 1], [], []>} : vector<8x32xf32>, vector<32x128xf32>, vector<8x128xf32> -> vector<8x128xf32>
    %255 = arith.addf %252, %254 : vector<8x128xf32>
    %256 = vector.extract_strided_slice %255 {offsets = [0, 0], sizes = [8, 32], strides = [1, 1]} : vector<8x128xf32> to vector<8x32xf32>
    %257 = arith.negf %256 : vector<8x32xf32>
    %258 = math.exp %257 : vector<8x32xf32>
    %cst_78 = arith.constant 1.000000e+00 : f32
    %259 = vector.broadcast %cst_78 : f32 to vector<8x32xf32>
    %260 = arith.addf %259, %258 : vector<8x32xf32>
    %261 = arith.divf %259, %260 : vector<8x32xf32>
    %262 = vector.extract_strided_slice %255 {offsets = [0, 32], sizes = [8, 32], strides = [1, 1]} : vector<8x128xf32> to vector<8x32xf32>
    %263 = arith.negf %262 : vector<8x32xf32>
    %264 = math.exp %263 : vector<8x32xf32>
    %cst_79 = arith.constant 1.000000e+00 : f32
    %265 = vector.broadcast %cst_79 : f32 to vector<8x32xf32>
    %266 = arith.addf %265, %264 : vector<8x32xf32>
    %267 = arith.divf %265, %266 : vector<8x32xf32>
    %268 = vector.extract_strided_slice %255 {offsets = [0, 64], sizes = [8, 32], strides = [1, 1]} : vector<8x128xf32> to vector<8x32xf32>
    %269 = math.tanh %268 : vector<8x32xf32>
    %270 = vector.extract_strided_slice %255 {offsets = [0, 96], sizes = [8, 32], strides = [1, 1]} : vector<8x128xf32> to vector<8x32xf32>
    %271 = arith.negf %270 : vector<8x32xf32>
    %272 = math.exp %271 : vector<8x32xf32>
    %cst_80 = arith.constant 1.000000e+00 : f32
    %273 = vector.broadcast %cst_80 : f32 to vector<8x32xf32>
    %274 = arith.addf %273, %272 : vector<8x32xf32>
    %275 = arith.divf %273, %274 : vector<8x32xf32>
    %276 = arith.mulf %267, %209 : vector<8x32xf32>
    %277 = arith.mulf %261, %269 : vector<8x32xf32>
    %278 = arith.addf %276, %277 : vector<8x32xf32>
    %279 = math.tanh %278 : vector<8x32xf32>
    %280 = arith.mulf %275, %279 : vector<8x32xf32>
    %281 = arith.index_cast %250 : i32 to index
    %c0_81 = arith.constant 0 : index
    %282 = vector.load %arg6[%281, %c0_81] : memref<64x32xf32, #tpu.memory_space<vmem>>, vector<8x32xf32>
    tpu.vector_store %arg6[%281, %c0_81], %280 {strides = array<i32>} : memref<64x32xf32, #tpu.memory_space<vmem>>, vector<8x32xf32>,
    %c4_i32 = arith.constant 4 : i32
    %c8_i32_82 = arith.constant 8 : i32
    %283 = arith.muli %c4_i32, %c8_i32_82 : i32
    %284 = tpu.assume_multiple %283, 8 : i32
    %285 = arith.index_cast %284 : i32 to index
    %c0_83 = arith.constant 0 : index
    %286 = vector.load %arg1[%285, %c0_83] : memref<64x128xf32, #tpu.memory_space<vmem>>, vector<8x128xf32>
    %c0_84 = arith.constant 0 : index
    %c0_85 = arith.constant 0 : index
    %287 = vector.load %arg3[%c0_84, %c0_85] : memref<32x128xf32, #tpu.memory_space<vmem>>, vector<32x128xf32>
    %cst_86 = arith.constant dense<0.000000e+00> : vector<8x128xf32>
    %288 = tpu.matmul %245, %287, %cst_86 {dimension_numbers = #tpu.dot_dimension_numbers<[1], [0], [0], [1], [0, 0, 1, 1], [], []>} : vector<8x32xf32>, vector<32x128xf32>, vector<8x128xf32> -> vector<8x128xf32>
    %289 = arith.addf %286, %288 : vector<8x128xf32>
    %290 = vector.extract_strided_slice %289 {offsets = [0, 0], sizes = [8, 32], strides = [1, 1]} : vector<8x128xf32> to vector<8x32xf32>
    %291 = arith.negf %290 : vector<8x32xf32>
    %292 = math.exp %291 : vector<8x32xf32>
    %cst_87 = arith.constant 1.000000e+00 : f32
    %293 = vector.broadcast %cst_87 : f32 to vector<8x32xf32>
    %294 = arith.addf %293, %292 : vector<8x32xf32>
    %295 = arith.divf %293, %294 : vector<8x32xf32>
    %296 = vector.extract_strided_slice %289 {offsets = [0, 32], sizes = [8, 32], strides = [1, 1]} : vector<8x128xf32> to vector<8x32xf32>
    %297 = arith.negf %296 : vector<8x32xf32>
    %298 = math.exp %297 : vector<8x32xf32>
    %cst_88 = arith.constant 1.000000e+00 : f32
    %299 = vector.broadcast %cst_88 : f32 to vector<8x32xf32>
    %300 = arith.addf %299, %298 : vector<8x32xf32>
    %301 = arith.divf %299, %300 : vector<8x32xf32>
    %302 = vector.extract_strided_slice %289 {offsets = [0, 64], sizes = [8, 32], strides = [1, 1]} : vector<8x128xf32> to vector<8x32xf32>
    %303 = math.tanh %302 : vector<8x32xf32>
    %304 = vector.extract_strided_slice %289 {offsets = [0, 96], sizes = [8, 32], strides = [1, 1]} : vector<8x128xf32> to vector<8x32xf32>
    %305 = arith.negf %304 : vector<8x32xf32>
    %306 = math.exp %305 : vector<8x32xf32>
    %cst_89 = arith.constant 1.000000e+00 : f32
    %307 = vector.broadcast %cst_89 : f32 to vector<8x32xf32>
    %308 = arith.addf %307, %306 : vector<8x32xf32>
    %309 = arith.divf %307, %308 : vector<8x32xf32>
    %310 = arith.mulf %301, %243 : vector<8x32xf32>
    %311 = arith.mulf %295, %303 : vector<8x32xf32>
    %312 = arith.addf %310, %311 : vector<8x32xf32>
    %313 = math.tanh %312 : vector<8x32xf32>
    %314 = arith.mulf %309, %313 : vector<8x32xf32>
    %315 = arith.index_cast %284 : i32 to index
    %c0_90 = arith.constant 0 : index
    %316 = vector.load %arg5[%315, %c0_90] : memref<64x32xf32, #tpu.memory_space<vmem>>, vector<8x32xf32>
    tpu.vector_store %arg5[%315, %c0_90], %314 {strides = array<i32>} : memref<64x32xf32, #tpu.memory_space<vmem>>, vector<8x32xf32>,
    %c7_i32_91 = arith.constant 7 : i32
    %317 = arith.subi %c7_i32_91, %c4_i32 : i32
    %c8_i32_92 = arith.constant 8 : i32
    %318 = arith.muli %317, %c8_i32_92 : i32
    %319 = tpu.assume_multiple %318, 8 : i32
    %320 = arith.index_cast %319 : i32 to index
    %c0_93 = arith.constant 0 : index
    %321 = vector.load %arg2[%320, %c0_93] : memref<64x128xf32, #tpu.memory_space<vmem>>, vector<8x128xf32>
    %c0_94 = arith.constant 0 : index
    %c0_95 = arith.constant 0 : index
    %322 = vector.load %arg4[%c0_94, %c0_95] : memref<32x128xf32, #tpu.memory_space<vmem>>, vector<32x128xf32>
    %cst_96 = arith.constant dense<0.000000e+00> : vector<8x128xf32>
    %323 = tpu.matmul %280, %322, %cst_96 {dimension_numbers = #tpu.dot_dimension_numbers<[1], [0], [0], [1], [0, 0, 1, 1], [], []>} : vector<8x32xf32>, vector<32x128xf32>, vector<8x128xf32> -> vector<8x128xf32>
    %324 = arith.addf %321, %323 : vector<8x128xf32>
    %325 = vector.extract_strided_slice %324 {offsets = [0, 0], sizes = [8, 32], strides = [1, 1]} : vector<8x128xf32> to vector<8x32xf32>
    %326 = arith.negf %325 : vector<8x32xf32>
    %327 = math.exp %326 : vector<8x32xf32>
    %cst_97 = arith.constant 1.000000e+00 : f32
    %328 = vector.broadcast %cst_97 : f32 to vector<8x32xf32>
    %329 = arith.addf %328, %327 : vector<8x32xf32>
    %330 = arith.divf %328, %329 : vector<8x32xf32>
    %331 = vector.extract_strided_slice %324 {offsets = [0, 32], sizes = [8, 32], strides = [1, 1]} : vector<8x128xf32> to vector<8x32xf32>
    %332 = arith.negf %331 : vector<8x32xf32>
    %333 = math.exp %332 : vector<8x32xf32>
    %cst_98 = arith.constant 1.000000e+00 : f32
    %334 = vector.broadcast %cst_98 : f32 to vector<8x32xf32>
    %335 = arith.addf %334, %333 : vector<8x32xf32>
    %336 = arith.divf %334, %335 : vector<8x32xf32>
    %337 = vector.extract_strided_slice %324 {offsets = [0, 64], sizes = [8, 32], strides = [1, 1]} : vector<8x128xf32> to vector<8x32xf32>
    %338 = math.tanh %337 : vector<8x32xf32>
    %339 = vector.extract_strided_slice %324 {offsets = [0, 96], sizes = [8, 32], strides = [1, 1]} : vector<8x128xf32> to vector<8x32xf32>
    %340 = arith.negf %339 : vector<8x32xf32>
    %341 = math.exp %340 : vector<8x32xf32>
    %cst_99 = arith.constant 1.000000e+00 : f32
    %342 = vector.broadcast %cst_99 : f32 to vector<8x32xf32>
    %343 = arith.addf %342, %341 : vector<8x32xf32>
    %344 = arith.divf %342, %343 : vector<8x32xf32>
    %345 = arith.mulf %336, %278 : vector<8x32xf32>
    %346 = arith.mulf %330, %338 : vector<8x32xf32>
    %347 = arith.addf %345, %346 : vector<8x32xf32>
    %348 = math.tanh %347 : vector<8x32xf32>
    %349 = arith.mulf %344, %348 : vector<8x32xf32>
    %350 = arith.index_cast %319 : i32 to index
    %c0_100 = arith.constant 0 : index
    %351 = vector.load %arg6[%350, %c0_100] : memref<64x32xf32, #tpu.memory_space<vmem>>, vector<8x32xf32>
    tpu.vector_store %arg6[%350, %c0_100], %349 {strides = array<i32>} : memref<64x32xf32, #tpu.memory_space<vmem>>, vector<8x32xf32>,
    %c5_i32 = arith.constant 5 : i32
    %c8_i32_101 = arith.constant 8 : i32
    %352 = arith.muli %c5_i32, %c8_i32_101 : i32
    %353 = tpu.assume_multiple %352, 8 : i32
    %354 = arith.index_cast %353 : i32 to index
    %c0_102 = arith.constant 0 : index
    %355 = vector.load %arg1[%354, %c0_102] : memref<64x128xf32, #tpu.memory_space<vmem>>, vector<8x128xf32>
    %c0_103 = arith.constant 0 : index
    %c0_104 = arith.constant 0 : index
    %356 = vector.load %arg3[%c0_103, %c0_104] : memref<32x128xf32, #tpu.memory_space<vmem>>, vector<32x128xf32>
    %cst_105 = arith.constant dense<0.000000e+00> : vector<8x128xf32>
    %357 = tpu.matmul %314, %356, %cst_105 {dimension_numbers = #tpu.dot_dimension_numbers<[1], [0], [0], [1], [0, 0, 1, 1], [], []>} : vector<8x32xf32>, vector<32x128xf32>, vector<8x128xf32> -> vector<8x128xf32>
    %358 = arith.addf %355, %357 : vector<8x128xf32>
    %359 = vector.extract_strided_slice %358 {offsets = [0, 0], sizes = [8, 32], strides = [1, 1]} : vector<8x128xf32> to vector<8x32xf32>
    %360 = arith.negf %359 : vector<8x32xf32>
    %361 = math.exp %360 : vector<8x32xf32>
    %cst_106 = arith.constant 1.000000e+00 : f32
    %362 = vector.broadcast %cst_106 : f32 to vector<8x32xf32>
    %363 = arith.addf %362, %361 : vector<8x32xf32>
    %364 = arith.divf %362, %363 : vector<8x32xf32>
    %365 = vector.extract_strided_slice %358 {offsets = [0, 32], sizes = [8, 32], strides = [1, 1]} : vector<8x128xf32> to vector<8x32xf32>
    %366 = arith.negf %365 : vector<8x32xf32>
    %367 = math.exp %366 : vector<8x32xf32>
    %cst_107 = arith.constant 1.000000e+00 : f32
    %368 = vector.broadcast %cst_107 : f32 to vector<8x32xf32>
    %369 = arith.addf %368, %367 : vector<8x32xf32>
    %370 = arith.divf %368, %369 : vector<8x32xf32>
    %371 = vector.extract_strided_slice %358 {offsets = [0, 64], sizes = [8, 32], strides = [1, 1]} : vector<8x128xf32> to vector<8x32xf32>
    %372 = math.tanh %371 : vector<8x32xf32>
    %373 = vector.extract_strided_slice %358 {offsets = [0, 96], sizes = [8, 32], strides = [1, 1]} : vector<8x128xf32> to vector<8x32xf32>
    %374 = arith.negf %373 : vector<8x32xf32>
    %375 = math.exp %374 : vector<8x32xf32>
    %cst_108 = arith.constant 1.000000e+00 : f32
    %376 = vector.broadcast %cst_108 : f32 to vector<8x32xf32>
    %377 = arith.addf %376, %375 : vector<8x32xf32>
    %378 = arith.divf %376, %377 : vector<8x32xf32>
    %379 = arith.mulf %370, %312 : vector<8x32xf32>
    %380 = arith.mulf %364, %372 : vector<8x32xf32>
    %381 = arith.addf %379, %380 : vector<8x32xf32>
    %382 = math.tanh %381 : vector<8x32xf32>
    %383 = arith.mulf %378, %382 : vector<8x32xf32>
    %384 = arith.index_cast %353 : i32 to index
    %c0_109 = arith.constant 0 : index
    %385 = vector.load %arg5[%384, %c0_109] : memref<64x32xf32, #tpu.memory_space<vmem>>, vector<8x32xf32>
    tpu.vector_store %arg5[%384, %c0_109], %383 {strides = array<i32>} : memref<64x32xf32, #tpu.memory_space<vmem>>, vector<8x32xf32>,
    %c7_i32_110 = arith.constant 7 : i32
    %386 = arith.subi %c7_i32_110, %c5_i32 : i32
    %c8_i32_111 = arith.constant 8 : i32
    %387 = arith.muli %386, %c8_i32_111 : i32
    %388 = tpu.assume_multiple %387, 8 : i32
    %389 = arith.index_cast %388 : i32 to index
    %c0_112 = arith.constant 0 : index
    %390 = vector.load %arg2[%389, %c0_112] : memref<64x128xf32, #tpu.memory_space<vmem>>, vector<8x128xf32>
    %c0_113 = arith.constant 0 : index
    %c0_114 = arith.constant 0 : index
    %391 = vector.load %arg4[%c0_113, %c0_114] : memref<32x128xf32, #tpu.memory_space<vmem>>, vector<32x128xf32>
    %cst_115 = arith.constant dense<0.000000e+00> : vector<8x128xf32>
    %392 = tpu.matmul %349, %391, %cst_115 {dimension_numbers = #tpu.dot_dimension_numbers<[1], [0], [0], [1], [0, 0, 1, 1], [], []>} : vector<8x32xf32>, vector<32x128xf32>, vector<8x128xf32> -> vector<8x128xf32>
    %393 = arith.addf %390, %392 : vector<8x128xf32>
    %394 = vector.extract_strided_slice %393 {offsets = [0, 0], sizes = [8, 32], strides = [1, 1]} : vector<8x128xf32> to vector<8x32xf32>
    %395 = arith.negf %394 : vector<8x32xf32>
    %396 = math.exp %395 : vector<8x32xf32>
    %cst_116 = arith.constant 1.000000e+00 : f32
    %397 = vector.broadcast %cst_116 : f32 to vector<8x32xf32>
    %398 = arith.addf %397, %396 : vector<8x32xf32>
    %399 = arith.divf %397, %398 : vector<8x32xf32>
    %400 = vector.extract_strided_slice %393 {offsets = [0, 32], sizes = [8, 32], strides = [1, 1]} : vector<8x128xf32> to vector<8x32xf32>
    %401 = arith.negf %400 : vector<8x32xf32>
    %402 = math.exp %401 : vector<8x32xf32>
    %cst_117 = arith.constant 1.000000e+00 : f32
    %403 = vector.broadcast %cst_117 : f32 to vector<8x32xf32>
    %404 = arith.addf %403, %402 : vector<8x32xf32>
    %405 = arith.divf %403, %404 : vector<8x32xf32>
    %406 = vector.extract_strided_slice %393 {offsets = [0, 64], sizes = [8, 32], strides = [1, 1]} : vector<8x128xf32> to vector<8x32xf32>
    %407 = math.tanh %406 : vector<8x32xf32>
    %408 = vector.extract_strided_slice %393 {offsets = [0, 96], sizes = [8, 32], strides = [1, 1]} : vector<8x128xf32> to vector<8x32xf32>
    %409 = arith.negf %408 : vector<8x32xf32>
    %410 = math.exp %409 : vector<8x32xf32>
    %cst_118 = arith.constant 1.000000e+00 : f32
    %411 = vector.broadcast %cst_118 : f32 to vector<8x32xf32>
    %412 = arith.addf %411, %410 : vector<8x32xf32>
    %413 = arith.divf %411, %412 : vector<8x32xf32>
    %414 = arith.mulf %405, %347 : vector<8x32xf32>
    %415 = arith.mulf %399, %407 : vector<8x32xf32>
    %416 = arith.addf %414, %415 : vector<8x32xf32>
    %417 = math.tanh %416 : vector<8x32xf32>
    %418 = arith.mulf %413, %417 : vector<8x32xf32>
    %419 = arith.index_cast %388 : i32 to index
    %c0_119 = arith.constant 0 : index
    %420 = vector.load %arg6[%419, %c0_119] : memref<64x32xf32, #tpu.memory_space<vmem>>, vector<8x32xf32>
    tpu.vector_store %arg6[%419, %c0_119], %418 {strides = array<i32>} : memref<64x32xf32, #tpu.memory_space<vmem>>, vector<8x32xf32>,
    %c6_i32 = arith.constant 6 : i32
    %c8_i32_120 = arith.constant 8 : i32
    %421 = arith.muli %c6_i32, %c8_i32_120 : i32
    %422 = tpu.assume_multiple %421, 8 : i32
    %423 = arith.index_cast %422 : i32 to index
    %c0_121 = arith.constant 0 : index
    %424 = vector.load %arg1[%423, %c0_121] : memref<64x128xf32, #tpu.memory_space<vmem>>, vector<8x128xf32>
    %c0_122 = arith.constant 0 : index
    %c0_123 = arith.constant 0 : index
    %425 = vector.load %arg3[%c0_122, %c0_123] : memref<32x128xf32, #tpu.memory_space<vmem>>, vector<32x128xf32>
    %cst_124 = arith.constant dense<0.000000e+00> : vector<8x128xf32>
    %426 = tpu.matmul %383, %425, %cst_124 {dimension_numbers = #tpu.dot_dimension_numbers<[1], [0], [0], [1], [0, 0, 1, 1], [], []>} : vector<8x32xf32>, vector<32x128xf32>, vector<8x128xf32> -> vector<8x128xf32>
    %427 = arith.addf %424, %426 : vector<8x128xf32>
    %428 = vector.extract_strided_slice %427 {offsets = [0, 0], sizes = [8, 32], strides = [1, 1]} : vector<8x128xf32> to vector<8x32xf32>
    %429 = arith.negf %428 : vector<8x32xf32>
    %430 = math.exp %429 : vector<8x32xf32>
    %cst_125 = arith.constant 1.000000e+00 : f32
    %431 = vector.broadcast %cst_125 : f32 to vector<8x32xf32>
    %432 = arith.addf %431, %430 : vector<8x32xf32>
    %433 = arith.divf %431, %432 : vector<8x32xf32>
    %434 = vector.extract_strided_slice %427 {offsets = [0, 32], sizes = [8, 32], strides = [1, 1]} : vector<8x128xf32> to vector<8x32xf32>
    %435 = arith.negf %434 : vector<8x32xf32>
    %436 = math.exp %435 : vector<8x32xf32>
    %cst_126 = arith.constant 1.000000e+00 : f32
    %437 = vector.broadcast %cst_126 : f32 to vector<8x32xf32>
    %438 = arith.addf %437, %436 : vector<8x32xf32>
    %439 = arith.divf %437, %438 : vector<8x32xf32>
    %440 = vector.extract_strided_slice %427 {offsets = [0, 64], sizes = [8, 32], strides = [1, 1]} : vector<8x128xf32> to vector<8x32xf32>
    %441 = math.tanh %440 : vector<8x32xf32>
    %442 = vector.extract_strided_slice %427 {offsets = [0, 96], sizes = [8, 32], strides = [1, 1]} : vector<8x128xf32> to vector<8x32xf32>
    %443 = arith.negf %442 : vector<8x32xf32>
    %444 = math.exp %443 : vector<8x32xf32>
    %cst_127 = arith.constant 1.000000e+00 : f32
    %445 = vector.broadcast %cst_127 : f32 to vector<8x32xf32>
    %446 = arith.addf %445, %444 : vector<8x32xf32>
    %447 = arith.divf %445, %446 : vector<8x32xf32>
    %448 = arith.mulf %439, %381 : vector<8x32xf32>
    %449 = arith.mulf %433, %441 : vector<8x32xf32>
    %450 = arith.addf %448, %449 : vector<8x32xf32>
    %451 = math.tanh %450 : vector<8x32xf32>
    %452 = arith.mulf %447, %451 : vector<8x32xf32>
    %453 = arith.index_cast %422 : i32 to index
    %c0_128 = arith.constant 0 : index
    %454 = vector.load %arg5[%453, %c0_128] : memref<64x32xf32, #tpu.memory_space<vmem>>, vector<8x32xf32>
    tpu.vector_store %arg5[%453, %c0_128], %452 {strides = array<i32>} : memref<64x32xf32, #tpu.memory_space<vmem>>, vector<8x32xf32>,
    %c7_i32_129 = arith.constant 7 : i32
    %455 = arith.subi %c7_i32_129, %c6_i32 : i32
    %c8_i32_130 = arith.constant 8 : i32
    %456 = arith.muli %455, %c8_i32_130 : i32
    %457 = tpu.assume_multiple %456, 8 : i32
    %458 = arith.index_cast %457 : i32 to index
    %c0_131 = arith.constant 0 : index
    %459 = vector.load %arg2[%458, %c0_131] : memref<64x128xf32, #tpu.memory_space<vmem>>, vector<8x128xf32>
    %c0_132 = arith.constant 0 : index
    %c0_133 = arith.constant 0 : index
    %460 = vector.load %arg4[%c0_132, %c0_133] : memref<32x128xf32, #tpu.memory_space<vmem>>, vector<32x128xf32>
    %cst_134 = arith.constant dense<0.000000e+00> : vector<8x128xf32>
    %461 = tpu.matmul %418, %460, %cst_134 {dimension_numbers = #tpu.dot_dimension_numbers<[1], [0], [0], [1], [0, 0, 1, 1], [], []>} : vector<8x32xf32>, vector<32x128xf32>, vector<8x128xf32> -> vector<8x128xf32>
    %462 = arith.addf %459, %461 : vector<8x128xf32>
    %463 = vector.extract_strided_slice %462 {offsets = [0, 0], sizes = [8, 32], strides = [1, 1]} : vector<8x128xf32> to vector<8x32xf32>
    %464 = arith.negf %463 : vector<8x32xf32>
    %465 = math.exp %464 : vector<8x32xf32>
    %cst_135 = arith.constant 1.000000e+00 : f32
    %466 = vector.broadcast %cst_135 : f32 to vector<8x32xf32>
    %467 = arith.addf %466, %465 : vector<8x32xf32>
    %468 = arith.divf %466, %467 : vector<8x32xf32>
    %469 = vector.extract_strided_slice %462 {offsets = [0, 32], sizes = [8, 32], strides = [1, 1]} : vector<8x128xf32> to vector<8x32xf32>
    %470 = arith.negf %469 : vector<8x32xf32>
    %471 = math.exp %470 : vector<8x32xf32>
    %cst_136 = arith.constant 1.000000e+00 : f32
    %472 = vector.broadcast %cst_136 : f32 to vector<8x32xf32>
    %473 = arith.addf %472, %471 : vector<8x32xf32>
    %474 = arith.divf %472, %473 : vector<8x32xf32>
    %475 = vector.extract_strided_slice %462 {offsets = [0, 64], sizes = [8, 32], strides = [1, 1]} : vector<8x128xf32> to vector<8x32xf32>
    %476 = math.tanh %475 : vector<8x32xf32>
    %477 = vector.extract_strided_slice %462 {offsets = [0, 96], sizes = [8, 32], strides = [1, 1]} : vector<8x128xf32> to vector<8x32xf32>
    %478 = arith.negf %477 : vector<8x32xf32>
    %479 = math.exp %478 : vector<8x32xf32>
    %cst_137 = arith.constant 1.000000e+00 : f32
    %480 = vector.broadcast %cst_137 : f32 to vector<8x32xf32>
    %481 = arith.addf %480, %479 : vector<8x32xf32>
    %482 = arith.divf %480, %481 : vector<8x32xf32>
    %483 = arith.mulf %474, %416 : vector<8x32xf32>
    %484 = arith.mulf %468, %476 : vector<8x32xf32>
    %485 = arith.addf %483, %484 : vector<8x32xf32>
    %486 = math.tanh %485 : vector<8x32xf32>
    %487 = arith.mulf %482, %486 : vector<8x32xf32>
    %488 = arith.index_cast %457 : i32 to index
    %c0_138 = arith.constant 0 : index
    %489 = vector.load %arg6[%488, %c0_138] : memref<64x32xf32, #tpu.memory_space<vmem>>, vector<8x32xf32>
    tpu.vector_store %arg6[%488, %c0_138], %487 {strides = array<i32>} : memref<64x32xf32, #tpu.memory_space<vmem>>, vector<8x32xf32>,
    %c7_i32_139 = arith.constant 7 : i32
    %c8_i32_140 = arith.constant 8 : i32
    %490 = arith.muli %c7_i32_139, %c8_i32_140 : i32
    %491 = tpu.assume_multiple %490, 8 : i32
    %492 = arith.index_cast %491 : i32 to index
    %c0_141 = arith.constant 0 : index
    %493 = vector.load %arg1[%492, %c0_141] : memref<64x128xf32, #tpu.memory_space<vmem>>, vector<8x128xf32>
    %c0_142 = arith.constant 0 : index
    %c0_143 = arith.constant 0 : index
    %494 = vector.load %arg3[%c0_142, %c0_143] : memref<32x128xf32, #tpu.memory_space<vmem>>, vector<32x128xf32>
    %cst_144 = arith.constant dense<0.000000e+00> : vector<8x128xf32>
    %495 = tpu.matmul %452, %494, %cst_144 {dimension_numbers = #tpu.dot_dimension_numbers<[1], [0], [0], [1], [0, 0, 1, 1], [], []>} : vector<8x32xf32>, vector<32x128xf32>, vector<8x128xf32> -> vector<8x128xf32>
    %496 = arith.addf %493, %495 : vector<8x128xf32>
    %497 = vector.extract_strided_slice %496 {offsets = [0, 0], sizes = [8, 32], strides = [1, 1]} : vector<8x128xf32> to vector<8x32xf32>
    %498 = arith.negf %497 : vector<8x32xf32>
    %499 = math.exp %498 : vector<8x32xf32>
    %cst_145 = arith.constant 1.000000e+00 : f32
    %500 = vector.broadcast %cst_145 : f32 to vector<8x32xf32>
    %501 = arith.addf %500, %499 : vector<8x32xf32>
    %502 = arith.divf %500, %501 : vector<8x32xf32>
    %503 = vector.extract_strided_slice %496 {offsets = [0, 32], sizes = [8, 32], strides = [1, 1]} : vector<8x128xf32> to vector<8x32xf32>
    %504 = arith.negf %503 : vector<8x32xf32>
    %505 = math.exp %504 : vector<8x32xf32>
    %cst_146 = arith.constant 1.000000e+00 : f32
    %506 = vector.broadcast %cst_146 : f32 to vector<8x32xf32>
    %507 = arith.addf %506, %505 : vector<8x32xf32>
    %508 = arith.divf %506, %507 : vector<8x32xf32>
    %509 = vector.extract_strided_slice %496 {offsets = [0, 64], sizes = [8, 32], strides = [1, 1]} : vector<8x128xf32> to vector<8x32xf32>
    %510 = math.tanh %509 : vector<8x32xf32>
    %511 = vector.extract_strided_slice %496 {offsets = [0, 96], sizes = [8, 32], strides = [1, 1]} : vector<8x128xf32> to vector<8x32xf32>
    %512 = arith.negf %511 : vector<8x32xf32>
    %513 = math.exp %512 : vector<8x32xf32>
    %cst_147 = arith.constant 1.000000e+00 : f32
    %514 = vector.broadcast %cst_147 : f32 to vector<8x32xf32>
    %515 = arith.addf %514, %513 : vector<8x32xf32>
    %516 = arith.divf %514, %515 : vector<8x32xf32>
    %517 = arith.mulf %508, %450 : vector<8x32xf32>
    %518 = arith.mulf %502, %510 : vector<8x32xf32>
    %519 = arith.addf %517, %518 : vector<8x32xf32>
    %520 = math.tanh %519 : vector<8x32xf32>
    %521 = arith.mulf %516, %520 : vector<8x32xf32>
    %522 = arith.index_cast %491 : i32 to index
    %c0_148 = arith.constant 0 : index
    %523 = vector.load %arg5[%522, %c0_148] : memref<64x32xf32, #tpu.memory_space<vmem>>, vector<8x32xf32>
    tpu.vector_store %arg5[%522, %c0_148], %521 {strides = array<i32>} : memref<64x32xf32, #tpu.memory_space<vmem>>, vector<8x32xf32>,
    %c7_i32_149 = arith.constant 7 : i32
    %524 = arith.subi %c7_i32_149, %c7_i32_139 : i32
    %c8_i32_150 = arith.constant 8 : i32
    %525 = arith.muli %524, %c8_i32_150 : i32
    %526 = tpu.assume_multiple %525, 8 : i32
    %527 = arith.index_cast %526 : i32 to index
    %c0_151 = arith.constant 0 : index
    %528 = vector.load %arg2[%527, %c0_151] : memref<64x128xf32, #tpu.memory_space<vmem>>, vector<8x128xf32>
    %c0_152 = arith.constant 0 : index
    %c0_153 = arith.constant 0 : index
    %529 = vector.load %arg4[%c0_152, %c0_153] : memref<32x128xf32, #tpu.memory_space<vmem>>, vector<32x128xf32>
    %cst_154 = arith.constant dense<0.000000e+00> : vector<8x128xf32>
    %530 = tpu.matmul %487, %529, %cst_154 {dimension_numbers = #tpu.dot_dimension_numbers<[1], [0], [0], [1], [0, 0, 1, 1], [], []>} : vector<8x32xf32>, vector<32x128xf32>, vector<8x128xf32> -> vector<8x128xf32>
    %531 = arith.addf %528, %530 : vector<8x128xf32>
    %532 = vector.extract_strided_slice %531 {offsets = [0, 0], sizes = [8, 32], strides = [1, 1]} : vector<8x128xf32> to vector<8x32xf32>
    %533 = arith.negf %532 : vector<8x32xf32>
    %534 = math.exp %533 : vector<8x32xf32>
    %cst_155 = arith.constant 1.000000e+00 : f32
    %535 = vector.broadcast %cst_155 : f32 to vector<8x32xf32>
    %536 = arith.addf %535, %534 : vector<8x32xf32>
    %537 = arith.divf %535, %536 : vector<8x32xf32>
    %538 = vector.extract_strided_slice %531 {offsets = [0, 32], sizes = [8, 32], strides = [1, 1]} : vector<8x128xf32> to vector<8x32xf32>
    %539 = arith.negf %538 : vector<8x32xf32>
    %540 = math.exp %539 : vector<8x32xf32>
    %cst_156 = arith.constant 1.000000e+00 : f32
    %541 = vector.broadcast %cst_156 : f32 to vector<8x32xf32>
    %542 = arith.addf %541, %540 : vector<8x32xf32>
    %543 = arith.divf %541, %542 : vector<8x32xf32>
    %544 = vector.extract_strided_slice %531 {offsets = [0, 64], sizes = [8, 32], strides = [1, 1]} : vector<8x128xf32> to vector<8x32xf32>
    %545 = math.tanh %544 : vector<8x32xf32>
    %546 = vector.extract_strided_slice %531 {offsets = [0, 96], sizes = [8, 32], strides = [1, 1]} : vector<8x128xf32> to vector<8x32xf32>
    %547 = arith.negf %546 : vector<8x32xf32>
    %548 = math.exp %547 : vector<8x32xf32>
    %cst_157 = arith.constant 1.000000e+00 : f32
    %549 = vector.broadcast %cst_157 : f32 to vector<8x32xf32>
    %550 = arith.addf %549, %548 : vector<8x32xf32>
    %551 = arith.divf %549, %550 : vector<8x32xf32>
    %552 = arith.mulf %543, %485 : vector<8x32xf32>
    %553 = arith.mulf %537, %545 : vector<8x32xf32>
    %554 = arith.addf %552, %553 : vector<8x32xf32>
    %555 = math.tanh %554 : vector<8x32xf32>
    %556 = arith.mulf %551, %555 : vector<8x32xf32>
    %557 = arith.index_cast %526 : i32 to index
    %c0_158 = arith.constant 0 : index
    %558 = vector.load %arg6[%557, %c0_158] : memref<64x32xf32, #tpu.memory_space<vmem>>, vector<8x32xf32>
    tpu.vector_store %arg6[%557, %c0_158], %556 {strides = array<i32>} : memref<64x32xf32, #tpu.memory_space<vmem>>, vector<8x32xf32>,
    %c8_i32_159 = arith.constant 8 : i32
    %c0_160 = arith.constant 0 : index
    %c0_161 = arith.constant 0 : index
    %559 = vector.load %arg9[%c0_160, %c0_161] : memref<8x32xf32, #tpu.memory_space<vmem>>, vector<8x32xf32>
    tpu.vector_store %arg9[%c0_160, %c0_161], %521 {strides = array<i32>} : memref<8x32xf32, #tpu.memory_space<vmem>>, vector<8x32xf32>,
    %c0_162 = arith.constant 0 : index
    %c0_163 = arith.constant 0 : index
    %560 = vector.load %arg10[%c0_162, %c0_163] : memref<8x32xf32, #tpu.memory_space<vmem>>, vector<8x32xf32>
    tpu.vector_store %arg10[%c0_162, %c0_163], %519 {strides = array<i32>} : memref<8x32xf32, #tpu.memory_space<vmem>>, vector<8x32xf32>,
    %c0_164 = arith.constant 0 : index
    %c0_165 = arith.constant 0 : index
    %561 = vector.load %arg11[%c0_164, %c0_165] : memref<8x32xf32, #tpu.memory_space<vmem>>, vector<8x32xf32>
    tpu.vector_store %arg11[%c0_164, %c0_165], %556 {strides = array<i32>} : memref<8x32xf32, #tpu.memory_space<vmem>>, vector<8x32xf32>,
    %c0_166 = arith.constant 0 : index
    %c0_167 = arith.constant 0 : index
    %562 = vector.load %arg12[%c0_166, %c0_167] : memref<8x32xf32, #tpu.memory_space<vmem>>, vector<8x32xf32>
    tpu.vector_store %arg12[%c0_166, %c0_167], %554 {strides = array<i32>} : memref<8x32xf32, #tpu.memory_space<vmem>>, vector<8x32xf32>,
    %c0_i32_168 = arith.constant 0 : i32
    %563 = arith.cmpi eq, %arg0, %c0_i32_168 : i32
    %564 = arith.extui %563 : i1 to i32
    %c0_i32_169 = arith.constant 0 : i32
    %565 = arith.cmpi ne, %564, %c0_i32_169 : i32
    scf.if %565 {
      %c0_170 = arith.constant 0 : index
      %c0_171 = arith.constant 0 : index
      %c0_172 = arith.constant 0 : index
      %566 = vector.load %arg7[%c0_170, %c0_171, %c0_172] : memref<2x8x32xf32, #tpu.memory_space<vmem>>, vector<1x8x32xf32>
      %567 = vector.shape_cast %566 : vector<1x8x32xf32> to vector<8x32xf32>
      %568 = vector.shape_cast %521 : vector<8x32xf32> to vector<1x8x32xf32>
      tpu.vector_store %arg7[%c0_170, %c0_171, %c0_172], %568 {strides = array<i32>} : memref<2x8x32xf32, #tpu.memory_space<vmem>>, vector<1x8x32xf32>,
      %c1 = arith.constant 1 : index
      %c0_173 = arith.constant 0 : index
      %c0_174 = arith.constant 0 : index
      %569 = vector.load %arg7[%c1, %c0_173, %c0_174] : memref<2x8x32xf32, #tpu.memory_space<vmem>>, vector<1x8x32xf32>
      %570 = vector.shape_cast %569 : vector<1x8x32xf32> to vector<8x32xf32>
      %571 = vector.shape_cast %556 : vector<8x32xf32> to vector<1x8x32xf32>
      tpu.vector_store %arg7[%c1, %c0_173, %c0_174], %571 {strides = array<i32>} : memref<2x8x32xf32, #tpu.memory_space<vmem>>, vector<1x8x32xf32>,
      %c0_175 = arith.constant 0 : index
      %c0_176 = arith.constant 0 : index
      %c0_177 = arith.constant 0 : index
      %572 = vector.load %arg8[%c0_175, %c0_176, %c0_177] : memref<2x8x32xf32, #tpu.memory_space<vmem>>, vector<1x8x32xf32>
      %573 = vector.shape_cast %572 : vector<1x8x32xf32> to vector<8x32xf32>
      %574 = vector.shape_cast %519 : vector<8x32xf32> to vector<1x8x32xf32>
      tpu.vector_store %arg8[%c0_175, %c0_176, %c0_177], %574 {strides = array<i32>} : memref<2x8x32xf32, #tpu.memory_space<vmem>>, vector<1x8x32xf32>,
      %c1_178 = arith.constant 1 : index
      %c0_179 = arith.constant 0 : index
      %c0_180 = arith.constant 0 : index
      %575 = vector.load %arg8[%c1_178, %c0_179, %c0_180] : memref<2x8x32xf32, #tpu.memory_space<vmem>>, vector<1x8x32xf32>
      %576 = vector.shape_cast %575 : vector<1x8x32xf32> to vector<8x32xf32>
      %577 = vector.shape_cast %554 : vector<8x32xf32> to vector<1x8x32xf32>
      tpu.vector_store %arg8[%c1_178, %c0_179, %c0_180], %577 {strides = array<i32>} : memref<2x8x32xf32, #tpu.memory_space<vmem>>, vector<1x8x32xf32>,
    } else {
    }
    return
  }
  func.func @transform_0(%arg0: i32) -> (i32, i32) {
    %c0_i32 = arith.constant 0 : i32
    %c0_i32_0 = arith.constant 0 : i32
    return %arg0, %c0_i32 : i32, i32
  }
  func.func @transform_1(%arg0: i32) -> (i32, i32) {
    %c0_i32 = arith.constant 0 : i32
    %0 = arith.subi %c0_i32, %arg0 : i32
    %c0_i32_0 = arith.constant 0 : i32
    %c0_i32_1 = arith.constant 0 : i32
    return %0, %c0_i32_0 : i32, i32
  }
  func.func @transform_2(%arg0: i32) -> (i32, i32) {
    %c0_i32 = arith.constant 0 : i32
    %c0_i32_0 = arith.constant 0 : i32
    %c0_i32_1 = arith.constant 0 : i32
    return %c0_i32, %c0_i32_0 : i32, i32
  }
  func.func @transform_3(%arg0: i32) -> (i32, i32) {
    %c0_i32 = arith.constant 0 : i32
    %c0_i32_0 = arith.constant 0 : i32
    %c0_i32_1 = arith.constant 0 : i32
    return %c0_i32, %c0_i32_0 : i32, i32
  }
  func.func @transform_4(%arg0: i32) -> (i32, i32) {
    %c0_i32 = arith.constant 0 : i32
    %c0_i32_0 = arith.constant 0 : i32
    return %arg0, %c0_i32 : i32, i32
  }
  func.func @transform_5(%arg0: i32) -> (i32, i32) {
    %c0_i32 = arith.constant 0 : i32
    %0 = arith.subi %c0_i32, %arg0 : i32
    %c0_i32_0 = arith.constant 0 : i32
    %c0_i32_1 = arith.constant 0 : i32
    return %0, %c0_i32_0 : i32, i32
  }
  func.func @transform_6(%arg0: i32) -> (i32, i32, i32) {
    %c0_i32 = arith.constant 0 : i32
    %c0_i32_0 = arith.constant 0 : i32
    %c0_i32_1 = arith.constant 0 : i32
    %c0_i32_2 = arith.constant 0 : i32
    return %c0_i32, %c0_i32_0, %c0_i32_1 : i32, i32, i32
  }
  func.func @transform_7(%arg0: i32) -> (i32, i32, i32) {
    %c0_i32 = arith.constant 0 : i32
    %c0_i32_0 = arith.constant 0 : i32
    %c0_i32_1 = arith.constant 0 : i32
    %c0_i32_2 = arith.constant 0 : i32
    return %c0_i32, %c0_i32_0, %c0_i32_1 : i32, i32, i32
  }
}

</mosaic_0001>

<llo_original>
// kernel: encoder_rnn_forward.2
$region0: #{encoder_rnn_forward.2}
  #allocation0 [shape = 'u32[]', space=smem, size = 0x4, offset = 0x4, fixed_abs, tag = 'smem constant byte address 0x4 - core index']
  #allocation1 [shape = 'u32[144,128]{1,0:T(1,128)}', space=vmem, size = 0x12000, scoped, tag = 'internal scratch']
  %s0 = inlined_call_operand.vmem [shape: f32[64,16], index: 0, kind: input, shape index: {}]
  %s1 = inlined_call_operand.vmem [shape: f32[16,256], index: 1, kind: input, shape index: {}]
  %s2 = inlined_call_operand.vmem [shape: f32[1,256], index: 2, kind: input, shape index: {}]
  %s3 = inlined_call_operand.vmem [shape: f32[64,128], index: 3, kind: output, shape index: {0}]
  %s4 = inlined_call_operand.vmem [shape: f32[64,128], index: 4, kind: output, shape index: {1}]
  %5 = xla_tuple %s3, %s4
  %s6 = sld [smem:[#allocation0]]
  $region30: #{encoder_rnn_forward.2} parent=0
    _
  %s8 = ssub.s32 1, %s6
  %s9 = scalar_select 0, %s8, %s6
  // Predicated region
  $region2: #{encoder_rnn_forward.2} parent=0 // pred_check
    _
  $region3: #{encoder_rnn_forward.2} parent=0 // pred_check_branch
    %11 = sbr.rel (0) target = $region5
  $region4: #{encoder_rnn_forward.2} parent=0 // pred_region
    _
  $region5: #{encoder_rnn_forward.2} parent=0 // pred_fallthru
    _
  // Predicated region
  $region6: #{encoder_rnn_forward.2} parent=0 // pred_check
    _
  $region7: #{encoder_rnn_forward.2} parent=0 // pred_check_branch
    %13 = sbr.rel (0) target = $region9
  $region8: #{encoder_rnn_forward.2} parent=0 // pred_region
    _
  $region9: #{encoder_rnn_forward.2} parent=0 // pred_fallthru
    _
  // Predicated region
  $region10: #{encoder_rnn_forward.2} parent=0 // pred_check
    _
  $region11: #{encoder_rnn_forward.2} parent=0 // pred_check_branch
    %15 = sbr.rel (0) target = $region13
  $region12: #{encoder_rnn_forward.2} parent=0 // pred_region
    _
  $region13: #{encoder_rnn_forward.2} parent=0 // pred_fallthru
    _
  %v16 = vld [vmem:[%s0] sm:$0xff]
  %v17 = vld [vmem:[%s0 + $0x8] sm:$0xff]
  %v18 = vld [vmem:[%s0 + $0x10] sm:$0xff]
  %v19 = vld [vmem:[%s0 + $0x18] sm:$0xff]
  %v20 = vld [vmem:[%s0 + $0x20] sm:$0xff]
  %v21 = vld [vmem:[%s0 + $0x28] sm:$0xff]
  %v22 = vld [vmem:[%s0 + $0x30] sm:$0xff]
  %v23 = vld [vmem:[%s0 + $0x38] sm:$0xff]
  %v24 = vld [vmem:[%s1] sm:$0xff]
  %v25 = vld [vmem:[%s1 + $0x8] sm:$0xff]
  %v26 = vld [vmem:[%s1 + $0x10] sm:$0xff]
  %v27 = vld [vmem:[%s1 + $0x18] sm:$0xff]
  %v28 = vld [vmem:[%s2] sm:$0x3]
  %v30 = vlaneseq
  %v31 = vshrl.u32 %v30, 7
  %v32 = vsub.s32 0, %v31
  %v33 = vrot.slane %v28, %v32
  %v34 = vlaneseq
  %v35 = vshrl.u32 %v34, 7
  %v36 = vsub.s32 1, %v35
  %v37 = vrot.slane %v28, %v36
  %vm40 = vcmask 130048
  %v42 = vsel %vm40, %v16, 0
  %v45 = vsel %vm40, %v17, 0
  %v48 = vsel %vm40, %v18, 0
  %v51 = vsel %vm40, %v19, 0
  %v54 = vsel %vm40, %v20, 0
  %v57 = vsel %vm40, %v21, 0
  %v60 = vsel %vm40, %v22, 0
  %v63 = vsel %vm40, %v23, 0
  %65 = vmatprep.subr.mxu0 %v25
  %66 = vmatpush1.msra.mxu0 %v24
  %67 = vmatprep.subr.mxu0 %v27
  %68 = vmatpush1.msra.mxu0 %v26
  %69 = vmatprep.subr.mxu0 0.0
  %70 = vmatpush1.msra.mxu0 0.0
  %71 = vmatprep.subr.mxu0 0.0
  %72 = vmatpush1.msra.mxu0 0.0
  %73 = vmatprep.subr.mxu0 0.0
  %74 = vmatpush1.msra.mxu0 0.0
  %75 = vmatprep.subr.mxu0 0.0
  %76 = vmatpush1.msra.mxu0 0.0
  %77 = vmatprep.subr.mxu0 0.0
  %78 = vmatpush1.msra.mxu0 0.0
  %79 = vmatprep.subr.mxu0 0.0
  %80 = vmatpush1.msra.mxu0 0.0
  %81 = vmatprep.subr.mxu0 0.0
  %82 = vmatpush1.msra.mxu0 0.0
  %83 = vmatprep.subr.mxu0 0.0
  %84 = vmatpush1.msra.mxu0 0.0
  %85 = vmatprep.subr.mxu0 0.0
  %86 = vmatpush1.msra.mxu0 0.0
  %87 = vmatprep.subr.mxu0 0.0
  %88 = vmatpush1.msra.mxu0 0.0
  %89 = vmatprep.subr.mxu0 0.0
  %90 = vmatpush1.msra.mxu0 0.0
  %91 = vmatprep.subr.mxu0 0.0
  %92 = vmatpush1.msra.mxu0 0.0
  %93 = vmatprep.subr.mxu0 0.0
  %94 = vmatpush1.msra.mxu0 0.0
  %95 = vmatprep.subr.mxu0 0.0
  %96 = vmatpush1.msra.mxu0 0.0
  %97 = vmatprep.subr.mxu0 0.0
  %98 = vmatpush1.msra.mxu0 0.0
  %99 = vmatprep.subr.mxu0 0.0
  %100 = vmatpush1.msra.mxu0 0.0
  %101 = vmatprep.subr.mxu0 0.0
  %102 = vmatpush1.msra.mxu0 0.0
  %103 = vmatprep.subr.mxu0 0.0
  %104 = vmatpush1.msra.mxu0 0.0
  %105 = vmatprep.subr.mxu0 0.0
  %106 = vmatpush1.msra.mxu0 0.0
  %107 = vmatprep.subr.mxu0 0.0
  %108 = vmatpush1.msra.mxu0 0.0
  %109 = vmatprep.subr.mxu0 0.0
  %110 = vmatpush1.msra.mxu0 0.0
  %111 = vmatprep.subr.mxu0 0.0
  %112 = vmatpush1.msra.mxu0 0.0
  %113 = vmatprep.subr.mxu0 0.0
  %114 = vmatpush1.msra.mxu0 0.0
  %115 = vmatprep.subr.mxu0 0.0
  %116 = vmatpush1.msra.mxu0 0.0
  %117 = vmatprep.subr.mxu0 0.0
  %118 = vmatpush1.msra.mxu0 0.0
  %119 = vmatprep.subr.mxu0 0.0
  %120 = vmatpush1.msra.mxu0 0.0
  %121 = vmatprep.subr.mxu0 0.0
  %122 = vmatpush1.msra.mxu0 0.0
  %123 = vmatprep.subr.mxu0 0.0
  %124 = vmatpush1.msra.mxu0 0.0
  %125 = vmatprep.subr.mxu0 0.0
  %126 = vmatpush1.msra.mxu0 0.0
  %127 = vmatprep.subr.mxu0 0.0
  %128 = vmatpush1.msra.mxu0 0.0
  %129 = vmatprep.mubr.f32.mxu0 0.0
  %130 = vmatmul.mubr.f32.gmra.mrb[0].mxu0 %v42
  %v131 = vpop.f32.mrb[0].mxu0
  %v132 = vadd.f32 %v33, %v131
  %v133 = vpop.f32.mrb[0].mxu0
  %v134 = vadd.f32 %v37, %v133
  %135 = vmatprep.mubr.f32.mxu0 0.0
  %136 = vmatmul.mubr.f32.gmra.mrb[0].mxu0 %v45
  %v137 = vpop.f32.mrb[0].mxu0
  %v138 = vadd.f32 %v33, %v137
  %v139 = vpop.f32.mrb[0].mxu0
  %v140 = vadd.f32 %v37, %v139
  %141 = vmatprep.mubr.f32.mxu0 0.0
  %142 = vmatmul.mubr.f32.gmra.mrb[0].mxu0 %v48
  %v143 = vpop.f32.mrb[0].mxu0
  %v144 = vadd.f32 %v33, %v143
  %v145 = vpop.f32.mrb[0].mxu0
  %v146 = vadd.f32 %v37, %v145
  %147 = vmatprep.mubr.f32.mxu0 0.0
  %148 = vmatmul.mubr.f32.gmra.mrb[0].mxu0 %v51
  %v149 = vpop.f32.mrb[0].mxu0
  %v150 = vadd.f32 %v33, %v149
  %v151 = vpop.f32.mrb[0].mxu0
  %v152 = vadd.f32 %v37, %v151
  %153 = vmatprep.mubr.f32.mxu0 0.0
  %154 = vmatmul.mubr.f32.gmra.mrb[0].mxu0 %v54
  %v155 = vpop.f32.mrb[0].mxu0
  %v156 = vadd.f32 %v33, %v155
  %v157 = vpop.f32.mrb[0].mxu0
  %v158 = vadd.f32 %v37, %v157
  %159 = vmatprep.mubr.f32.mxu0 0.0
  %160 = vmatmul.mubr.f32.gmra.mrb[0].mxu0 %v57
  %v161 = vpop.f32.mrb[0].mxu0
  %v162 = vadd.f32 %v33, %v161
  %v163 = vpop.f32.mrb[0].mxu0
  %v164 = vadd.f32 %v37, %v163
  %165 = vmatprep.mubr.f32.mxu0 0.0
  %166 = vmatmul.mubr.f32.gmra.mrb[0].mxu0 %v60
  %v167 = vpop.f32.mrb[0].mxu0
  %v168 = vadd.f32 %v33, %v167
  %v169 = vpop.f32.mrb[0].mxu0
  %v170 = vadd.f32 %v37, %v169
  %171 = vmatprep.mubr.f32.mxu0 0.0
  %172 = vmatmul.mubr.f32.gmra.mrb[0].mxu0 %v63
  %v173 = vpop.f32.mrb[0].mxu0
  %v174 = vadd.f32 %v33, %v173
  %v175 = vpop.f32.mrb[0].mxu0
  %v176 = vadd.f32 %v37, %v175
  %177 = vdwg.mxu0
  %178 = vst [vmem:[%s3] sm:$0xff] %v132
  %179 = vst [vmem:[%s3 + $0x8] sm:$0xff] %v138
  %180 = vst [vmem:[%s3 + $0x10] sm:$0xff] %v144
  %181 = vst [vmem:[%s3 + $0x18] sm:$0xff] %v150
  %182 = vst [vmem:[%s3 + $0x20] sm:$0xff] %v156
  %183 = vst [vmem:[%s3 + $0x28] sm:$0xff] %v162
  %184 = vst [vmem:[%s3 + $0x30] sm:$0xff] %v168
  %185 = vst [vmem:[%s3 + $0x38] sm:$0xff] %v174
  %186 = vst [vmem:[%s4] sm:$0xff] %v134
  %187 = vst [vmem:[%s4 + $0x8] sm:$0xff] %v140
  %188 = vst [vmem:[%s4 + $0x10] sm:$0xff] %v146
  %189 = vst [vmem:[%s4 + $0x18] sm:$0xff] %v152
  %190 = vst [vmem:[%s4 + $0x20] sm:$0xff] %v158
  %191 = vst [vmem:[%s4 + $0x28] sm:$0xff] %v164
  %192 = vst [vmem:[%s4 + $0x30] sm:$0xff] %v170
  %193 = vst [vmem:[%s4 + $0x38] sm:$0xff] %v176
  // Predicated region
  $region14: #{encoder_rnn_forward.2} parent=0 // pred_check
    _
  $region15: #{encoder_rnn_forward.2} parent=0 // pred_check_branch
    %195 = sbr.rel (0) target = $region17
  $region16: #{encoder_rnn_forward.2} parent=0 // pred_region
    _
  $region17: #{encoder_rnn_forward.2} parent=0 // pred_fallthru
    _
  // Predicated region
  $region18: #{encoder_rnn_forward.2} parent=0 // pred_check
    _
  $region19: #{encoder_rnn_forward.2} parent=0 // pred_check_branch
    %197 = sbr.rel (0) target = $region21
  $region20: #{encoder_rnn_forward.2} parent=0 // pred_region
    _
  $region21: #{encoder_rnn_forward.2} parent=0 // pred_fallthru
    _
  // Predicated region
  $region22: #{encoder_rnn_forward.2} parent=0 // pred_check
    _
  $region23: #{encoder_rnn_forward.2} parent=0 // pred_check_branch
    %199 = sbr.rel (0) target = $region25
  $region24: #{encoder_rnn_forward.2} parent=0 // pred_region
    _
  $region25: #{encoder_rnn_forward.2} parent=0 // pred_fallthru
    _
  // Predicated region
  $region26: #{encoder_rnn_forward.2} parent=0 // pred_check
    _
  $region27: #{encoder_rnn_forward.2} parent=0 // pred_check_branch
    %201 = sbr.rel (0) target = $region29
  $region28: #{encoder_rnn_forward.2} parent=0 // pred_region
    _
  $region29: #{encoder_rnn_forward.2} parent=0 // pred_fallthru
    _

// kernel: encoder_rnn_forward.3
$region0: #{encoder_rnn_forward.3}
  #allocation0 [shape = 'u32[]', space=smem, size = 0x4, offset = 0x4, fixed_abs, tag = 'smem constant byte address 0x4 - core index']
  #allocation1 [shape = 'u32[144,128]{1,0:T(1,128)}', space=vmem, size = 0x12000, scoped, tag = 'internal scratch']
  #allocation2 [shape = 'f32[8,32]{1,0:T(8,128)}', space=vmem, size = 0x1000, scoped, tag = 'scratch operand']
  #allocation3 [shape = 'f32[8,32]{1,0:T(8,128)}', space=vmem, size = 0x1000, scoped, tag = 'scratch operand']
  #allocation4 [shape = 'f32[8,32]{1,0:T(8,128)}', space=vmem, size = 0x1000, scoped, tag = 'scratch operand']
  #allocation5 [shape = 'f32[8,32]{1,0:T(8,128)}', space=vmem, size = 0x1000, scoped, tag = 'scratch operand']
  %s0 = inlined_call_operand.vmem [shape: f32[64,128], index: 0, kind: input, shape index: {}]
  %s1 = inlined_call_operand.vmem [shape: f32[64,128], index: 1, kind: input, shape index: {}]
  %s2 = inlined_call_operand.vmem [shape: f32[32,128], index: 2, kind: input, shape index: {}]
  %s3 = inlined_call_operand.vmem [shape: f32[32,128], index: 3, kind: input, shape index: {}]
  %s4 = inlined_call_operand.vmem [shape: f32[64,32], index: 4, kind: output, shape index: {0}]
  %s5 = inlined_call_operand.vmem [shape: f32[64,32], index: 5, kind: output, shape index: {1}]
  %s6 = inlined_call_operand.vmem [shape: f32[2,8,32], index: 6, kind: output, shape index: {2}]
  %s7 = inlined_call_operand.vmem [shape: f32[2,8,32], index: 7, kind: output, shape index: {3}]
  %8 = xla_tuple %s4, %s5, %s6, %s7
  %s9 = sld [smem:[#allocation0]]
  $region58: #{encoder_rnn_forward.3} parent=0
    _
  %s11 = ssub.s32 1, %s9
  %s12 = scalar_select 0, %s11, %s9
  // Predicated region
  $region2: #{encoder_rnn_forward.3} parent=0 // pred_check
    _
  $region3: #{encoder_rnn_forward.3} parent=0 // pred_check_branch
    %14 = sbr.rel (0) target = $region5
  $region4: #{encoder_rnn_forward.3} parent=0 // pred_region
    _
  $region5: #{encoder_rnn_forward.3} parent=0 // pred_fallthru
    _
  // Predicated region
  $region6: #{encoder_rnn_forward.3} parent=0 // pred_check
    _
  $region7: #{encoder_rnn_forward.3} parent=0 // pred_check_branch
    %16 = sbr.rel (0) target = $region9
  $region8: #{encoder_rnn_forward.3} parent=0 // pred_region
    %s17 = ssub.s32 0, 0
    %s18 = smul.u32 8, %s17
    %p19 = scmp.lt.s32.totalorder %s18, 7
    %s20 = scalar_select %p19, %s18, 7
    %s21 = smul.addr %s20, 8
    %s22 = scalar_lea.vmem %s1, %s21
    %s23 = ssub.s32 0, 0
    %s24 = smul.u32 8, %s23
  $region9: #{encoder_rnn_forward.3} parent=0 // pred_fallthru
    _
  // Predicated region
  $region10: #{encoder_rnn_forward.3} parent=0 // pred_check
    _
  $region11: #{encoder_rnn_forward.3} parent=0 // pred_check_branch
    %26 = sbr.rel (0) target = $region13
  $region12: #{encoder_rnn_forward.3} parent=0 // pred_region
    _
  $region13: #{encoder_rnn_forward.3} parent=0 // pred_fallthru
    _
  // Predicated region
  $region14: #{encoder_rnn_forward.3} parent=0 // pred_check
    _
  $region15: #{encoder_rnn_forward.3} parent=0 // pred_check_branch
    %28 = sbr.rel (0) target = $region17
  $region16: #{encoder_rnn_forward.3} parent=0 // pred_region
    _
  $region17: #{encoder_rnn_forward.3} parent=0 // pred_fallthru
    _
  %s29 = ssub.s32 0, 0
  %s30 = smul.u32 8, %s29
  %p31 = scmp.lt.s32.totalorder %s30, 7
  %s32 = scalar_select %p31, %s30, 7
  %s33 = smul.addr %s32, 8
  %s34 = scalar_lea.vmem %s1, %s33
  %s35 = ssub.s32 0, 0
  %s36 = smul.u32 8, %s35
  %p37 = scmp.lt.s32.totalorder %s36, 7
  %s38 = scalar_select %p37, %s36, 7
  %s39 = smul.addr %s38, 8
  %s40 = scalar_lea.vmem %s5, %s39
  %s41 = ssub.s32 0, 0
  %s42 = smul.u32 8, %s41
  %p43 = scmp.lt.s32.totalorder %s42, 7
  %s44 = scalar_select %p43, %s42, 7
  %s45 = smul.addr %s44, 8
  %s46 = scalar_lea.vmem %s1, %s45
  %s47 = ssub.s32 0, 0
  %s48 = smul.u32 8, %s47
  %s49 = ssub.s32 0, 0
  %s50 = smul.u32 8, %s49
  %p51 = scmp.lt.s32.totalorder %s50, 7
  %s52 = scalar_select %p51, %s50, 7
  %s53 = smul.addr %s52, 8
  %s54 = scalar_lea.vmem %s5, %s53
  %s55 = ssub.s32 0, 0
  %s56 = smul.u32 8, %s55
  %p57 = scmp.eq.s32.totalorder 0, 0
  // Predicated region
  $region18: #{encoder_rnn_forward.3} parent=0 // pred_check
    %p58 = pneg %p57
  $region19: #{encoder_rnn_forward.3} parent=0 // pred_check_branch
    %60 = sbr.rel (%p58) target = $region21
  $region20: #{encoder_rnn_forward.3} parent=0 // pred_region
    %vm61 = vcmask 261120
    %62 = vst.msk [vmem:[#allocation2] sm:$0xff] %vm61, 0.0
    %63 = vst.msk [vmem:[#allocation3] sm:$0xff] %vm61, 0.0
    %64 = vst.msk [vmem:[#allocation4] sm:$0xff] %vm61, 0.0
    %65 = vst.msk [vmem:[#allocation5] sm:$0xff] %vm61, 0.0
  $region21: #{encoder_rnn_forward.3} parent=0 // pred_fallthru
    _
  %v66 = vld [vmem:[#allocation2] sm:$0xff]
  %v67 = vld [vmem:[#allocation3] sm:$0xff]
  %v68 = vld [vmem:[#allocation4] sm:$0xff]
  %v69 = vld [vmem:[#allocation5] sm:$0xff]
  %v70 = vld [vmem:[%s0] sm:$0xff]
  %v71 = vld [vmem:[%s2] sm:$0xff]
  %v72 = vld [vmem:[%s2 + $0x8] sm:$0xff]
  %v73 = vld [vmem:[%s2 + $0x10] sm:$0xff]
  %v74 = vld [vmem:[%s2 + $0x18] sm:$0xff]
  %vm75 = vcmask 261120
  %v77 = vsel %vm75, %v66, 0
  %79 = vmatprep.subr.mxu0 0.0
  %80 = vmatpush1.msra.mxu0 %v71
  %81 = vmatprep.subr.mxu0 0.0
  %82 = vmatpush1.msra.mxu0 %v72
  %83 = vmatprep.subr.mxu0 0.0
  %84 = vmatpush1.msra.mxu0 %v73
  %85 = vmatprep.subr.mxu0 0.0
  %86 = vmatpush1.msra.mxu0 %v74
  %87 = vmatprep.subr.mxu0 0.0
  %88 = vmatpush1.msra.mxu0 0.0
  %89 = vmatprep.subr.mxu0 0.0
  %90 = vmatpush1.msra.mxu0 0.0
  %91 = vmatprep.subr.mxu0 0.0
  %92 = vmatpush1.msra.mxu0 0.0
  %93 = vmatprep.subr.mxu0 0.0
  %94 = vmatpush1.msra.mxu0 0.0
  %95 = vmatprep.subr.mxu0 0.0
  %96 = vmatpush1.msra.mxu0 0.0
  %97 = vmatprep.subr.mxu0 0.0
  %98 = vmatpush1.msra.mxu0 0.0
  %99 = vmatprep.subr.mxu0 0.0
  %100 = vmatpush1.msra.mxu0 0.0
  %101 = vmatprep.subr.mxu0 0.0
  %102 = vmatpush1.msra.mxu0 0.0
  %103 = vmatprep.subr.mxu0 0.0
  %104 = vmatpush1.msra.mxu0 0.0
  %105 = vmatprep.subr.mxu0 0.0
  %106 = vmatpush1.msra.mxu0 0.0
  %107 = vmatprep.subr.mxu0 0.0
  %108 = vmatpush1.msra.mxu0 0.0
  %109 = vmatprep.subr.mxu0 0.0
  %110 = vmatpush1.msra.mxu0 0.0
  %111 = vmatprep.subr.mxu0 0.0
  %112 = vmatpush1.msra.mxu0 0.0
  %113 = vmatprep.subr.mxu0 0.0
  %114 = vmatpush1.msra.mxu0 0.0
  %115 = vmatprep.subr.mxu0 0.0
  %116 = vmatpush1.msra.mxu0 0.0
  %117 = vmatprep.subr.mxu0 0.0
  %118 = vmatpush1.msra.mxu0 0.0
  %119 = vmatprep.subr.mxu0 0.0
  %120 = vmatpush1.msra.mxu0 0.0
  %121 = vmatprep.subr.mxu0 0.0
  %122 = vmatpush1.msra.mxu0 0.0
  %123 = vmatprep.subr.mxu0 0.0
  %124 = vmatpush1.msra.mxu0 0.0
  %125 = vmatprep.subr.mxu0 0.0
  %126 = vmatpush1.msra.mxu0 0.0
  %127 = vmatprep.subr.mxu0 0.0
  %128 = vmatpush1.msra.mxu0 0.0
  %129 = vmatprep.subr.mxu0 0.0
  %130 = vmatpush1.msra.mxu0 0.0
  %131 = vmatprep.subr.mxu0 0.0
  %132 = vmatpush1.msra.mxu0 0.0
  %133 = vmatprep.subr.mxu0 0.0
  %134 = vmatpush1.msra.mxu0 0.0
  %135 = vmatprep.subr.mxu0 0.0
  %136 = vmatpush1.msra.mxu0 0.0
  %137 = vmatprep.subr.mxu0 0.0
  %138 = vmatpush1.msra.mxu0 0.0
  %139 = vmatprep.subr.mxu0 0.0
  %140 = vmatpush1.msra.mxu0 0.0
  %141 = vmatprep.subr.mxu0 0.0
  %142 = vmatpush1.msra.mxu0 0.0
  %143 = vmatprep.mubr.f32.mxu0 0.0
  %144 = vmatmul.mubr.f32.gmra.mrb[0].mxu0 %v77
  %v145 = vpop.f32.mrb[0].mxu0
  %v146 = vadd.f32 0.0, %v145
  %v147 = vpop.f32.mrb[0].mxu0
  %148 = vdwg.mxu0
  %v149 = vadd.f32 %v70, %v146
  %v150 = vxor.u32 %v149, 2147483648
  %v151 = vmul.f32 %v150, 1.442695
  %v152 = vpow.pop %v151
  %v153 = vadd.f32 %v152, 1.0
  %v154 = vrcp.pop %v153
  %v155 = vmul.f32 1.0, %v154
  %v156 = vtanh.pop %v149
  %158 = vrot.lane.b32.xlu0 %v67, 32
  %v159 = vpop.permute.xlu0 %158
  %v161 = vmul.f32 %v155, %v159
  %163 = vrot.lane.b32.xlu0 %v156, 64
  %v164 = vpop.permute.xlu0 %163
  %v166 = vmul.f32 %v155, %v164
  %168 = vrot.lane.b32.xlu0 %v166, 32
  %v169 = vpop.permute.xlu0 %168
  %v171 = vadd.f32 %v161, %v169
  %v172 = vtanh.pop %v171
  %174 = vrot.lane.b32.xlu0 %v172, 64
  %v175 = vpop.permute.xlu0 %174
  %v177 = vmul.f32 %v155, %v175
  %179 = vrot.lane.b32.xlu0 %v177, 32
  %v180 = vpop.permute.xlu0 %179
  %182 = vst.msk [vmem:[%s4] sm:$0xff] %vm75, %v180
  %s183 = scalar_lea.vmem %s46, 56
  %v184 = vld [vmem:[%s183] sm:$0xff]
  %v185 = vld [vmem:[%s3] sm:$0xff]
  %v186 = vld [vmem:[%s3 + $0x8] sm:$0xff]
  %v187 = vld [vmem:[%s3 + $0x10] sm:$0xff]
  %v188 = vld [vmem:[%s3 + $0x18] sm:$0xff]
  %v190 = vsel %vm75, %v68, 0
  %192 = vmatprep.subr.mxu0 0.0
  %193 = vmatpush1.msra.mxu0 %v185
  %194 = vmatprep.subr.mxu0 0.0
  %195 = vmatpush1.msra.mxu0 %v186
  %196 = vmatprep.subr.mxu0 0.0
  %197 = vmatpush1.msra.mxu0 %v187
  %198 = vmatprep.subr.mxu0 0.0
  %199 = vmatpush1.msra.mxu0 %v188
  %200 = vmatprep.subr.mxu0 0.0
  %201 = vmatpush1.msra.mxu0 0.0
  %202 = vmatprep.subr.mxu0 0.0
  %203 = vmatpush1.msra.mxu0 0.0
  %204 = vmatprep.subr.mxu0 0.0
  %205 = vmatpush1.msra.mxu0 0.0
  %206 = vmatprep.subr.mxu0 0.0
  %207 = vmatpush1.msra.mxu0 0.0
  %208 = vmatprep.subr.mxu0 0.0
  %209 = vmatpush1.msra.mxu0 0.0
  %210 = vmatprep.subr.mxu0 0.0
  %211 = vmatpush1.msra.mxu0 0.0
  %212 = vmatprep.subr.mxu0 0.0
  %213 = vmatpush1.msra.mxu0 0.0
  %214 = vmatprep.subr.mxu0 0.0
  %215 = vmatpush1.msra.mxu0 0.0
  %216 = vmatprep.subr.mxu0 0.0
  %217 = vmatpush1.msra.mxu0 0.0
  %218 = vmatprep.subr.mxu0 0.0
  %219 = vmatpush1.msra.mxu0 0.0
  %220 = vmatprep.subr.mxu0 0.0
  %221 = vmatpush1.msra.mxu0 0.0
  %222 = vmatprep.subr.mxu0 0.0
  %223 = vmatpush1.msra.mxu0 0.0
  %224 = vmatprep.subr.mxu0 0.0
  %225 = vmatpush1.msra.mxu0 0.0
  %226 = vmatprep.subr.mxu0 0.0
  %227 = vmatpush1.msra.mxu0 0.0
  %228 = vmatprep.subr.mxu0 0.0
  %229 = vmatpush1.msra.mxu0 0.0
  %230 = vmatprep.subr.mxu0 0.0
  %231 = vmatpush1.msra.mxu0 0.0
  %232 = vmatprep.subr.mxu0 0.0
  %233 = vmatpush1.msra.mxu0 0.0
  %234 = vmatprep.subr.mxu0 0.0
  %235 = vmatpush1.msra.mxu0 0.0
  %236 = vmatprep.subr.mxu0 0.0
  %237 = vmatpush1.msra.mxu0 0.0
  %238 = vmatprep.subr.mxu0 0.0
  %239 = vmatpush1.msra.mxu0 0.0
  %240 = vmatprep.subr.mxu0 0.0
  %241 = vmatpush1.msra.mxu0 0.0
  %242 = vmatprep.subr.mxu0 0.0
  %243 = vmatpush1.msra.mxu0 0.0
  %244 = vmatprep.subr.mxu0 0.0
  %245 = vmatpush1.msra.mxu0 0.0
  %246 = vmatprep.subr.mxu0 0.0
  %247 = vmatpush1.msra.mxu0 0.0
  %248 = vmatprep.subr.mxu0 0.0
  %249 = vmatpush1.msra.mxu0 0.0
  %250 = vmatprep.subr.mxu0 0.0
  %251 = vmatpush1.msra.mxu0 0.0
  %252 = vmatprep.subr.mxu0 0.0
  %253 = vmatpush1.msra.mxu0 0.0
  %254 = vmatprep.subr.mxu0 0.0
  %255 = vmatpush1.msra.mxu0 0.0
  %256 = vmatprep.mubr.f32.mxu0 0.0
  %257 = vmatmul.mubr.f32.gmra.mrb[0].mxu0 %v190
  %v258 = vpop.f32.mrb[0].mxu0
  %v259 = vadd.f32 0.0, %v258
  %v260 = vpop.f32.mrb[0].mxu0
  %261 = vdwg.mxu0
  %v262 = vadd.f32 %v184, %v259
  %v263 = vxor.u32 %v262, 2147483648
  %v264 = vmul.f32 %v263, 1.442695
  %v265 = vpow.pop %v264
  %v266 = vadd.f32 %v265, 1.0
  %v267 = vrcp.pop %v266
  %v268 = vmul.f32 1.0, %v267
  %v269 = vtanh.pop %v262
  %271 = vrot.lane.b32.xlu0 %v69, 32
  %v272 = vpop.permute.xlu0 %271
  %v274 = vmul.f32 %v268, %v272
  %276 = vrot.lane.b32.xlu0 %v269, 64
  %v277 = vpop.permute.xlu0 %276
  %v279 = vmul.f32 %v268, %v277
  %281 = vrot.lane.b32.xlu0 %v279, 32
  %v282 = vpop.permute.xlu0 %281
  %v284 = vadd.f32 %v274, %v282
  %v285 = vtanh.pop %v284
  %287 = vrot.lane.b32.xlu0 %v285, 64
  %v288 = vpop.permute.xlu0 %287
  %v290 = vmul.f32 %v268, %v288
  %292 = vrot.lane.b32.xlu0 %v290, 32
  %v293 = vpop.permute.xlu0 %292
  %s295 = scalar_lea.vmem %s54, 56
  %296 = vst.msk [vmem:[%s295] sm:$0xff] %vm75, %v293
  %s297 = scalar_lea.vmem %s0, 8
  %v298 = vld [vmem:[%s297] sm:$0xff]
  %v299 = vld [vmem:[%s2] sm:$0xff]
  %v300 = vld [vmem:[%s2 + $0x8] sm:$0xff]
  %v301 = vld [vmem:[%s2 + $0x10] sm:$0xff]
  %v302 = vld [vmem:[%s2 + $0x18] sm:$0xff]
  %v303 = vsel %vm75, %v180, 0
  %305 = vmatprep.subr.mxu0 0.0
  %306 = vmatpush1.msra.mxu0 %v299
  %307 = vmatprep.subr.mxu0 0.0
  %308 = vmatpush1.msra.mxu0 %v300
  %309 = vmatprep.subr.mxu0 0.0
  %310 = vmatpush1.msra.mxu0 %v301
  %311 = vmatprep.subr.mxu0 0.0
  %312 = vmatpush1.msra.mxu0 %v302
  %313 = vmatprep.subr.mxu0 0.0
  %314 = vmatpush1.msra.mxu0 0.0
  %315 = vmatprep.subr.mxu0 0.0
  %316 = vmatpush1.msra.mxu0 0.0
  %317 = vmatprep.subr.mxu0 0.0
  %318 = vmatpush1.msra.mxu0 0.0
  %319 = vmatprep.subr.mxu0 0.0
  %320 = vmatpush1.msra.mxu0 0.0
  %321 = vmatprep.subr.mxu0 0.0
  %322 = vmatpush1.msra.mxu0 0.0
  %323 = vmatprep.subr.mxu0 0.0
  %324 = vmatpush1.msra.mxu0 0.0
  %325 = vmatprep.subr.mxu0 0.0
  %326 = vmatpush1.msra.mxu0 0.0
  %327 = vmatprep.subr.mxu0 0.0
  %328 = vmatpush1.msra.mxu0 0.0
  %329 = vmatprep.subr.mxu0 0.0
  %330 = vmatpush1.msra.mxu0 0.0
  %331 = vmatprep.subr.mxu0 0.0
  %332 = vmatpush1.msra.mxu0 0.0
  %333 = vmatprep.subr.mxu0 0.0
  %334 = vmatpush1.msra.mxu0 0.0
  %335 = vmatprep.subr.mxu0 0.0
  %336 = vmatpush1.msra.mxu0 0.0
  %337 = vmatprep.subr.mxu0 0.0
  %338 = vmatpush1.msra.mxu0 0.0
  %339 = vmatprep.subr.mxu0 0.0
  %340 = vmatpush1.msra.mxu0 0.0
  %341 = vmatprep.subr.mxu0 0.0
  %342 = vmatpush1.msra.mxu0 0.0
  %343 = vmatprep.subr.mxu0 0.0
  %344 = vmatpush1.msra.mxu0 0.0
  %345 = vmatprep.subr.mxu0 0.0
  %346 = vmatpush1.msra.mxu0 0.0
  %347 = vmatprep.subr.mxu0 0.0
  %348 = vmatpush1.msra.mxu0 0.0
  %349 = vmatprep.subr.mxu0 0.0
  %350 = vmatpush1.msra.mxu0 0.0
  %351 = vmatprep.subr.mxu0 0.0
  %352 = vmatpush1.msra.mxu0 0.0
  %353 = vmatprep.subr.mxu0 0.0
  %354 = vmatpush1.msra.mxu0 0.0
  %355 = vmatprep.subr.mxu0 0.0
  %356 = vmatpush1.msra.mxu0 0.0
  %357 = vmatprep.subr.mxu0 0.0
  %358 = vmatpush1.msra.mxu0 0.0
  %359 = vmatprep.subr.mxu0 0.0
  %360 = vmatpush1.msra.mxu0 0.0
  %361 = vmatprep.subr.mxu0 0.0
  %362 = vmatpush1.msra.mxu0 0.0
  %363 = vmatprep.subr.mxu0 0.0
  %364 = vmatpush1.msra.mxu0 0.0
  %365 = vmatprep.subr.mxu0 0.0
  %366 = vmatpush1.msra.mxu0 0.0
  %367 = vmatprep.subr.mxu0 0.0
  %368 = vmatpush1.msra.mxu0 0.0
  %369 = vmatprep.mubr.f32.mxu0 0.0
  %370 = vmatmul.mubr.f32.gmra.mrb[0].mxu0 %v303
  %v371 = vpop.f32.mrb[0].mxu0
  %v372 = vadd.f32 0.0, %v371
  %v373 = vpop.f32.mrb[0].mxu0
  %374 = vdwg.mxu0
  %v375 = vadd.f32 %v298, %v372
  %v376 = vxor.u32 %v375, 2147483648
  %v377 = vmul.f32 %v376, 1.442695
  %v378 = vpow.pop %v377
  %v379 = vadd.f32 %v378, 1.0
  %v380 = vrcp.pop %v379
  %v381 = vmul.f32 1.0, %v380
  %v382 = vtanh.pop %v375
  %v383 = vmul.f32 %v381, %v171
  %385 = vrot.lane.b32.xlu0 %v382, 64
  %v386 = vpop.permute.xlu0 %385
  %v388 = vmul.f32 %v381, %v386
  %390 = vrot.lane.b32.xlu0 %v388, 32
  %v391 = vpop.permute.xlu0 %390
  %v393 = vadd.f32 %v383, %v391
  %v394 = vtanh.pop %v393
  %396 = vrot.lane.b32.xlu0 %v394, 64
  %v397 = vpop.permute.xlu0 %396
  %v399 = vmul.f32 %v381, %v397
  %401 = vrot.lane.b32.xlu0 %v399, 32
  %v402 = vpop.permute.xlu0 %401
  %s404 = scalar_lea.vmem %s4, 8
  %405 = vst.msk [vmem:[%s404] sm:$0xff] %vm75, %v402
  %s406 = scalar_lea.vmem %s46, 48
  %v407 = vld [vmem:[%s406] sm:$0xff]
  %v408 = vld [vmem:[%s3] sm:$0xff]
  %v409 = vld [vmem:[%s3 + $0x8] sm:$0xff]
  %v410 = vld [vmem:[%s3 + $0x10] sm:$0xff]
  %v411 = vld [vmem:[%s3 + $0x18] sm:$0xff]
  %v412 = vsel %vm75, %v293, 0
  %414 = vmatprep.subr.mxu0 0.0
  %415 = vmatpush1.msra.mxu0 %v408
  %416 = vmatprep.subr.mxu0 0.0
  %417 = vmatpush1.msra.mxu0 %v409
  %418 = vmatprep.subr.mxu0 0.0
  %419 = vmatpush1.msra.mxu0 %v410
  %420 = vmatprep.subr.mxu0 0.0
  %421 = vmatpush1.msra.mxu0 %v411
  %422 = vmatprep.subr.mxu0 0.0
  %423 = vmatpush1.msra.mxu0 0.0
  %424 = vmatprep.subr.mxu0 0.0
  %425 = vmatpush1.msra.mxu0 0.0
  %426 = vmatprep.subr.mxu0 0.0
  %427 = vmatpush1.msra.mxu0 0.0
  %428 = vmatprep.subr.mxu0 0.0
  %429 = vmatpush1.msra.mxu0 0.0
  %430 = vmatprep.subr.mxu0 0.0
  %431 = vmatpush1.msra.mxu0 0.0
  %432 = vmatprep.subr.mxu0 0.0
  %433 = vmatpush1.msra.mxu0 0.0
  %434 = vmatprep.subr.mxu0 0.0
  %435 = vmatpush1.msra.mxu0 0.0
  %436 = vmatprep.subr.mxu0 0.0
  %437 = vmatpush1.msra.mxu0 0.0
  %438 = vmatprep.subr.mxu0 0.0
  %439 = vmatpush1.msra.mxu0 0.0
  %440 = vmatprep.subr.mxu0 0.0
  %441 = vmatpush1.msra.mxu0 0.0
  %442 = vmatprep.subr.mxu0 0.0
  %443 = vmatpush1.msra.mxu0 0.0
  %444 = vmatprep.subr.mxu0 0.0
  %445 = vmatpush1.msra.mxu0 0.0
  %446 = vmatprep.subr.mxu0 0.0
  %447 = vmatpush1.msra.mxu0 0.0
  %448 = vmatprep.subr.mxu0 0.0
  %449 = vmatpush1.msra.mxu0 0.0
  %450 = vmatprep.subr.mxu0 0.0
  %451 = vmatpush1.msra.mxu0 0.0
  %452 = vmatprep.subr.mxu0 0.0
  %453 = vmatpush1.msra.mxu0 0.0
  %454 = vmatprep.subr.mxu0 0.0
  %455 = vmatpush1.msra.mxu0 0.0
  %456 = vmatprep.subr.mxu0 0.0
  %457 = vmatpush1.msra.mxu0 0.0
  %458 = vmatprep.subr.mxu0 0.0
  %459 = vmatpush1.msra.mxu0 0.0
  %460 = vmatprep.subr.mxu0 0.0
  %461 = vmatpush1.msra.mxu0 0.0
  %462 = vmatprep.subr.mxu0 0.0
  %463 = vmatpush1.msra.mxu0 0.0
  %464 = vmatprep.subr.mxu0 0.0
  %465 = vmatpush1.msra.mxu0 0.0
  %466 = vmatprep.subr.mxu0 0.0
  %467 = vmatpush1.msra.mxu0 0.0
  %468 = vmatprep.subr.mxu0 0.0
  %469 = vmatpush1.msra.mxu0 0.0
  %470 = vmatprep.subr.mxu0 0.0
  %471 = vmatpush1.msra.mxu0 0.0
  %472 = vmatprep.subr.mxu0 0.0
  %473 = vmatpush1.msra.mxu0 0.0
  %474 = vmatprep.subr.mxu0 0.0
  %475 = vmatpush1.msra.mxu0 0.0
  %476 = vmatprep.subr.mxu0 0.0
  %477 = vmatpush1.msra.mxu0 0.0
  %478 = vmatprep.mubr.f32.mxu0 0.0
  %479 = vmatmul.mubr.f32.gmra.mrb[0].mxu0 %v412
  %v480 = vpop.f32.mrb[0].mxu0
  %v481 = vadd.f32 0.0, %v480
  %v482 = vpop.f32.mrb[0].mxu0
  %483 = vdwg.mxu0
  %v484 = vadd.f32 %v407, %v481
  %v485 = vxor.u32 %v484, 2147483648
  %v486 = vmul.f32 %v485, 1.442695
  %v487 = vpow.pop %v486
  %v488 = vadd.f32 %v487, 1.0
  %v489 = vrcp.pop %v488
  %v490 = vmul.f32 1.0, %v489
  %v491 = vtanh.pop %v484
  %v492 = vmul.f32 %v490, %v284
  %494 = vrot.lane.b32.xlu0 %v491, 64
  %v495 = vpop.permute.xlu0 %494
  %v497 = vmul.f32 %v490, %v495
  %499 = vrot.lane.b32.xlu0 %v497, 32
  %v500 = vpop.permute.xlu0 %499
  %v502 = vadd.f32 %v492, %v500
  %v503 = vtanh.pop %v502
  %505 = vrot.lane.b32.xlu0 %v503, 64
  %v506 = vpop.permute.xlu0 %505
  %v508 = vmul.f32 %v490, %v506
  %510 = vrot.lane.b32.xlu0 %v508, 32
  %v511 = vpop.permute.xlu0 %510
  %s513 = scalar_lea.vmem %s54, 48
  %514 = vst.msk [vmem:[%s513] sm:$0xff] %vm75, %v511
  %s515 = scalar_lea.vmem %s0, 16
  %v516 = vld [vmem:[%s515] sm:$0xff]
  %v517 = vld [vmem:[%s2] sm:$0xff]
  %v518 = vld [vmem:[%s2 + $0x8] sm:$0xff]
  %v519 = vld [vmem:[%s2 + $0x10] sm:$0xff]
  %v520 = vld [vmem:[%s2 + $0x18] sm:$0xff]
  %v521 = vsel %vm75, %v402, 0
  %523 = vmatprep.subr.mxu0 0.0
  %524 = vmatpush1.msra.mxu0 %v517
  %525 = vmatprep.subr.mxu0 0.0
  %526 = vmatpush1.msra.mxu0 %v518
  %527 = vmatprep.subr.mxu0 0.0
  %528 = vmatpush1.msra.mxu0 %v519
  %529 = vmatprep.subr.mxu0 0.0
  %530 = vmatpush1.msra.mxu0 %v520
  %531 = vmatprep.subr.mxu0 0.0
  %532 = vmatpush1.msra.mxu0 0.0
  %533 = vmatprep.subr.mxu0 0.0
  %534 = vmatpush1.msra.mxu0 0.0
  %535 = vmatprep.subr.mxu0 0.0
  %536 = vmatpush1.msra.mxu0 0.0
  %537 = vmatprep.subr.mxu0 0.0
  %538 = vmatpush1.msra.mxu0 0.0
  %539 = vmatprep.subr.mxu0 0.0
  %540 = vmatpush1.msra.mxu0 0.0
  %541 = vmatprep.subr.mxu0 0.0
  %542 = vmatpush1.msra.mxu0 0.0
  %543 = vmatprep.subr.mxu0 0.0
  %544 = vmatpush1.msra.mxu0 0.0
  %545 = vmatprep.subr.mxu0 0.0
  %546 = vmatpush1.msra.mxu0 0.0
  %547 = vmatprep.subr.mxu0 0.0
  %548 = vmatpush1.msra.mxu0 0.0
  %549 = vmatprep.subr.mxu0 0.0
  %550 = vmatpush1.msra.mxu0 0.0
  %551 = vmatprep.subr.mxu0 0.0
  %552 = vmatpush1.msra.mxu0 0.0
  %553 = vmatprep.subr.mxu0 0.0
  %554 = vmatpush1.msra.mxu0 0.0
  %555 = vmatprep.subr.mxu0 0.0
  %556 = vmatpush1.msra.mxu0 0.0
  %557 = vmatprep.subr.mxu0 0.0
  %558 = vmatpush1.msra.mxu0 0.0
  %559 = vmatprep.subr.mxu0 0.0
  %560 = vmatpush1.msra.mxu0 0.0
  %561 = vmatprep.subr.mxu0 0.0
  %562 = vmatpush1.msra.mxu0 0.0
  %563 = vmatprep.subr.mxu0 0.0
  %564 = vmatpush1.msra.mxu0 0.0
  %565 = vmatprep.subr.mxu0 0.0
  %566 = vmatpush1.msra.mxu0 0.0
  %567 = vmatprep.subr.mxu0 0.0
  %568 = vmatpush1.msra.mxu0 0.0
  %569 = vmatprep.subr.mxu0 0.0
  %570 = vmatpush1.msra.mxu0 0.0
  %571 = vmatprep.subr.mxu0 0.0
  %572 = vmatpush1.msra.mxu0 0.0
  %573 = vmatprep.subr.mxu0 0.0
  %574 = vmatpush1.msra.mxu0 0.0
  %575 = vmatprep.subr.mxu0 0.0
  %576 = vmatpush1.msra.mxu0 0.0
  %577 = vmatprep.subr.mxu0 0.0
  %578 = vmatpush1.msra.mxu0 0.0
  %579 = vmatprep.subr.mxu0 0.0
  %580 = vmatpush1.msra.mxu0 0.0
  %581 = vmatprep.subr.mxu0 0.0
  %582 = vmatpush1.msra.mxu0 0.0
  %583 = vmatprep.subr.mxu0 0.0
  %584 = vmatpush1.msra.mxu0 0.0
  %585 = vmatprep.subr.mxu0 0.0
  %586 = vmatpush1.msra.mxu0 0.0
  %587 = vmatprep.mubr.f32.mxu0 0.0
  %588 = vmatmul.mubr.f32.gmra.mrb[0].mxu0 %v521
  %v589 = vpop.f32.mrb[0].mxu0
  %v590 = vadd.f32 0.0, %v589
  %v591 = vpop.f32.mrb[0].mxu0
  %592 = vdwg.mxu0
  %v593 = vadd.f32 %v516, %v590
  %v594 = vxor.u32 %v593, 2147483648
  %v595 = vmul.f32 %v594, 1.442695
  %v596 = vpow.pop %v595
  %v597 = vadd.f32 %v596, 1.0
  %v598 = vrcp.pop %v597
  %v599 = vmul.f32 1.0, %v598
  %v600 = vtanh.pop %v593
  %v601 = vmul.f32 %v599, %v393
  %603 = vrot.lane.b32.xlu0 %v600, 64
  %v604 = vpop.permute.xlu0 %603
  %v606 = vmul.f32 %v599, %v604
  %608 = vrot.lane.b32.xlu0 %v606, 32
  %v609 = vpop.permute.xlu0 %608
  %v611 = vadd.f32 %v601, %v609
  %v612 = vtanh.pop %v611
  %614 = vrot.lane.b32.xlu0 %v612, 64
  %v615 = vpop.permute.xlu0 %614
  %v617 = vmul.f32 %v599, %v615
  %619 = vrot.lane.b32.xlu0 %v617, 32
  %v620 = vpop.permute.xlu0 %619
  %s622 = scalar_lea.vmem %s4, 16
  %623 = vst.msk [vmem:[%s622] sm:$0xff] %vm75, %v620
  %s624 = scalar_lea.vmem %s46, 40
  %v625 = vld [vmem:[%s624] sm:$0xff]
  %v626 = vld [vmem:[%s3] sm:$0xff]
  %v627 = vld [vmem:[%s3 + $0x8] sm:$0xff]
  %v628 = vld [vmem:[%s3 + $0x10] sm:$0xff]
  %v629 = vld [vmem:[%s3 + $0x18] sm:$0xff]
  %v630 = vsel %vm75, %v511, 0
  %632 = vmatprep.subr.mxu0 0.0
  %633 = vmatpush1.msra.mxu0 %v626
  %634 = vmatprep.subr.mxu0 0.0
  %635 = vmatpush1.msra.mxu0 %v627
  %636 = vmatprep.subr.mxu0 0.0
  %637 = vmatpush1.msra.mxu0 %v628
  %638 = vmatprep.subr.mxu0 0.0
  %639 = vmatpush1.msra.mxu0 %v629
  %640 = vmatprep.subr.mxu0 0.0
  %641 = vmatpush1.msra.mxu0 0.0
  %642 = vmatprep.subr.mxu0 0.0
  %643 = vmatpush1.msra.mxu0 0.0
  %644 = vmatprep.subr.mxu0 0.0
  %645 = vmatpush1.msra.mxu0 0.0
  %646 = vmatprep.subr.mxu0 0.0
  %647 = vmatpush1.msra.mxu0 0.0
  %648 = vmatprep.subr.mxu0 0.0
  %649 = vmatpush1.msra.mxu0 0.0
  %650 = vmatprep.subr.mxu0 0.0
  %651 = vmatpush1.msra.mxu0 0.0
  %652 = vmatprep.subr.mxu0 0.0
  %653 = vmatpush1.msra.mxu0 0.0
  %654 = vmatprep.subr.mxu0 0.0
  %655 = vmatpush1.msra.mxu0 0.0
  %656 = vmatprep.subr.mxu0 0.0
  %657 = vmatpush1.msra.mxu0 0.0
  %658 = vmatprep.subr.mxu0 0.0
  %659 = vmatpush1.msra.mxu0 0.0
  %660 = vmatprep.subr.mxu0 0.0
  %661 = vmatpush1.msra.mxu0 0.0
  %662 = vmatprep.subr.mxu0 0.0
  %663 = vmatpush1.msra.mxu0 0.0
  %664 = vmatprep.subr.mxu0 0.0
  %665 = vmatpush1.msra.mxu0 0.0
  %666 = vmatprep.subr.mxu0 0.0
  %667 = vmatpush1.msra.mxu0 0.0
  %668 = vmatprep.subr.mxu0 0.0
  %669 = vmatpush1.msra.mxu0 0.0
  %670 = vmatprep.subr.mxu0 0.0
  %671 = vmatpush1.msra.mxu0 0.0
  %672 = vmatprep.subr.mxu0 0.0
  %673 = vmatpush1.msra.mxu0 0.0
  %674 = vmatprep.subr.mxu0 0.0
  %675 = vmatpush1.msra.mxu0 0.0
  %676 = vmatprep.subr.mxu0 0.0
  %677 = vmatpush1.msra.mxu0 0.0
  %678 = vmatprep.subr.mxu0 0.0
  %679 = vmatpush1.msra.mxu0 0.0
  %680 = vmatprep.subr.mxu0 0.0
  %681 = vmatpush1.msra.mxu0 0.0
  %682 = vmatprep.subr.mxu0 0.0
  %683 = vmatpush1.msra.mxu0 0.0
  %684 = vmatprep.subr.mxu0 0.0
  %685 = vmatpush1.msra.mxu0 0.0
  %686 = vmatprep.subr.mxu0 0.0
  %687 = vmatpush1.msra.mxu0 0.0
  %688 = vmatprep.subr.mxu0 0.0
  %689 = vmatpush1.msra.mxu0 0.0
  %690 = vmatprep.subr.mxu0 0.0
  %691 = vmatpush1.msra.mxu0 0.0
  %692 = vmatprep.subr.mxu0 0.0
  %693 = vmatpush1.msra.mxu0 0.0
  %694 = vmatprep.subr.mxu0 0.0
  %695 = vmatpush1.msra.mxu0 0.0
  %696 = vmatprep.mubr.f32.mxu0 0.0
  %697 = vmatmul.mubr.f32.gmra.mrb[0].mxu0 %v630
  %v698 = vpop.f32.mrb[0].mxu0
  %v699 = vadd.f32 0.0, %v698
  %v700 = vpop.f32.mrb[0].mxu0
  %701 = vdwg.mxu0
  %v702 = vadd.f32 %v625, %v699
  %v703 = vxor.u32 %v702, 2147483648
  %v704 = vmul.f32 %v703, 1.442695
  %v705 = vpow.pop %v704
  %v706 = vadd.f32 %v705, 1.0
  %v707 = vrcp.pop %v706
  %v708 = vmul.f32 1.0, %v707
  %v709 = vtanh.pop %v702
  %v710 = vmul.f32 %v708, %v502
  %712 = vrot.lane.b32.xlu0 %v709, 64
  %v713 = vpop.permute.xlu0 %712
  %v715 = vmul.f32 %v708, %v713
  %717 = vrot.lane.b32.xlu0 %v715, 32
  %v718 = vpop.permute.xlu0 %717
  %v720 = vadd.f32 %v710, %v718
  %v721 = vtanh.pop %v720
  %723 = vrot.lane.b32.xlu0 %v721, 64
  %v724 = vpop.permute.xlu0 %723
  %v726 = vmul.f32 %v708, %v724
  %728 = vrot.lane.b32.xlu0 %v726, 32
  %v729 = vpop.permute.xlu0 %728
  %s731 = scalar_lea.vmem %s54, 40
  %732 = vst.msk [vmem:[%s731] sm:$0xff] %vm75, %v729
  %s733 = scalar_lea.vmem %s0, 24
  %v734 = vld [vmem:[%s733] sm:$0xff]
  %v735 = vld [vmem:[%s2] sm:$0xff]
  %v736 = vld [vmem:[%s2 + $0x8] sm:$0xff]
  %v737 = vld [vmem:[%s2 + $0x10] sm:$0xff]
  %v738 = vld [vmem:[%s2 + $0x18] sm:$0xff]
  %v739 = vsel %vm75, %v620, 0
  %741 = vmatprep.subr.mxu0 0.0
  %742 = vmatpush1.msra.mxu0 %v735
  %743 = vmatprep.subr.mxu0 0.0
  %744 = vmatpush1.msra.mxu0 %v736
  %745 = vmatprep.subr.mxu0 0.0
  %746 = vmatpush1.msra.mxu0 %v737
  %747 = vmatprep.subr.mxu0 0.0
  %748 = vmatpush1.msra.mxu0 %v738
  %749 = vmatprep.subr.mxu0 0.0
  %750 = vmatpush1.msra.mxu0 0.0
  %751 = vmatprep.subr.mxu0 0.0
  %752 = vmatpush1.msra.mxu0 0.0
  %753 = vmatprep.subr.mxu0 0.0
  %754 = vmatpush1.msra.mxu0 0.0
  %755 = vmatprep.subr.mxu0 0.0
  %756 = vmatpush1.msra.mxu0 0.0
  %757 = vmatprep.subr.mxu0 0.0
  %758 = vmatpush1.msra.mxu0 0.0
  %759 = vmatprep.subr.mxu0 0.0
  %760 = vmatpush1.msra.mxu0 0.0
  %761 = vmatprep.subr.mxu0 0.0
  %762 = vmatpush1.msra.mxu0 0.0
  %763 = vmatprep.subr.mxu0 0.0
  %764 = vmatpush1.msra.mxu0 0.0
  %765 = vmatprep.subr.mxu0 0.0
  %766 = vmatpush1.msra.mxu0 0.0
  %767 = vmatprep.subr.mxu0 0.0
  %768 = vmatpush1.msra.mxu0 0.0
  %769 = vmatprep.subr.mxu0 0.0
  %770 = vmatpush1.msra.mxu0 0.0
  %771 = vmatprep.subr.mxu0 0.0
  %772 = vmatpush1.msra.mxu0 0.0
  %773 = vmatprep.subr.mxu0 0.0
  %774 = vmatpush1.msra.mxu0 0.0
  %775 = vmatprep.subr.mxu0 0.0
  %776 = vmatpush1.msra.mxu0 0.0
  %777 = vmatprep.subr.mxu0 0.0
  %778 = vmatpush1.msra.mxu0 0.0
  %779 = vmatprep.subr.mxu0 0.0
  %780 = vmatpush1.msra.mxu0 0.0
  %781 = vmatprep.subr.mxu0 0.0
  %782 = vmatpush1.msra.mxu0 0.0
  %783 = vmatprep.subr.mxu0 0.0
  %784 = vmatpush1.msra.mxu0 0.0
  %785 = vmatprep.subr.mxu0 0.0
  %786 = vmatpush1.msra.mxu0 0.0
  %787 = vmatprep.subr.mxu0 0.0
  %788 = vmatpush1.msra.mxu0 0.0
  %789 = vmatprep.subr.mxu0 0.0
  %790 = vmatpush1.msra.mxu0 0.0
  %791 = vmatprep.subr.mxu0 0.0
  %792 = vmatpush1.msra.mxu0 0.0
  %793 = vmatprep.subr.mxu0 0.0
  %794 = vmatpush1.msra.mxu0 0.0
  %795 = vmatprep.subr.mxu0 0.0
  %796 = vmatpush1.msra.mxu0 0.0
  %797 = vmatprep.subr.mxu0 0.0
  %798 = vmatpush1.msra.mxu0 0.0
  %799 = vmatprep.subr.mxu0 0.0
  %800 = vmatpush1.msra.mxu0 0.0
  %801 = vmatprep.subr.mxu0 0.0
  %802 = vmatpush1.msra.mxu0 0.0
  %803 = vmatprep.subr.mxu0 0.0
  %804 = vmatpush1.msra.mxu0 0.0
  %805 = vmatprep.mubr.f32.mxu0 0.0
  %806 = vmatmul.mubr.f32.gmra.mrb[0].mxu0 %v739
  %v807 = vpop.f32.mrb[0].mxu0
  %v808 = vadd.f32 0.0, %v807
  %v809 = vpop.f32.mrb[0].mxu0
  %810 = vdwg.mxu0
  %v811 = vadd.f32 %v734, %v808
  %v812 = vxor.u32 %v811, 2147483648
  %v813 = vmul.f32 %v812, 1.442695
  %v814 = vpow.pop %v813
  %v815 = vadd.f32 %v814, 1.0
  %v816 = vrcp.pop %v815
  %v817 = vmul.f32 1.0, %v816
  %v818 = vtanh.pop %v811
  %v819 = vmul.f32 %v817, %v611
  %821 = vrot.lane.b32.xlu0 %v818, 64
  %v822 = vpop.permute.xlu0 %821
  %v824 = vmul.f32 %v817, %v822
  %826 = vrot.lane.b32.xlu0 %v824, 32
  %v827 = vpop.permute.xlu0 %826
  %v829 = vadd.f32 %v819, %v827
  %v830 = vtanh.pop %v829
  %832 = vrot.lane.b32.xlu0 %v830, 64
  %v833 = vpop.permute.xlu0 %832
  %v835 = vmul.f32 %v817, %v833
  %837 = vrot.lane.b32.xlu0 %v835, 32
  %v838 = vpop.permute.xlu0 %837
  %s840 = scalar_lea.vmem %s4, 24
  %841 = vst.msk [vmem:[%s840] sm:$0xff] %vm75, %v838
  %s842 = scalar_lea.vmem %s46, 32
  %v843 = vld [vmem:[%s842] sm:$0xff]
  %v844 = vld [vmem:[%s3] sm:$0xff]
  %v845 = vld [vmem:[%s3 + $0x8] sm:$0xff]
  %v846 = vld [vmem:[%s3 + $0x10] sm:$0xff]
  %v847 = vld [vmem:[%s3 + $0x18] sm:$0xff]
  %v848 = vsel %vm75, %v729, 0
  %850 = vmatprep.subr.mxu0 0.0
  %851 = vmatpush1.msra.mxu0 %v844
  %852 = vmatprep.subr.mxu0 0.0
  %853 = vmatpush1.msra.mxu0 %v845
  %854 = vmatprep.subr.mxu0 0.0
  %855 = vmatpush1.msra.mxu0 %v846
  %856 = vmatprep.subr.mxu0 0.0
  %857 = vmatpush1.msra.mxu0 %v847
  %858 = vmatprep.subr.mxu0 0.0
  %859 = vmatpush1.msra.mxu0 0.0
  %860 = vmatprep.subr.mxu0 0.0
  %861 = vmatpush1.msra.mxu0 0.0
  %862 = vmatprep.subr.mxu0 0.0
  %863 = vmatpush1.msra.mxu0 0.0
  %864 = vmatprep.subr.mxu0 0.0
  %865 = vmatpush1.msra.mxu0 0.0
  %866 = vmatprep.subr.mxu0 0.0
  %867 = vmatpush1.msra.mxu0 0.0
  %868 = vmatprep.subr.mxu0 0.0
  %869 = vmatpush1.msra.mxu0 0.0
  %870 = vmatprep.subr.mxu0 0.0
  %871 = vmatpush1.msra.mxu0 0.0
  %872 = vmatprep.subr.mxu0 0.0
  %873 = vmatpush1.msra.mxu0 0.0
  %874 = vmatprep.subr.mxu0 0.0
  %875 = vmatpush1.msra.mxu0 0.0
  %876 = vmatprep.subr.mxu0 0.0
  %877 = vmatpush1.msra.mxu0 0.0
  %878 = vmatprep.subr.mxu0 0.0
  %879 = vmatpush1.msra.mxu0 0.0
  %880 = vmatprep.subr.mxu0 0.0
  %881 = vmatpush1.msra.mxu0 0.0
  %882 = vmatprep.subr.mxu0 0.0
  %883 = vmatpush1.msra.mxu0 0.0
  %884 = vmatprep.subr.mxu0 0.0
  %885 = vmatpush1.msra.mxu0 0.0
  %886 = vmatprep.subr.mxu0 0.0
  %887 = vmatpush1.msra.mxu0 0.0
  %888 = vmatprep.subr.mxu0 0.0
  %889 = vmatpush1.msra.mxu0 0.0
  %890 = vmatprep.subr.mxu0 0.0
  %891 = vmatpush1.msra.mxu0 0.0
  %892 = vmatprep.subr.mxu0 0.0
  %893 = vmatpush1.msra.mxu0 0.0
  %894 = vmatprep.subr.mxu0 0.0
  %895 = vmatpush1.msra.mxu0 0.0
  %896 = vmatprep.subr.mxu0 0.0
  %897 = vmatpush1.msra.mxu0 0.0
  %898 = vmatprep.subr.mxu0 0.0
  %899 = vmatpush1.msra.mxu0 0.0
  %900 = vmatprep.subr.mxu0 0.0
  %901 = vmatpush1.msra.mxu0 0.0
  %902 = vmatprep.subr.mxu0 0.0
  %903 = vmatpush1.msra.mxu0 0.0
  %904 = vmatprep.subr.mxu0 0.0
  %905 = vmatpush1.msra.mxu0 0.0
  %906 = vmatprep.subr.mxu0 0.0
  %907 = vmatpush1.msra.mxu0 0.0
  %908 = vmatprep.subr.mxu0 0.0
  %909 = vmatpush1.msra.mxu0 0.0
  %910 = vmatprep.subr.mxu0 0.0
  %911 = vmatpush1.msra.mxu0 0.0
  %912 = vmatprep.subr.mxu0 0.0
  %913 = vmatpush1.msra.mxu0 0.0
  %914 = vmatprep.mubr.f32.mxu0 0.0
  %915 = vmatmul.mubr.f32.gmra.mrb[0].mxu0 %v848
  %v916 = vpop.f32.mrb[0].mxu0
  %v917 = vadd.f32 0.0, %v916
  %v918 = vpop.f32.mrb[0].mxu0
  %919 = vdwg.mxu0
  %v920 = vadd.f32 %v843, %v917
  %v921 = vxor.u32 %v920, 2147483648
  %v922 = vmul.f32 %v921, 1.442695
  %v923 = vpow.pop %v922
  %v924 = vadd.f32 %v923, 1.0
  %v925 = vrcp.pop %v924
  %v926 = vmul.f32 1.0, %v925
  %v927 = vtanh.pop %v920
  %v928 = vmul.f32 %v926, %v720
  %930 = vrot.lane.b32.xlu0 %v927, 64
  %v931 = vpop.permute.xlu0 %930
  %v933 = vmul.f32 %v926, %v931
  %935 = vrot.lane.b32.xlu0 %v933, 32
  %v936 = vpop.permute.xlu0 %935
  %v938 = vadd.f32 %v928, %v936
  %v939 = vtanh.pop %v938
  %941 = vrot.lane.b32.xlu0 %v939, 64
  %v942 = vpop.permute.xlu0 %941
  %v944 = vmul.f32 %v926, %v942
  %946 = vrot.lane.b32.xlu0 %v944, 32
  %v947 = vpop.permute.xlu0 %946
  %s949 = scalar_lea.vmem %s54, 32
  %950 = vst.msk [vmem:[%s949] sm:$0xff] %vm75, %v947
  %s951 = scalar_lea.vmem %s0, 32
  %v952 = vld [vmem:[%s951] sm:$0xff]
  %v953 = vld [vmem:[%s2] sm:$0xff]
  %v954 = vld [vmem:[%s2 + $0x8] sm:$0xff]
  %v955 = vld [vmem:[%s2 + $0x10] sm:$0xff]
  %v956 = vld [vmem:[%s2 + $0x18] sm:$0xff]
  %v957 = vsel %vm75, %v838, 0
  %959 = vmatprep.subr.mxu0 0.0
  %960 = vmatpush1.msra.mxu0 %v953
  %961 = vmatprep.subr.mxu0 0.0
  %962 = vmatpush1.msra.mxu0 %v954
  %963 = vmatprep.subr.mxu0 0.0
  %964 = vmatpush1.msra.mxu0 %v955
  %965 = vmatprep.subr.mxu0 0.0
  %966 = vmatpush1.msra.mxu0 %v956
  %967 = vmatprep.subr.mxu0 0.0
  %968 = vmatpush1.msra.mxu0 0.0
  %969 = vmatprep.subr.mxu0 0.0
  %970 = vmatpush1.msra.mxu0 0.0
  %971 = vmatprep.subr.mxu0 0.0
  %972 = vmatpush1.msra.mxu0 0.0
  %973 = vmatprep.subr.mxu0 0.0
  %974 = vmatpush1.msra.mxu0 0.0
  %975 = vmatprep.subr.mxu0 0.0
  %976 = vmatpush1.msra.mxu0 0.0
  %977 = vmatprep.subr.mxu0 0.0
  %978 = vmatpush1.msra.mxu0 0.0
  %979 = vmatprep.subr.mxu0 0.0
  %980 = vmatpush1.msra.mxu0 0.0
  %981 = vmatprep.subr.mxu0 0.0
  %982 = vmatpush1.msra.mxu0 0.0
  %983 = vmatprep.subr.mxu0 0.0
  %984 = vmatpush1.msra.mxu0 0.0
  %985 = vmatprep.subr.mxu0 0.0
  %986 = vmatpush1.msra.mxu0 0.0
  %987 = vmatprep.subr.mxu0 0.0
  %988 = vmatpush1.msra.mxu0 0.0
  %989 = vmatprep.subr.mxu0 0.0
  %990 = vmatpush1.msra.mxu0 0.0
  %991 = vmatprep.subr.mxu0 0.0
  %992 = vmatpush1.msra.mxu0 0.0
  %993 = vmatprep.subr.mxu0 0.0
  %994 = vmatpush1.msra.mxu0 0.0
  %995 = vmatprep.subr.mxu0 0.0
  %996 = vmatpush1.msra.mxu0 0.0
  %997 = vmatprep.subr.mxu0 0.0
  %998 = vmatpush1.msra.mxu0 0.0
  %999 = vmatprep.subr.mxu0 0.0
  %1000 = vmatpush1.msra.mxu0 0.0
  %1001 = vmatprep.subr.mxu0 0.0
  %1002 = vmatpush1.msra.mxu0 0.0
  %1003 = vmatprep.subr.mxu0 0.0
  %1004 = vmatpush1.msra.mxu0 0.0
  %1005 = vmatprep.subr.mxu0 0.0
  %1006 = vmatpush1.msra.mxu0 0.0
  %1007 = vmatprep.subr.mxu0 0.0
  %1008 = vmatpush1.msra.mxu0 0.0
  %1009 = vmatprep.subr.mxu0 0.0
  %1010 = vmatpush1.msra.mxu0 0.0
  %1011 = vmatprep.subr.mxu0 0.0
  %1012 = vmatpush1.msra.mxu0 0.0
  %1013 = vmatprep.subr.mxu0 0.0
  %1014 = vmatpush1.msra.mxu0 0.0
  %1015 = vmatprep.subr.mxu0 0.0
  %1016 = vmatpush1.msra.mxu0 0.0
  %1017 = vmatprep.subr.mxu0 0.0
  %1018 = vmatpush1.msra.mxu0 0.0
  %1019 = vmatprep.subr.mxu0 0.0
  %1020 = vmatpush1.msra.mxu0 0.0
  %1021 = vmatprep.subr.mxu0 0.0
  %1022 = vmatpush1.msra.mxu0 0.0
  %1023 = vmatprep.mubr.f32.mxu0 0.0
  %1024 = vmatmul.mubr.f32.gmra.mrb[0].mxu0 %v957
  %v1025 = vpop.f32.mrb[0].mxu0
  %v1026 = vadd.f32 0.0, %v1025
  %v1027 = vpop.f32.mrb[0].mxu0
  %1028 = vdwg.mxu0
  %v1029 = vadd.f32 %v952, %v1026
  %v1030 = vxor.u32 %v1029, 2147483648
  %v1031 = vmul.f32 %v1030, 1.442695
  %v1032 = vpow.pop %v1031
  %v1033 = vadd.f32 %v1032, 1.0
  %v1034 = vrcp.pop %v1033
  %v1035 = vmul.f32 1.0, %v1034
  %v1036 = vtanh.pop %v1029
  %v1037 = vmul.f32 %v1035, %v829
  %1039 = vrot.lane.b32.xlu0 %v1036, 64
  %v1040 = vpop.permute.xlu0 %1039
  %v1042 = vmul.f32 %v1035, %v1040
  %1044 = vrot.lane.b32.xlu0 %v1042, 32
  %v1045 = vpop.permute.xlu0 %1044
  %v1047 = vadd.f32 %v1037, %v1045
  %v1048 = vtanh.pop %v1047
  %1050 = vrot.lane.b32.xlu0 %v1048, 64
  %v1051 = vpop.permute.xlu0 %1050
  %v1053 = vmul.f32 %v1035, %v1051
  %1055 = vrot.lane.b32.xlu0 %v1053, 32
  %v1056 = vpop.permute.xlu0 %1055
  %s1058 = scalar_lea.vmem %s4, 32
  %1059 = vst.msk [vmem:[%s1058] sm:$0xff] %vm75, %v1056
  %s1060 = scalar_lea.vmem %s46, 24
  %v1061 = vld [vmem:[%s1060] sm:$0xff]
  %v1062 = vld [vmem:[%s3] sm:$0xff]
  %v1063 = vld [vmem:[%s3 + $0x8] sm:$0xff]
  %v1064 = vld [vmem:[%s3 + $0x10] sm:$0xff]
  %v1065 = vld [vmem:[%s3 + $0x18] sm:$0xff]
  %v1066 = vsel %vm75, %v947, 0
  %1068 = vmatprep.subr.mxu0 0.0
  %1069 = vmatpush1.msra.mxu0 %v1062
  %1070 = vmatprep.subr.mxu0 0.0
  %1071 = vmatpush1.msra.mxu0 %v1063
  %1072 = vmatprep.subr.mxu0 0.0
  %1073 = vmatpush1.msra.mxu0 %v1064
  %1074 = vmatprep.subr.mxu0 0.0
  %1075 = vmatpush1.msra.mxu0 %v1065
  %1076 = vmatprep.subr.mxu0 0.0
  %1077 = vmatpush1.msra.mxu0 0.0
  %1078 = vmatprep.subr.mxu0 0.0
  %1079 = vmatpush1.msra.mxu0 0.0
  %1080 = vmatprep.subr.mxu0 0.0
  %1081 = vmatpush1.msra.mxu0 0.0
  %1082 = vmatprep.subr.mxu0 0.0
  %1083 = vmatpush1.msra.mxu0 0.0
  %1084 = vmatprep.subr.mxu0 0.0
  %1085 = vmatpush1.msra.mxu0 0.0
  %1086 = vmatprep.subr.mxu0 0.0
  %1087 = vmatpush1.msra.mxu0 0.0
  %1088 = vmatprep.subr.mxu0 0.0
  %1089 = vmatpush1.msra.mxu0 0.0
  %1090 = vmatprep.subr.mxu0 0.0
  %1091 = vmatpush1.msra.mxu0 0.0
  %1092 = vmatprep.subr.mxu0 0.0
  %1093 = vmatpush1.msra.mxu0 0.0
  %1094 = vmatprep.subr.mxu0 0.0
  %1095 = vmatpush1.msra.mxu0 0.0
  %1096 = vmatprep.subr.mxu0 0.0
  %1097 = vmatpush1.msra.mxu0 0.0
  %1098 = vmatprep.subr.mxu0 0.0
  %1099 = vmatpush1.msra.mxu0 0.0
  %1100 = vmatprep.subr.mxu0 0.0
  %1101 = vmatpush1.msra.mxu0 0.0
  %1102 = vmatprep.subr.mxu0 0.0
  %1103 = vmatpush1.msra.mxu0 0.0
  %1104 = vmatprep.subr.mxu0 0.0
  %1105 = vmatpush1.msra.mxu0 0.0
  %1106 = vmatprep.subr.mxu0 0.0
  %1107 = vmatpush1.msra.mxu0 0.0
  %1108 = vmatprep.subr.mxu0 0.0
  %1109 = vmatpush1.msra.mxu0 0.0
  %1110 = vmatprep.subr.mxu0 0.0
  %1111 = vmatpush1.msra.mxu0 0.0
  %1112 = vmatprep.subr.mxu0 0.0
  %1113 = vmatpush1.msra.mxu0 0.0
  %1114 = vmatprep.subr.mxu0 0.0
  %1115 = vmatpush1.msra.mxu0 0.0
  %1116 = vmatprep.subr.mxu0 0.0
  %1117 = vmatpush1.msra.mxu0 0.0
  %1118 = vmatprep.subr.mxu0 0.0
  %1119 = vmatpush1.msra.mxu0 0.0
  %1120 = vmatprep.subr.mxu0 0.0
  %1121 = vmatpush1.msra.mxu0 0.0
  %1122 = vmatprep.subr.mxu0 0.0
  %1123 = vmatpush1.msra.mxu0 0.0
  %1124 = vmatprep.subr.mxu0 0.0
  %1125 = vmatpush1.msra.mxu0 0.0
  %1126 = vmatprep.subr.mxu0 0.0
  %1127 = vmatpush1.msra.mxu0 0.0
  %1128 = vmatprep.subr.mxu0 0.0
  %1129 = vmatpush1.msra.mxu0 0.0
  %1130 = vmatprep.subr.mxu0 0.0
  %1131 = vmatpush1.msra.mxu0 0.0
  %1132 = vmatprep.mubr.f32.mxu0 0.0
  %1133 = vmatmul.mubr.f32.gmra.mrb[0].mxu0 %v1066
  %v1134 = vpop.f32.mrb[0].mxu0
  %v1135 = vadd.f32 0.0, %v1134
  %v1136 = vpop.f32.mrb[0].mxu0
  %1137 = vdwg.mxu0
  %v1138 = vadd.f32 %v1061, %v1135
  %v1139 = vxor.u32 %v1138, 2147483648
  %v1140 = vmul.f32 %v1139, 1.442695
  %v1141 = vpow.pop %v1140
  %v1142 = vadd.f32 %v1141, 1.0
  %v1143 = vrcp.pop %v1142
  %v1144 = vmul.f32 1.0, %v1143
  %v1145 = vtanh.pop %v1138
  %v1146 = vmul.f32 %v1144, %v938
  %1148 = vrot.lane.b32.xlu0 %v1145, 64
  %v1149 = vpop.permute.xlu0 %1148
  %v1151 = vmul.f32 %v1144, %v1149
  %1153 = vrot.lane.b32.xlu0 %v1151, 32
  %v1154 = vpop.permute.xlu0 %1153
  %v1156 = vadd.f32 %v1146, %v1154
  %v1157 = vtanh.pop %v1156
  %1159 = vrot.lane.b32.xlu0 %v1157, 64
  %v1160 = vpop.permute.xlu0 %1159
  %v1162 = vmul.f32 %v1144, %v1160
  %1164 = vrot.lane.b32.xlu0 %v1162, 32
  %v1165 = vpop.permute.xlu0 %1164
  %s1167 = scalar_lea.vmem %s54, 24
  %1168 = vst.msk [vmem:[%s1167] sm:$0xff] %vm75, %v1165
  %s1169 = scalar_lea.vmem %s0, 40
  %v1170 = vld [vmem:[%s1169] sm:$0xff]
  %v1171 = vld [vmem:[%s2] sm:$0xff]
  %v1172 = vld [vmem:[%s2 + $0x8] sm:$0xff]
  %v1173 = vld [vmem:[%s2 + $0x10] sm:$0xff]
  %v1174 = vld [vmem:[%s2 + $0x18] sm:$0xff]
  %v1175 = vsel %vm75, %v1056, 0
  %1177 = vmatprep.subr.mxu0 0.0
  %1178 = vmatpush1.msra.mxu0 %v1171
  %1179 = vmatprep.subr.mxu0 0.0
  %1180 = vmatpush1.msra.mxu0 %v1172
  %1181 = vmatprep.subr.mxu0 0.0
  %1182 = vmatpush1.msra.mxu0 %v1173
  %1183 = vmatprep.subr.mxu0 0.0
  %1184 = vmatpush1.msra.mxu0 %v1174
  %1185 = vmatprep.subr.mxu0 0.0
  %1186 = vmatpush1.msra.mxu0 0.0
  %1187 = vmatprep.subr.mxu0 0.0
  %1188 = vmatpush1.msra.mxu0 0.0
  %1189 = vmatprep.subr.mxu0 0.0
  %1190 = vmatpush1.msra.mxu0 0.0
  %1191 = vmatprep.subr.mxu0 0.0
  %1192 = vmatpush1.msra.mxu0 0.0
  %1193 = vmatprep.subr.mxu0 0.0
  %1194 = vmatpush1.msra.mxu0 0.0
  %1195 = vmatprep.subr.mxu0 0.0
  %1196 = vmatpush1.msra.mxu0 0.0
  %1197 = vmatprep.subr.mxu0 0.0
  %1198 = vmatpush1.msra.mxu0 0.0
  %1199 = vmatprep.subr.mxu0 0.0
  %1200 = vmatpush1.msra.mxu0 0.0
  %1201 = vmatprep.subr.mxu0 0.0
  %1202 = vmatpush1.msra.mxu0 0.0
  %1203 = vmatprep.subr.mxu0 0.0
  %1204 = vmatpush1.msra.mxu0 0.0
  %1205 = vmatprep.subr.mxu0 0.0
  %1206 = vmatpush1.msra.mxu0 0.0
  %1207 = vmatprep.subr.mxu0 0.0
  %1208 = vmatpush1.msra.mxu0 0.0
  %1209 = vmatprep.subr.mxu0 0.0
  %1210 = vmatpush1.msra.mxu0 0.0
  %1211 = vmatprep.subr.mxu0 0.0
  %1212 = vmatpush1.msra.mxu0 0.0
  %1213 = vmatprep.subr.mxu0 0.0
  %1214 = vmatpush1.msra.mxu0 0.0
  %1215 = vmatprep.subr.mxu0 0.0
  %1216 = vmatpush1.msra.mxu0 0.0
  %1217 = vmatprep.subr.mxu0 0.0
  %1218 = vmatpush1.msra.mxu0 0.0
  %1219 = vmatprep.subr.mxu0 0.0
  %1220 = vmatpush1.msra.mxu0 0.0
  %1221 = vmatprep.subr.mxu0 0.0
  %1222 = vmatpush1.msra.mxu0 0.0
  %1223 = vmatprep.subr.mxu0 0.0
  %1224 = vmatpush1.msra.mxu0 0.0
  %1225 = vmatprep.subr.mxu0 0.0
  %1226 = vmatpush1.msra.mxu0 0.0
  %1227 = vmatprep.subr.mxu0 0.0
  %1228 = vmatpush1.msra.mxu0 0.0
  %1229 = vmatprep.subr.mxu0 0.0
  %1230 = vmatpush1.msra.mxu0 0.0
  %1231 = vmatprep.subr.mxu0 0.0
  %1232 = vmatpush1.msra.mxu0 0.0
  %1233 = vmatprep.subr.mxu0 0.0
  %1234 = vmatpush1.msra.mxu0 0.0
  %1235 = vmatprep.subr.mxu0 0.0
  %1236 = vmatpush1.msra.mxu0 0.0
  %1237 = vmatprep.subr.mxu0 0.0
  %1238 = vmatpush1.msra.mxu0 0.0
  %1239 = vmatprep.subr.mxu0 0.0
  %1240 = vmatpush1.msra.mxu0 0.0
  %1241 = vmatprep.mubr.f32.mxu0 0.0
  %1242 = vmatmul.mubr.f32.gmra.mrb[0].mxu0 %v1175
  %v1243 = vpop.f32.mrb[0].mxu0
  %v1244 = vadd.f32 0.0, %v1243
  %v1245 = vpop.f32.mrb[0].mxu0
  %1246 = vdwg.mxu0
  %v1247 = vadd.f32 %v1170, %v1244
  %v1248 = vxor.u32 %v1247, 2147483648
  %v1249 = vmul.f32 %v1248, 1.442695
  %v1250 = vpow.pop %v1249
  %v1251 = vadd.f32 %v1250, 1.0
  %v1252 = vrcp.pop %v1251
  %v1253 = vmul.f32 1.0, %v1252
  %v1254 = vtanh.pop %v1247
  %v1255 = vmul.f32 %v1253, %v1047
  %1257 = vrot.lane.b32.xlu0 %v1254, 64
  %v1258 = vpop.permute.xlu0 %1257
  %v1260 = vmul.f32 %v1253, %v1258
  %1262 = vrot.lane.b32.xlu0 %v1260, 32
  %v1263 = vpop.permute.xlu0 %1262
  %v1265 = vadd.f32 %v1255, %v1263
  %v1266 = vtanh.pop %v1265
  %1268 = vrot.lane.b32.xlu0 %v1266, 64
  %v1269 = vpop.permute.xlu0 %1268
  %v1271 = vmul.f32 %v1253, %v1269
  %1273 = vrot.lane.b32.xlu0 %v1271, 32
  %v1274 = vpop.permute.xlu0 %1273
  %s1276 = scalar_lea.vmem %s4, 40
  %1277 = vst.msk [vmem:[%s1276] sm:$0xff] %vm75, %v1274
  %s1278 = scalar_lea.vmem %s46, 16
  %v1279 = vld [vmem:[%s1278] sm:$0xff]
  %v1280 = vld [vmem:[%s3] sm:$0xff]
  %v1281 = vld [vmem:[%s3 + $0x8] sm:$0xff]
  %v1282 = vld [vmem:[%s3 + $0x10] sm:$0xff]
  %v1283 = vld [vmem:[%s3 + $0x18] sm:$0xff]
  %v1284 = vsel %vm75, %v1165, 0
  %1286 = vmatprep.subr.mxu0 0.0
  %1287 = vmatpush1.msra.mxu0 %v1280
  %1288 = vmatprep.subr.mxu0 0.0
  %1289 = vmatpush1.msra.mxu0 %v1281
  %1290 = vmatprep.subr.mxu0 0.0
  %1291 = vmatpush1.msra.mxu0 %v1282
  %1292 = vmatprep.subr.mxu0 0.0
  %1293 = vmatpush1.msra.mxu0 %v1283
  %1294 = vmatprep.subr.mxu0 0.0
  %1295 = vmatpush1.msra.mxu0 0.0
  %1296 = vmatprep.subr.mxu0 0.0
  %1297 = vmatpush1.msra.mxu0 0.0
  %1298 = vmatprep.subr.mxu0 0.0
  %1299 = vmatpush1.msra.mxu0 0.0
  %1300 = vmatprep.subr.mxu0 0.0
  %1301 = vmatpush1.msra.mxu0 0.0
  %1302 = vmatprep.subr.mxu0 0.0
  %1303 = vmatpush1.msra.mxu0 0.0
  %1304 = vmatprep.subr.mxu0 0.0
  %1305 = vmatpush1.msra.mxu0 0.0
  %1306 = vmatprep.subr.mxu0 0.0
  %1307 = vmatpush1.msra.mxu0 0.0
  %1308 = vmatprep.subr.mxu0 0.0
  %1309 = vmatpush1.msra.mxu0 0.0
  %1310 = vmatprep.subr.mxu0 0.0
  %1311 = vmatpush1.msra.mxu0 0.0
  %1312 = vmatprep.subr.mxu0 0.0
  %1313 = vmatpush1.msra.mxu0 0.0
  %1314 = vmatprep.subr.mxu0 0.0
  %1315 = vmatpush1.msra.mxu0 0.0
  %1316 = vmatprep.subr.mxu0 0.0
  %1317 = vmatpush1.msra.mxu0 0.0
  %1318 = vmatprep.subr.mxu0 0.0
  %1319 = vmatpush1.msra.mxu0 0.0
  %1320 = vmatprep.subr.mxu0 0.0
  %1321 = vmatpush1.msra.mxu0 0.0
  %1322 = vmatprep.subr.mxu0 0.0
  %1323 = vmatpush1.msra.mxu0 0.0
  %1324 = vmatprep.subr.mxu0 0.0
  %1325 = vmatpush1.msra.mxu0 0.0
  %1326 = vmatprep.subr.mxu0 0.0
  %1327 = vmatpush1.msra.mxu0 0.0
  %1328 = vmatprep.subr.mxu0 0.0
  %1329 = vmatpush1.msra.mxu0 0.0
  %1330 = vmatprep.subr.mxu0 0.0
  %1331 = vmatpush1.msra.mxu0 0.0
  %1332 = vmatprep.subr.mxu0 0.0
  %1333 = vmatpush1.msra.mxu0 0.0
  %1334 = vmatprep.subr.mxu0 0.0
  %1335 = vmatpush1.msra.mxu0 0.0
  %1336 = vmatprep.subr.mxu0 0.0
  %1337 = vmatpush1.msra.mxu0 0.0
  %1338 = vmatprep.subr.mxu0 0.0
  %1339 = vmatpush1.msra.mxu0 0.0
  %1340 = vmatprep.subr.mxu0 0.0
  %1341 = vmatpush1.msra.mxu0 0.0
  %1342 = vmatprep.subr.mxu0 0.0
  %1343 = vmatpush1.msra.mxu0 0.0
  %1344 = vmatprep.subr.mxu0 0.0
  %1345 = vmatpush1.msra.mxu0 0.0
  %1346 = vmatprep.subr.mxu0 0.0
  %1347 = vmatpush1.msra.mxu0 0.0
  %1348 = vmatprep.subr.mxu0 0.0
  %1349 = vmatpush1.msra.mxu0 0.0
  %1350 = vmatprep.mubr.f32.mxu0 0.0
  %1351 = vmatmul.mubr.f32.gmra.mrb[0].mxu0 %v1284
  %v1352 = vpop.f32.mrb[0].mxu0
  %v1353 = vadd.f32 0.0, %v1352
  %v1354 = vpop.f32.mrb[0].mxu0
  %1355 = vdwg.mxu0
  %v1356 = vadd.f32 %v1279, %v1353
  %v1357 = vxor.u32 %v1356, 2147483648
  %v1358 = vmul.f32 %v1357, 1.442695
  %v1359 = vpow.pop %v1358
  %v1360 = vadd.f32 %v1359, 1.0
  %v1361 = vrcp.pop %v1360
  %v1362 = vmul.f32 1.0, %v1361
  %v1363 = vtanh.pop %v1356
  %v1364 = vmul.f32 %v1362, %v1156
  %1366 = vrot.lane.b32.xlu0 %v1363, 64
  %v1367 = vpop.permute.xlu0 %1366
  %v1369 = vmul.f32 %v1362, %v1367
  %1371 = vrot.lane.b32.xlu0 %v1369, 32
  %v1372 = vpop.permute.xlu0 %1371
  %v1374 = vadd.f32 %v1364, %v1372
  %v1375 = vtanh.pop %v1374
  %1377 = vrot.lane.b32.xlu0 %v1375, 64
  %v1378 = vpop.permute.xlu0 %1377
  %v1380 = vmul.f32 %v1362, %v1378
  %1382 = vrot.lane.b32.xlu0 %v1380, 32
  %v1383 = vpop.permute.xlu0 %1382
  %s1385 = scalar_lea.vmem %s54, 16
  %1386 = vst.msk [vmem:[%s1385] sm:$0xff] %vm75, %v1383
  %s1387 = scalar_lea.vmem %s0, 48
  %v1388 = vld [vmem:[%s1387] sm:$0xff]
  %v1389 = vld [vmem:[%s2] sm:$0xff]
  %v1390 = vld [vmem:[%s2 + $0x8] sm:$0xff]
  %v1391 = vld [vmem:[%s2 + $0x10] sm:$0xff]
  %v1392 = vld [vmem:[%s2 + $0x18] sm:$0xff]
  %v1393 = vsel %vm75, %v1274, 0
  %1395 = vmatprep.subr.mxu0 0.0
  %1396 = vmatpush1.msra.mxu0 %v1389
  %1397 = vmatprep.subr.mxu0 0.0
  %1398 = vmatpush1.msra.mxu0 %v1390
  %1399 = vmatprep.subr.mxu0 0.0
  %1400 = vmatpush1.msra.mxu0 %v1391
  %1401 = vmatprep.subr.mxu0 0.0
  %1402 = vmatpush1.msra.mxu0 %v1392
  %1403 = vmatprep.subr.mxu0 0.0
  %1404 = vmatpush1.msra.mxu0 0.0
  %1405 = vmatprep.subr.mxu0 0.0
  %1406 = vmatpush1.msra.mxu0 0.0
  %1407 = vmatprep.subr.mxu0 0.0
  %1408 = vmatpush1.msra.mxu0 0.0
  %1409 = vmatprep.subr.mxu0 0.0
  %1410 = vmatpush1.msra.mxu0 0.0
  %1411 = vmatprep.subr.mxu0 0.0
  %1412 = vmatpush1.msra.mxu0 0.0
  %1413 = vmatprep.subr.mxu0 0.0
  %1414 = vmatpush1.msra.mxu0 0.0
  %1415 = vmatprep.subr.mxu0 0.0
  %1416 = vmatpush1.msra.mxu0 0.0
  %1417 = vmatprep.subr.mxu0 0.0
  %1418 = vmatpush1.msra.mxu0 0.0
  %1419 = vmatprep.subr.mxu0 0.0
  %1420 = vmatpush1.msra.mxu0 0.0
  %1421 = vmatprep.subr.mxu0 0.0
  %1422 = vmatpush1.msra.mxu0 0.0
  %1423 = vmatprep.subr.mxu0 0.0
  %1424 = vmatpush1.msra.mxu0 0.0
  %1425 = vmatprep.subr.mxu0 0.0
  %1426 = vmatpush1.msra.mxu0 0.0
  %1427 = vmatprep.subr.mxu0 0.0
  %1428 = vmatpush1.msra.mxu0 0.0
  %1429 = vmatprep.subr.mxu0 0.0
  %1430 = vmatpush1.msra.mxu0 0.0
  %1431 = vmatprep.subr.mxu0 0.0
  %1432 = vmatpush1.msra.mxu0 0.0
  %1433 = vmatprep.subr.mxu0 0.0
  %1434 = vmatpush1.msra.mxu0 0.0
  %1435 = vmatprep.subr.mxu0 0.0
  %1436 = vmatpush1.msra.mxu0 0.0
  %1437 = vmatprep.subr.mxu0 0.0
  %1438 = vmatpush1.msra.mxu0 0.0
  %1439 = vmatprep.subr.mxu0 0.0
  %1440 = vmatpush1.msra.mxu0 0.0
  %1441 = vmatprep.subr.mxu0 0.0
  %1442 = vmatpush1.msra.mxu0 0.0
  %1443 = vmatprep.subr.mxu0 0.0
  %1444 = vmatpush1.msra.mxu0 0.0
  %1445 = vmatprep.subr.mxu0 0.0
  %1446 = vmatpush1.msra.mxu0 0.0
  %1447 = vmatprep.subr.mxu0 0.0
  %1448 = vmatpush1.msra.mxu0 0.0
  %1449 = vmatprep.subr.mxu0 0.0
  %1450 = vmatpush1.msra.mxu0 0.0
  %1451 = vmatprep.subr.mxu0 0.0
  %1452 = vmatpush1.msra.mxu0 0.0
  %1453 = vmatprep.subr.mxu0 0.0
  %1454 = vmatpush1.msra.mxu0 0.0
  %1455 = vmatprep.subr.mxu0 0.0
  %1456 = vmatpush1.msra.mxu0 0.0
  %1457 = vmatprep.subr.mxu0 0.0
  %1458 = vmatpush1.msra.mxu0 0.0
  %1459 = vmatprep.mubr.f32.mxu0 0.0
  %1460 = vmatmul.mubr.f32.gmra.mrb[0].mxu0 %v1393
  %v1461 = vpop.f32.mrb[0].mxu0
  %v1462 = vadd.f32 0.0, %v1461
  %v1463 = vpop.f32.mrb[0].mxu0
  %1464 = vdwg.mxu0
  %v1465 = vadd.f32 %v1388, %v1462
  %v1466 = vxor.u32 %v1465, 2147483648
  %v1467 = vmul.f32 %v1466, 1.442695
  %v1468 = vpow.pop %v1467
  %v1469 = vadd.f32 %v1468, 1.0
  %v1470 = vrcp.pop %v1469
  %v1471 = vmul.f32 1.0, %v1470
  %v1472 = vtanh.pop %v1465
  %v1473 = vmul.f32 %v1471, %v1265
  %1475 = vrot.lane.b32.xlu0 %v1472, 64
  %v1476 = vpop.permute.xlu0 %1475
  %v1478 = vmul.f32 %v1471, %v1476
  %1480 = vrot.lane.b32.xlu0 %v1478, 32
  %v1481 = vpop.permute.xlu0 %1480
  %v1483 = vadd.f32 %v1473, %v1481
  %v1484 = vtanh.pop %v1483
  %1486 = vrot.lane.b32.xlu0 %v1484, 64
  %v1487 = vpop.permute.xlu0 %1486
  %v1489 = vmul.f32 %v1471, %v1487
  %1491 = vrot.lane.b32.xlu0 %v1489, 32
  %v1492 = vpop.permute.xlu0 %1491
  %s1494 = scalar_lea.vmem %s4, 48
  %1495 = vst.msk [vmem:[%s1494] sm:$0xff] %vm75, %v1492
  %s1496 = scalar_lea.vmem %s46, 8
  %v1497 = vld [vmem:[%s1496] sm:$0xff]
  %v1498 = vld [vmem:[%s3] sm:$0xff]
  %v1499 = vld [vmem:[%s3 + $0x8] sm:$0xff]
  %v1500 = vld [vmem:[%s3 + $0x10] sm:$0xff]
  %v1501 = vld [vmem:[%s3 + $0x18] sm:$0xff]
  %v1502 = vsel %vm75, %v1383, 0
  %1504 = vmatprep.subr.mxu0 0.0
  %1505 = vmatpush1.msra.mxu0 %v1498
  %1506 = vmatprep.subr.mxu0 0.0
  %1507 = vmatpush1.msra.mxu0 %v1499
  %1508 = vmatprep.subr.mxu0 0.0
  %1509 = vmatpush1.msra.mxu0 %v1500
  %1510 = vmatprep.subr.mxu0 0.0
  %1511 = vmatpush1.msra.mxu0 %v1501
  %1512 = vmatprep.subr.mxu0 0.0
  %1513 = vmatpush1.msra.mxu0 0.0
  %1514 = vmatprep.subr.mxu0 0.0
  %1515 = vmatpush1.msra.mxu0 0.0
  %1516 = vmatprep.subr.mxu0 0.0
  %1517 = vmatpush1.msra.mxu0 0.0
  %1518 = vmatprep.subr.mxu0 0.0
  %1519 = vmatpush1.msra.mxu0 0.0
  %1520 = vmatprep.subr.mxu0 0.0
  %1521 = vmatpush1.msra.mxu0 0.0
  %1522 = vmatprep.subr.mxu0 0.0
  %1523 = vmatpush1.msra.mxu0 0.0
  %1524 = vmatprep.subr.mxu0 0.0
  %1525 = vmatpush1.msra.mxu0 0.0
  %1526 = vmatprep.subr.mxu0 0.0
  %1527 = vmatpush1.msra.mxu0 0.0
  %1528 = vmatprep.subr.mxu0 0.0
  %1529 = vmatpush1.msra.mxu0 0.0
  %1530 = vmatprep.subr.mxu0 0.0
  %1531 = vmatpush1.msra.mxu0 0.0
  %1532 = vmatprep.subr.mxu0 0.0
  %1533 = vmatpush1.msra.mxu0 0.0
  %1534 = vmatprep.subr.mxu0 0.0
  %1535 = vmatpush1.msra.mxu0 0.0
  %1536 = vmatprep.subr.mxu0 0.0
  %1537 = vmatpush1.msra.mxu0 0.0
  %1538 = vmatprep.subr.mxu0 0.0
  %1539 = vmatpush1.msra.mxu0 0.0
  %1540 = vmatprep.subr.mxu0 0.0
  %1541 = vmatpush1.msra.mxu0 0.0
  %1542 = vmatprep.subr.mxu0 0.0
  %1543 = vmatpush1.msra.mxu0 0.0
  %1544 = vmatprep.subr.mxu0 0.0
  %1545 = vmatpush1.msra.mxu0 0.0
  %1546 = vmatprep.subr.mxu0 0.0
  %1547 = vmatpush1.msra.mxu0 0.0
  %1548 = vmatprep.subr.mxu0 0.0
  %1549 = vmatpush1.msra.mxu0 0.0
  %1550 = vmatprep.subr.mxu0 0.0
  %1551 = vmatpush1.msra.mxu0 0.0
  %1552 = vmatprep.subr.mxu0 0.0
  %1553 = vmatpush1.msra.mxu0 0.0
  %1554 = vmatprep.subr.mxu0 0.0
  %1555 = vmatpush1.msra.mxu0 0.0
  %1556 = vmatprep.subr.mxu0 0.0
  %1557 = vmatpush1.msra.mxu0 0.0
  %1558 = vmatprep.subr.mxu0 0.0
  %1559 = vmatpush1.msra.mxu0 0.0
  %1560 = vmatprep.subr.mxu0 0.0
  %1561 = vmatpush1.msra.mxu0 0.0
  %1562 = vmatprep.subr.mxu0 0.0
  %1563 = vmatpush1.msra.mxu0 0.0
  %1564 = vmatprep.subr.mxu0 0.0
  %1565 = vmatpush1.msra.mxu0 0.0
  %1566 = vmatprep.subr.mxu0 0.0
  %1567 = vmatpush1.msra.mxu0 0.0
  %1568 = vmatprep.mubr.f32.mxu0 0.0
  %1569 = vmatmul.mubr.f32.gmra.mrb[0].mxu0 %v1502
  %v1570 = vpop.f32.mrb[0].mxu0
  %v1571 = vadd.f32 0.0, %v1570
  %v1572 = vpop.f32.mrb[0].mxu0
  %1573 = vdwg.mxu0
  %v1574 = vadd.f32 %v1497, %v1571
  %v1575 = vxor.u32 %v1574, 2147483648
  %v1576 = vmul.f32 %v1575, 1.442695
  %v1577 = vpow.pop %v1576
  %v1578 = vadd.f32 %v1577, 1.0
  %v1579 = vrcp.pop %v1578
  %v1580 = vmul.f32 1.0, %v1579
  %v1581 = vtanh.pop %v1574
  %v1582 = vmul.f32 %v1580, %v1374
  %1584 = vrot.lane.b32.xlu0 %v1581, 64
  %v1585 = vpop.permute.xlu0 %1584
  %v1587 = vmul.f32 %v1580, %v1585
  %1589 = vrot.lane.b32.xlu0 %v1587, 32
  %v1590 = vpop.permute.xlu0 %1589
  %v1592 = vadd.f32 %v1582, %v1590
  %v1593 = vtanh.pop %v1592
  %1595 = vrot.lane.b32.xlu0 %v1593, 64
  %v1596 = vpop.permute.xlu0 %1595
  %v1598 = vmul.f32 %v1580, %v1596
  %1600 = vrot.lane.b32.xlu0 %v1598, 32
  %v1601 = vpop.permute.xlu0 %1600
  %s1603 = scalar_lea.vmem %s54, 8
  %1604 = vst.msk [vmem:[%s1603] sm:$0xff] %vm75, %v1601
  %s1605 = scalar_lea.vmem %s0, 56
  %v1606 = vld [vmem:[%s1605] sm:$0xff]
  %v1607 = vld [vmem:[%s2] sm:$0xff]
  %v1608 = vld [vmem:[%s2 + $0x8] sm:$0xff]
  %v1609 = vld [vmem:[%s2 + $0x10] sm:$0xff]
  %v1610 = vld [vmem:[%s2 + $0x18] sm:$0xff]
  %v1611 = vsel %vm75, %v1492, 0
  %1613 = vmatprep.subr.mxu0 0.0
  %1614 = vmatpush1.msra.mxu0 %v1607
  %1615 = vmatprep.subr.mxu0 0.0
  %1616 = vmatpush1.msra.mxu0 %v1608
  %1617 = vmatprep.subr.mxu0 0.0
  %1618 = vmatpush1.msra.mxu0 %v1609
  %1619 = vmatprep.subr.mxu0 0.0
  %1620 = vmatpush1.msra.mxu0 %v1610
  %1621 = vmatprep.subr.mxu0 0.0
  %1622 = vmatpush1.msra.mxu0 0.0
  %1623 = vmatprep.subr.mxu0 0.0
  %1624 = vmatpush1.msra.mxu0 0.0
  %1625 = vmatprep.subr.mxu0 0.0
  %1626 = vmatpush1.msra.mxu0 0.0
  %1627 = vmatprep.subr.mxu0 0.0
  %1628 = vmatpush1.msra.mxu0 0.0
  %1629 = vmatprep.subr.mxu0 0.0
  %1630 = vmatpush1.msra.mxu0 0.0
  %1631 = vmatprep.subr.mxu0 0.0
  %1632 = vmatpush1.msra.mxu0 0.0
  %1633 = vmatprep.subr.mxu0 0.0
  %1634 = vmatpush1.msra.mxu0 0.0
  %1635 = vmatprep.subr.mxu0 0.0
  %1636 = vmatpush1.msra.mxu0 0.0
  %1637 = vmatprep.subr.mxu0 0.0
  %1638 = vmatpush1.msra.mxu0 0.0
  %1639 = vmatprep.subr.mxu0 0.0
  %1640 = vmatpush1.msra.mxu0 0.0
  %1641 = vmatprep.subr.mxu0 0.0
  %1642 = vmatpush1.msra.mxu0 0.0
  %1643 = vmatprep.subr.mxu0 0.0
  %1644 = vmatpush1.msra.mxu0 0.0
  %1645 = vmatprep.subr.mxu0 0.0
  %1646 = vmatpush1.msra.mxu0 0.0
  %1647 = vmatprep.subr.mxu0 0.0
  %1648 = vmatpush1.msra.mxu0 0.0
  %1649 = vmatprep.subr.mxu0 0.0
  %1650 = vmatpush1.msra.mxu0 0.0
  %1651 = vmatprep.subr.mxu0 0.0
  %1652 = vmatpush1.msra.mxu0 0.0
  %1653 = vmatprep.subr.mxu0 0.0
  %1654 = vmatpush1.msra.mxu0 0.0
  %1655 = vmatprep.subr.mxu0 0.0
  %1656 = vmatpush1.msra.mxu0 0.0
  %1657 = vmatprep.subr.mxu0 0.0
  %1658 = vmatpush1.msra.mxu0 0.0
  %1659 = vmatprep.subr.mxu0 0.0
  %1660 = vmatpush1.msra.mxu0 0.0
  %1661 = vmatprep.subr.mxu0 0.0
  %1662 = vmatpush1.msra.mxu0 0.0
  %1663 = vmatprep.subr.mxu0 0.0
  %1664 = vmatpush1.msra.mxu0 0.0
  %1665 = vmatprep.subr.mxu0 0.0
  %1666 = vmatpush1.msra.mxu0 0.0
  %1667 = vmatprep.subr.mxu0 0.0
  %1668 = vmatpush1.msra.mxu0 0.0
  %1669 = vmatprep.subr.mxu0 0.0
  %1670 = vmatpush1.msra.mxu0 0.0
  %1671 = vmatprep.subr.mxu0 0.0
  %1672 = vmatpush1.msra.mxu0 0.0
  %1673 = vmatprep.subr.mxu0 0.0
  %1674 = vmatpush1.msra.mxu0 0.0
  %1675 = vmatprep.subr.mxu0 0.0
  %1676 = vmatpush1.msra.mxu0 0.0
  %1677 = vmatprep.mubr.f32.mxu0 0.0
  %1678 = vmatmul.mubr.f32.gmra.mrb[0].mxu0 %v1611
  %v1679 = vpop.f32.mrb[0].mxu0
  %v1680 = vadd.f32 0.0, %v1679
  %v1681 = vpop.f32.mrb[0].mxu0
  %1682 = vdwg.mxu0
  %v1683 = vadd.f32 %v1606, %v1680
  %v1684 = vxor.u32 %v1683, 2147483648
  %v1685 = vmul.f32 %v1684, 1.442695
  %v1686 = vpow.pop %v1685
  %v1687 = vadd.f32 %v1686, 1.0
  %v1688 = vrcp.pop %v1687
  %v1689 = vmul.f32 1.0, %v1688
  %v1690 = vtanh.pop %v1683
  %v1691 = vmul.f32 %v1689, %v1483
  %1693 = vrot.lane.b32.xlu0 %v1690, 64
  %v1694 = vpop.permute.xlu0 %1693
  %v1696 = vmul.f32 %v1689, %v1694
  %1698 = vrot.lane.b32.xlu0 %v1696, 32
  %v1699 = vpop.permute.xlu0 %1698
  %v1701 = vadd.f32 %v1691, %v1699
  %v1702 = vtanh.pop %v1701
  %1704 = vrot.lane.b32.xlu0 %v1702, 64
  %v1705 = vpop.permute.xlu0 %1704
  %v1707 = vmul.f32 %v1689, %v1705
  %1709 = vrot.lane.b32.xlu0 %v1707, 32
  %v1710 = vpop.permute.xlu0 %1709
  %s1712 = scalar_lea.vmem %s4, 56
  %1713 = vst.msk [vmem:[%s1712] sm:$0xff] %vm75, %v1710
  %v1714 = vld [vmem:[%s46] sm:$0xff]
  %v1715 = vld [vmem:[%s3] sm:$0xff]
  %v1716 = vld [vmem:[%s3 + $0x8] sm:$0xff]
  %v1717 = vld [vmem:[%s3 + $0x10] sm:$0xff]
  %v1718 = vld [vmem:[%s3 + $0x18] sm:$0xff]
  %v1719 = vsel %vm75, %v1601, 0
  %1721 = vmatprep.subr.mxu0 0.0
  %1722 = vmatpush1.msra.mxu0 %v1715
  %1723 = vmatprep.subr.mxu0 0.0
  %1724 = vmatpush1.msra.mxu0 %v1716
  %1725 = vmatprep.subr.mxu0 0.0
  %1726 = vmatpush1.msra.mxu0 %v1717
  %1727 = vmatprep.subr.mxu0 0.0
  %1728 = vmatpush1.msra.mxu0 %v1718
  %1729 = vmatprep.subr.mxu0 0.0
  %1730 = vmatpush1.msra.mxu0 0.0
  %1731 = vmatprep.subr.mxu0 0.0
  %1732 = vmatpush1.msra.mxu0 0.0
  %1733 = vmatprep.subr.mxu0 0.0
  %1734 = vmatpush1.msra.mxu0 0.0
  %1735 = vmatprep.subr.mxu0 0.0
  %1736 = vmatpush1.msra.mxu0 0.0
  %1737 = vmatprep.subr.mxu0 0.0
  %1738 = vmatpush1.msra.mxu0 0.0
  %1739 = vmatprep.subr.mxu0 0.0
  %1740 = vmatpush1.msra.mxu0 0.0
  %1741 = vmatprep.subr.mxu0 0.0
  %1742 = vmatpush1.msra.mxu0 0.0
  %1743 = vmatprep.subr.mxu0 0.0
  %1744 = vmatpush1.msra.mxu0 0.0
  %1745 = vmatprep.subr.mxu0 0.0
  %1746 = vmatpush1.msra.mxu0 0.0
  %1747 = vmatprep.subr.mxu0 0.0
  %1748 = vmatpush1.msra.mxu0 0.0
  %1749 = vmatprep.subr.mxu0 0.0
  %1750 = vmatpush1.msra.mxu0 0.0
  %1751 = vmatprep.subr.mxu0 0.0
  %1752 = vmatpush1.msra.mxu0 0.0
  %1753 = vmatprep.subr.mxu0 0.0
  %1754 = vmatpush1.msra.mxu0 0.0
  %1755 = vmatprep.subr.mxu0 0.0
  %1756 = vmatpush1.msra.mxu0 0.0
  %1757 = vmatprep.subr.mxu0 0.0
  %1758 = vmatpush1.msra.mxu0 0.0
  %1759 = vmatprep.subr.mxu0 0.0
  %1760 = vmatpush1.msra.mxu0 0.0
  %1761 = vmatprep.subr.mxu0 0.0
  %1762 = vmatpush1.msra.mxu0 0.0
  %1763 = vmatprep.subr.mxu0 0.0
  %1764 = vmatpush1.msra.mxu0 0.0
  %1765 = vmatprep.subr.mxu0 0.0
  %1766 = vmatpush1.msra.mxu0 0.0
  %1767 = vmatprep.subr.mxu0 0.0
  %1768 = vmatpush1.msra.mxu0 0.0
  %1769 = vmatprep.subr.mxu0 0.0
  %1770 = vmatpush1.msra.mxu0 0.0
  %1771 = vmatprep.subr.mxu0 0.0
  %1772 = vmatpush1.msra.mxu0 0.0
  %1773 = vmatprep.subr.mxu0 0.0
  %1774 = vmatpush1.msra.mxu0 0.0
  %1775 = vmatprep.subr.mxu0 0.0
  %1776 = vmatpush1.msra.mxu0 0.0
  %1777 = vmatprep.subr.mxu0 0.0
  %1778 = vmatpush1.msra.mxu0 0.0
  %1779 = vmatprep.subr.mxu0 0.0
  %1780 = vmatpush1.msra.mxu0 0.0
  %1781 = vmatprep.subr.mxu0 0.0
  %1782 = vmatpush1.msra.mxu0 0.0
  %1783 = vmatprep.subr.mxu0 0.0
  %1784 = vmatpush1.msra.mxu0 0.0
  %1785 = vmatprep.mubr.f32.mxu0 0.0
  %1786 = vmatmul.mubr.f32.gmra.mrb[0].mxu0 %v1719
  %v1787 = vpop.f32.mrb[0].mxu0
  %v1788 = vadd.f32 0.0, %v1787
  %v1789 = vpop.f32.mrb[0].mxu0
  %1790 = vdwg.mxu0
  %v1791 = vadd.f32 %v1714, %v1788
  %v1792 = vxor.u32 %v1791, 2147483648
  %v1793 = vmul.f32 %v1792, 1.442695
  %v1794 = vpow.pop %v1793
  %v1795 = vadd.f32 %v1794, 1.0
  %v1796 = vrcp.pop %v1795
  %v1797 = vmul.f32 1.0, %v1796
  %v1798 = vtanh.pop %v1791
  %v1799 = vmul.f32 %v1797, %v1592
  %1801 = vrot.lane.b32.xlu0 %v1798, 64
  %v1802 = vpop.permute.xlu0 %1801
  %v1804 = vmul.f32 %v1797, %v1802
  %1806 = vrot.lane.b32.xlu0 %v1804, 32
  %v1807 = vpop.permute.xlu0 %1806
  %v1809 = vadd.f32 %v1799, %v1807
  %v1810 = vtanh.pop %v1809
  %1812 = vrot.lane.b32.xlu0 %v1810, 64
  %v1813 = vpop.permute.xlu0 %1812
  %v1815 = vmul.f32 %v1797, %v1813
  %1817 = vrot.lane.b32.xlu0 %v1815, 32
  %v1818 = vpop.permute.xlu0 %1817
  %1820 = vst.msk [vmem:[%s54] sm:$0xff] %vm75, %v1818
  %1821 = vst.msk [vmem:[#allocation2] sm:$0xff] %vm75, %v1710
  %1823 = vrot.lane.b32.xlu0 %v1701, 96
  %v1824 = vpop.permute.xlu0 %1823
  %1826 = vst.msk [vmem:[#allocation3] sm:$0xff] %vm75, %v1824
  %1827 = vst.msk [vmem:[#allocation4] sm:$0xff] %vm75, %v1818
  %1829 = vrot.lane.b32.xlu0 %v1809, 96
  %v1830 = vpop.permute.xlu0 %1829
  %1832 = vst.msk [vmem:[#allocation5] sm:$0xff] %vm75, %v1830
  // Predicated region
  $region22: #{encoder_rnn_forward.3} parent=0 // pred_check
    %p1833 = pneg %p57
  $region23: #{encoder_rnn_forward.3} parent=0 // pred_check_branch
    %1835 = sbr.rel (%p1833) target = $region25
  $region24: #{encoder_rnn_forward.3} parent=0 // pred_region
    %1836 = vst.msk [vmem:[%s6] sm:$0xff] %vm75, %v1710
    %s1837 = scalar_lea.vmem %s6, 8
    %1838 = vst.msk [vmem:[%s1837] sm:$0xff] %vm75, %v1818
    %1839 = vst.msk [vmem:[%s7] sm:$0xff] %vm75, %v1824
    %s1840 = scalar_lea.vmem %s7, 8
    %1841 = vst.msk [vmem:[%s1840] sm:$0xff] %vm75, %v1830
  $region25: #{encoder_rnn_forward.3} parent=0 // pred_fallthru
    _
  %s1842 = ssub.s32 0, 0
  %s1843 = smul.u32 8, %s1842
  %p1844 = scmp.lt.s32.totalorder %s1843, 7
  %s1845 = scalar_select %p1844, %s1843, 7
  %s1846 = smul.addr %s1845, 8
  %s1847 = scalar_lea.vmem %s5, %s1846
  // Predicated region
  $region26: #{encoder_rnn_forward.3} parent=0 // pred_check
    _
  $region27: #{encoder_rnn_forward.3} parent=0 // pred_check_branch
    %1849 = sbr.rel (0) target = $region29
  $region28: #{encoder_rnn_forward.3} parent=0 // pred_region
    _
  $region29: #{encoder_rnn_forward.3} parent=0 // pred_fallthru
    _
  // Predicated region
  $region30: #{encoder_rnn_forward.3} parent=0 // pred_check
    _
  $region31: #{encoder_rnn_forward.3} parent=0 // pred_check_branch
    %1851 = sbr.rel (0) target = $region33
  $region32: #{encoder_rnn_forward.3} parent=0 // pred_region
    %s1852 = ssub.s32 0, 0
    %s1853 = smul.u32 8, %s1852
  $region33: #{encoder_rnn_forward.3} parent=0 // pred_fallthru
    _
  // Predicated region
  $region34: #{encoder_rnn_forward.3} parent=0 // pred_check
    _
  $region35: #{encoder_rnn_forward.3} parent=0 // pred_check_branch
    %1855 = sbr.rel (0) target = $region37
  $region36: #{encoder_rnn_forward.3} parent=0 // pred_region
    _
  $region37: #{encoder_rnn_forward.3} parent=0 // pred_fallthru
    _
  // Predicated region
  $region38: #{encoder_rnn_forward.3} parent=0 // pred_check
    _
  $region39: #{encoder_rnn_forward.3} parent=0 // pred_check_branch
    %1857 = sbr.rel (0) target = $region41
  $region40: #{encoder_rnn_forward.3} parent=0 // pred_region
    _
  $region41: #{encoder_rnn_forward.3} parent=0 // pred_fallthru
    _
  // Predicated region
  $region42: #{encoder_rnn_forward.3} parent=0 // pred_check
    _
  $region43: #{encoder_rnn_forward.3} parent=0 // pred_check_branch
    %1859 = sbr.rel (0) target = $region45
  $region44: #{encoder_rnn_forward.3} parent=0 // pred_region
    _
  $region45: #{encoder_rnn_forward.3} parent=0 // pred_fallthru
    _
  // Predicated region
  $region46: #{encoder_rnn_forward.3} parent=0 // pred_check
    _
  $region47: #{encoder_rnn_forward.3} parent=0 // pred_check_branch
    %1861 = sbr.rel (0) target = $region49
  $region48: #{encoder_rnn_forward.3} parent=0 // pred_region
    %s1862 = ssub.s32 0, 0
    %s1863 = smul.u32 8, %s1862
    %p1864 = scmp.lt.s32.totalorder %s1863, 7
    %s1865 = scalar_select %p1864, %s1863, 7
    %s1866 = smul.addr %s1865, 8
    %s1867 = scalar_lea.vmem %s5, %s1866
  $region49: #{encoder_rnn_forward.3} parent=0 // pred_fallthru
    _
  // Predicated region
  $region50: #{encoder_rnn_forward.3} parent=0 // pred_check
    _
  $region51: #{encoder_rnn_forward.3} parent=0 // pred_check_branch
    %1869 = sbr.rel (0) target = $region53
  $region52: #{encoder_rnn_forward.3} parent=0 // pred_region
    _
  $region53: #{encoder_rnn_forward.3} parent=0 // pred_fallthru
    _
  // Predicated region
  $region54: #{encoder_rnn_forward.3} parent=0 // pred_check
    _
  $region55: #{encoder_rnn_forward.3} parent=0 // pred_check_branch
    %1871 = sbr.rel (0) target = $region57
  $region56: #{encoder_rnn_forward.3} parent=0 // pred_region
    _
  $region57: #{encoder_rnn_forward.3} parent=0 // pred_fallthru
    _

</llo_original>
